<compile_context>
chip_gen: v6e
topology: v6e:2x2x1
jax: 0.10.0
libtpu: 0.0.40
codegen_flags: <defaults>
</compile_context>

<pallas_src>
import functools
import math

import numpy as np
import jax
import jax.numpy as jnp
from jax.experimental import pallas as pl
from jax.experimental.pallas import tpu as pltpu

DIM_MODEL = 128          # default dim_model of PeptideEncoder
N_HEAD = 8
DIM_FF = 1024
N_RESIDUES = 27          # synthetic residue alphabet
VOCAB = N_RESIDUES + 2   # padding(0) + residues + '$'
MAX_CHARGE = 5
NEG_BIAS = -1e9          # finite "-inf" -> exp() underflows to 0, never NaN


# ----------------------------------------------------------------------------
# Pallas kernel: one post-norm TransformerEncoderLayer (batch_first, relu,
# dropout=0, eps=1e-5) over a tile of Bt batch elements.
# ----------------------------------------------------------------------------
def _encoder_layer_kernel(
    x_ref, kp_ref,
    w_qkv, b_qkv, wo, bo,
    ln1_w, ln1_b, ln2_w, ln2_b,
    ff_w1, ff_b1, ff_w2, ff_b2,
    out_ref, *, n_head):
  Bt, L, D = x_ref.shape
  hd = D // n_head

  def layer_norm(y, w, b):
    mu = jnp.mean(y, axis=-1, keepdims=True)
    var = jnp.mean(jnp.square(y - mu), axis=-1, keepdims=True)
    return (y - mu) * jax.lax.rsqrt(var + 1e-5) * w[...] + b[...]

  x = x_ref[...]                              # (Bt, L, D) fp32
  xf = x.reshape(Bt * L, D)                   # fuse batch rows -> fills MXU rows
  xb = xf.astype(jnp.bfloat16)

  # Fused QKV projection: one (Bt*L, D) @ (D, 3D) matmul.  The 1/sqrt(hd)
  # attention scale is already folded into the Q columns host-side.
  qkv = jnp.dot(xb, w_qkv[...], preferred_element_type=jnp.float32) + b_qkv[...]
  qkv_b = qkv.astype(jnp.bfloat16).reshape(Bt, L, 3 * D)   # bf16 cast hoisted
  kp = kp_ref[...]                            # (Bt, 1, L) additive key-padding bias

  # Attention: batched over the whole batch tile (single leading batch dim per
  # dot_general, known-good Mosaic lowering); static loop over the 8 heads.
  # The per-head output projection is folded in, so no lane-axis concat.
  o = jnp.zeros((Bt * L, D), jnp.float32)
  for h in range(n_head):
    qh = qkv_b[:, :, h * hd:(h + 1) * hd]                     # (Bt, L, hd)
    kh = qkv_b[:, :, D + h * hd:D + (h + 1) * hd]
    vh = qkv_b[:, :, 2 * D + h * hd:2 * D + (h + 1) * hd]
    s = jax.lax.dot_general(qh, kh, (((2,), (2,)), ((0,), (0,))),
                            preferred_element_type=jnp.float32)  # (Bt, L, L)
    s = s + kp
    m = jnp.max(s, axis=-1, keepdims=True)
    e = jnp.exp(s - m)
    p = e * pl.reciprocal(jnp.sum(e, axis=-1, keepdims=True), approx=True)
    ctx = jax.lax.dot_general(p.astype(jnp.bfloat16), vh,
                              (((2,), (1,)), ((0,), (0,))),
                              preferred_element_type=jnp.float32)  # (Bt, L, hd)
    o = o + jnp.dot(ctx.reshape(Bt * L, hd).astype(jnp.bfloat16),
                    wo[h * hd:(h + 1) * hd, :],
                    preferred_element_type=jnp.float32)
  o = o + bo[...]

  h1 = layer_norm(xf + o, ln1_w, ln1_b)       # post-norm, fp32

  f = jnp.maximum(
      jnp.dot(h1.astype(jnp.bfloat16), ff_w1[...],
              preferred_element_type=jnp.float32) + ff_b1[...], 0.0)
  f = jnp.dot(f.astype(jnp.bfloat16), ff_w2[...],
              preferred_element_type=jnp.float32) + ff_b2[...]
  y = layer_norm(h1 + f, ln2_w, ln2_b)
  out_ref[...] = y.reshape(Bt, L, D).astype(out_ref.dtype)


_W_NAMES = ("w_qkv", "b_qkv", "wo", "bo",
            "ln1_w", "ln1_b", "ln2_w", "ln2_b",
            "ff_w1", "ff_b1", "ff_w2", "ff_b2")


def pack_layer_weights(params, *, n_head=N_HEAD):
  """One-time host-side weight prep: fuse Q|K|V, fold the 1/sqrt(hd) attention
  scale into the Q columns, cast MXU weights to bf16."""
  D = params["wq"].shape[0]
  scale = 1.0 / math.sqrt(D // n_head)
  w_qkv = jnp.concatenate(
      [params["wq"] * scale, params["wk"], params["wv"]], axis=1)   # (D, 3D)
  b_qkv = jnp.concatenate(
      [params["bq"] * scale, params["bk"], params["bv"]], axis=1)   # (1, 3D)
  return {
      "w_qkv": w_qkv.astype(jnp.bfloat16),
      "b_qkv": b_qkv.astype(jnp.float32),
      "wo": params["wo"].astype(jnp.bfloat16),
      "bo": params["bo"],
      "ln1_w": params["ln1_w"], "ln1_b": params["ln1_b"],
      "ln2_w": params["ln2_w"], "ln2_b": params["ln2_b"],
      "ff_w1": params["ff_w1"].astype(jnp.bfloat16), "ff_b1": params["ff_b1"],
      "ff_w2": params["ff_w2"].astype(jnp.bfloat16), "ff_b2": params["ff_b2"],
  }


def _pick_block_b(B, L, block_b=None, *, target_rows=512, min_grid=2):
  """Batch tile so each grid step feeds ~target_rows fused rows to the MXU,
  but keep >= min_grid grid steps (v7x has 2 TensorCores; 'parallel' only
  shards if the grid length is >= 2)."""
  if block_b is None:
    block_b = max(1, target_rows // max(L, 1))
  if B > 1:
    block_b = min(block_b, (B + min_grid - 1) // min_grid)
  return max(1, min(block_b, B))


def encoder_layer(x, kp_bias, layer_w, *, n_head=N_HEAD, block_b=None,
                  out_dtype=jnp.float32):
  """One TransformerEncoderLayer; batch-tiled so each grid step feeds Bt*L rows
  to the projection/FFN matmuls."""
  B, L, D = x.shape
  Bt = _pick_block_b(B, L, block_b)
  Bp = ((B + Bt - 1) // Bt) * Bt
  if Bp != B:                                 # pad batch to a multiple of the tile
    x = jnp.pad(x, ((0, Bp - B), (0, 0), (0, 0)))
    kp_bias = jnp.pad(kp_bias, ((0, Bp - B), (0, 0), (0, 0)))

  weights = [layer_w[name] for name in _W_NAMES]

  batched_specs = [
      pl.BlockSpec((Bt, L, D), lambda i: (i, 0, 0)),
      pl.BlockSpec((Bt, 1, L), lambda i: (i, 0, 0)),
  ]
  # Grid-invariant weights (constant index map, ~0.7 MiB total).
  # TODO(synk): pipeline_mode=pl.Buffered(1) would drop the duplicate weight
  # buffer; left at the default since VMEM is nowhere near the limit here.
  weight_specs = [
      pl.BlockSpec(w.shape, lambda i, nd=w.ndim: (0,) * nd) for w in weights
  ]
  out = pl.pallas_call(
      functools.partial(_encoder_layer_kernel, n_head=n_head),
      out_shape=jax.ShapeDtypeStruct((Bp, L, D), out_dtype),
      grid=(Bp // Bt,),
      in_specs=batched_specs + weight_specs,
      out_specs=pl.BlockSpec((Bt, L, D), lambda i: (i, 0, 0)),
      compiler_params=pltpu.CompilerParams(
          dimension_semantics=("parallel",),       # batch tiles are independent
          vmem_limit_bytes=32 * 1024 * 1024),      # fits v7x's 64 MiB VMEM
  )(x, kp_bias, *weights)
  return out[:B]


# ----------------------------------------------------------------------------
# Glue: positional encoding, parameter init, end-to-end forward.
# ----------------------------------------------------------------------------
def pos_encode(x, max_wavelength=10000.0):
  """Sinusoidal positional encoding (matches depthcharge PositionalEncoder)."""
  _, L, d = x.shape
  n_sin = d // 2
  n_cos = d - n_sin
  scale = max_wavelength / (2 * np.pi)
  sin_term = scale ** (np.arange(n_sin) / (n_sin - 1))
  cos_term = scale ** (np.arange(n_cos) / (n_cos - 1))
  pos = np.arange(L)[:, None].astype(np.float64)
  enc = np.concatenate([np.sin(pos / sin_term), np.cos(pos / cos_term)], axis=1)
  return x + jnp.asarray(enc, jnp.float32)[None]


def init_params(key):
  keys = iter(jax.random.split(key, 16))

  def nrm(shape, scale=0.02):
    return (scale * jax.random.normal(next(keys), shape)).astype(jnp.float32)

  p = {}
  # embeddings (aa_encoder has padding_idx=0 -> zero row)
  p["aa_emb"] = nrm((VOCAB, DIM_MODEL)).at[0].set(0.0)
  p["charge_emb"] = nrm((MAX_CHARGE, DIM_MODEL))
  # self-attention weights, pre-transposed to (in, out)
  for w in ("wq", "wk", "wv", "wo"):
    p[w] = nrm((DIM_MODEL, DIM_MODEL))
  for b in ("bq", "bk", "bv", "bo"):
    p[b] = jnp.zeros((1, DIM_MODEL), jnp.float32)
  for i in (1, 2):
    p[f"ln{i}_w"] = jnp.ones((1, DIM_MODEL), jnp.float32)
    p[f"ln{i}_b"] = jnp.zeros((1, DIM_MODEL), jnp.float32)
  p["ff_w1"] = nrm((DIM_MODEL, DIM_FF))
  p["ff_b1"] = jnp.zeros((1, DIM_FF), jnp.float32)
  p["ff_w2"] = nrm((DIM_FF, DIM_MODEL))
  p["ff_b2"] = jnp.zeros((1, DIM_MODEL), jnp.float32)
  return p


def peptide_encoder_forward(tokens, charges, params, layer_w=None, *,
                            block_b=None, out_dtype=jnp.float32):
  """tokens: (B, S) int32 in [0, VOCAB-1] (0 = padding, already right-padded);
  charges: (B,) int32 in [1, MAX_CHARGE].  Returns (latent, mask)."""
  if layer_w is None:
    layer_w = pack_layer_weights(params)
  aa = params["aa_emb"][tokens]                                      # (B, S, D)
  ch = params["charge_emb"][charges.astype(jnp.int32) - 1][:, None]  # (B, 1, D)
  encoded = jnp.concatenate([ch, aa], axis=1)                        # (B, L, D)
  mask = (encoded.sum(axis=2) == 0)                                  # (B, L) True = pad
  encoded = pos_encode(encoded)
  kp_bias = jnp.where(mask, NEG_BIAS, 0.0).astype(jnp.float32)[:, None, :]  # (B,1,L)
  latent = encoder_layer(encoded, kp_bias, layer_w,
                         block_b=block_b, out_dtype=out_dtype)       # (B, L, D)
  return latent, mask


# ----------------------------------------------------------------------------
# Pure-JAX fp32 reference of the same layer (for numerical validation).
# ----------------------------------------------------------------------------
def _encoder_layer_ref(x, mask, params, n_head=N_HEAD):
  B, L, D = x.shape
  hd = D // n_head

  def ln(y, w, b):
    mu = y.mean(-1, keepdims=True)
    var = ((y - mu) ** 2).mean(-1, keepdims=True)
    return (y - mu) / jnp.sqrt(var + 1e-5) * w + b

  def split(t):
    return t.reshape(B, L, n_head, hd).transpose(0, 2, 1, 3)

  q = x @ params["wq"] + params["bq"]
  k = x @ params["wk"] + params["bk"]
  v = x @ params["wv"] + params["bv"]
  s = jnp.einsum("bhqd,bhkd->bhqk", split(q), split(k)) / math.sqrt(hd)
  s = jnp.where(mask[:, None, None, :], NEG_BIAS, s)
  p = jax.nn.softmax(s, axis=-1)
  ctx = jnp.einsum("bhqk,bhkd->bhqd", p, split(v))
  ctx = ctx.transpose(0, 2, 1, 3).reshape(B, L, D)
  o = ctx @ params["wo"] + params["bo"]
  h1 = ln(x + o, params["ln1_w"], params["ln1_b"])
  f = jax.nn.relu(h1 @ params["ff_w1"] + params["ff_b1"])
  f = f @ params["ff_w2"] + params["ff_b2"]
  return ln(h1 + f, params["ln2_w"], params["ln2_b"])


if __name__ == "__main__":
  key = jax.random.PRNGKey(0)
  kparam, ktok, klen = jax.random.split(key, 3)
  params = init_params(kparam)
  layer_w = pack_layer_weights(params)

  # ---- Small deterministic example: batch=2, 7 residues -> L = 8 ----------
  B, S = 2, 7
  tokens = jnp.array([[3, 7, 12, 1, 20, 28, 0],
                      [5, 9, 28, 0, 0, 0, 0]], dtype=jnp.int32)
  charges = jnp.array([2, 3], dtype=jnp.int32)

  latent, mask = peptide_encoder_forward(tokens, charges, params, layer_w)
  latent = jax.block_until_ready(latent)
  assert latent.shape == (B, S + 1, DIM_MODEL)
  assert mask.shape == (B, S + 1)
  arr = np.asarray(latent)
  assert np.isfinite(arr).all()

  # Validate against a pure-JAX fp32 reference (bf16 MXU + approx-reciprocal
  # softmax in the kernel -> small tolerance).
  aa = params["aa_emb"][tokens]
  ch = params["charge_emb"][charges - 1][:, None]
  enc = pos_encode(jnp.concatenate([ch, aa], axis=1))
  ref = _encoder_layer_ref(enc, mask, params)
  np.testing.assert_allclose(arr, np.asarray(ref), atol=5e-2, rtol=5e-2)

  # ---- Larger batch exercises batch tiling (Bt*L rows/step, >=2 steps) ----
  B2, S2 = 48, 11
  toks2 = jax.random.randint(ktok, (B2, S2), 1, N_RESIDUES + 1).astype(jnp.int32)
  lens2 = jax.random.randint(klen, (B2,), 3, S2 + 1)
  pos = jnp.arange(S2)[None, :]
  toks2 = jnp.where(pos < lens2[:, None] - 1, toks2, 0)
  toks2 = jnp.where(pos == lens2[:, None] - 1, N_RESIDUES + 1, toks2)  # '$' stop
  chgs2 = jax.random.randint(jax.random.PRNGKey(1), (B2,), 1,
                             MAX_CHARGE + 1).astype(jnp.int32)
  lat2, msk2 = peptide_encoder_forward(toks2, chgs2, params, layer_w)
  lat2 = jax.block_until_ready(lat2)
  assert lat2.shape == (B2, S2 + 1, DIM_MODEL)
  assert msk2.shape == (B2, S2 + 1)
  assert np.isfinite(np.asarray(lat2)).all()

  print("KERNEL_OK")
</pallas_src>

<mosaic_0001>
module attributes {stable_mosaic.version = 11 : i64} {
  func.func @_encoder_layer_kernel(%arg0: i32, %arg1: memref<1x8x128xf32, #tpu.memory_space<vmem>>, %arg2: memref<1x1x8xf32, #tpu.memory_space<vmem>>, %arg3: memref<128x384xbf16, #tpu.memory_space<vmem>>, %arg4: memref<1x384xf32, #tpu.memory_space<vmem>>, %arg5: memref<128x128xbf16, #tpu.memory_space<vmem>>, %arg6: memref<1x128xf32, #tpu.memory_space<vmem>>, %arg7: memref<1x128xf32, #tpu.memory_space<vmem>>, %arg8: memref<1x128xf32, #tpu.memory_space<vmem>>, %arg9: memref<1x128xf32, #tpu.memory_space<vmem>>, %arg10: memref<1x128xf32, #tpu.memory_space<vmem>>, %arg11: memref<128x1024xbf16, #tpu.memory_space<vmem>>, %arg12: memref<1x1024xf32, #tpu.memory_space<vmem>>, %arg13: memref<1024x128xbf16, #tpu.memory_space<vmem>>, %arg14: memref<1x128xf32, #tpu.memory_space<vmem>>, %arg15: memref<1x8x128xf32, #tpu.memory_space<vmem>>) attributes {dimension_semantics = [#tpu.dimension_semantics<parallel>], iteration_bounds = array<i64: 2>, scalar_prefetch = 0 : i64, scratch_operands = 0 : i64, tpu.core_type = #tpu.core_type<tc>, window_params = [{transform_indices = @transform_0, window_bounds = array<i64: 1, 8, 128>}, {transform_indices = @transform_1, window_bounds = array<i64: 1, 1, 8>}, {pipeline_mode = #tpu.pipeline_mode<synchronous>, transform_indices = @transform_2, window_bounds = array<i64: 128, 384>}, {pipeline_mode = #tpu.pipeline_mode<synchronous>, transform_indices = @transform_3, window_bounds = array<i64: 1, 384>}, {pipeline_mode = #tpu.pipeline_mode<synchronous>, transform_indices = @transform_4, window_bounds = array<i64: 128, 128>}, {pipeline_mode = #tpu.pipeline_mode<synchronous>, transform_indices = @transform_5, window_bounds = array<i64: 1, 128>}, {pipeline_mode = #tpu.pipeline_mode<synchronous>, transform_indices = @transform_6, window_bounds = array<i64: 1, 128>}, {pipeline_mode = #tpu.pipeline_mode<synchronous>, transform_indices = @transform_7, window_bounds = array<i64: 1, 128>}, {pipeline_mode = #tpu.pipeline_mode<synchronous>, transform_indices = @transform_8, window_bounds = array<i64: 1, 128>}, {pipeline_mode = #tpu.pipeline_mode<synchronous>, transform_indices = @transform_9, window_bounds = array<i64: 1, 128>}, {pipeline_mode = #tpu.pipeline_mode<synchronous>, transform_indices = @transform_10, window_bounds = array<i64: 128, 1024>}, {pipeline_mode = #tpu.pipeline_mode<synchronous>, transform_indices = @transform_11, window_bounds = array<i64: 1, 1024>}, {pipeline_mode = #tpu.pipeline_mode<synchronous>, transform_indices = @transform_12, window_bounds = array<i64: 1024, 128>}, {pipeline_mode = #tpu.pipeline_mode<synchronous>, transform_indices = @transform_13, window_bounds = array<i64: 1, 128>}, {transform_indices = @transform_14, window_bounds = array<i64: 1, 8, 128>}]} {
    %c0 = arith.constant 0 : index
    %c0_0 = arith.constant 0 : index
    %c0_1 = arith.constant 0 : index
    %0 = vector.load %arg1[%c0, %c0_0, %c0_1] : memref<1x8x128xf32, #tpu.memory_space<vmem>>, vector<1x8x128xf32>
    %1 = vector.shape_cast %0 : vector<1x8x128xf32> to vector<8x128xf32>
    %2 = arith.truncf %1 : vector<8x128xf32> to vector<8x128xbf16>
    %c0_2 = arith.constant 0 : index
    %c0_3 = arith.constant 0 : index
    %3 = vector.load %arg3[%c0_2, %c0_3] : memref<128x384xbf16, #tpu.memory_space<vmem>>, vector<128x384xbf16>
    %cst = arith.constant dense<0.000000e+00> : vector<8x384xf32>
    %4 = tpu.matmul %2, %3, %cst {dimension_numbers = #tpu.dot_dimension_numbers<[1], [0], [0], [1], [0, 0, 1, 1], [], []>} : vector<8x128xbf16>, vector<128x384xbf16>, vector<8x384xf32> -> vector<8x384xf32>
    %c0_4 = arith.constant 0 : index
    %c0_5 = arith.constant 0 : index
    %5 = vector.load %arg4[%c0_4, %c0_5] : memref<1x384xf32, #tpu.memory_space<vmem>>, vector<1x384xf32>
    %6 = vector.broadcast %5 : vector<1x384xf32> to vector<8x384xf32>
    %7 = arith.addf %4, %6 : vector<8x384xf32>
    %8 = arith.truncf %7 : vector<8x384xf32> to vector<8x384xbf16>
    %9 = vector.shape_cast %8 : vector<8x384xbf16> to vector<1x8x384xbf16>
    %c0_6 = arith.constant 0 : index
    %c0_7 = arith.constant 0 : index
    %c0_8 = arith.constant 0 : index
    %10 = vector.load %arg2[%c0_6, %c0_7, %c0_8] : memref<1x1x8xf32, #tpu.memory_space<vmem>>, vector<1x1x8xf32>
    %cst_9 = arith.constant 0.000000e+00 : f32
    %11 = vector.broadcast %cst_9 : f32 to vector<8x128xf32>
    %12 = vector.extract_strided_slice %9 {offsets = [0, 0, 0], sizes = [1, 8, 16], strides = [1, 1, 1]} : vector<1x8x384xbf16> to vector<1x8x16xbf16>
    %13 = vector.extract_strided_slice %9 {offsets = [0, 0, 128], sizes = [1, 8, 16], strides = [1, 1, 1]} : vector<1x8x384xbf16> to vector<1x8x16xbf16>
    %14 = vector.extract_strided_slice %9 {offsets = [0, 0, 256], sizes = [1, 8, 16], strides = [1, 1, 1]} : vector<1x8x384xbf16> to vector<1x8x16xbf16>
    %cst_10 = arith.constant dense<0.000000e+00> : vector<1x8x8xf32>
    %15 = tpu.matmul %12, %13, %cst_10 {dimension_numbers = #tpu.dot_dimension_numbers<[2], [2], [1], [1], [0, 0, 0, 1, 1, 1], [0], [0]>} : vector<1x8x16xbf16>, vector<1x8x16xbf16>, vector<1x8x8xf32> -> vector<1x8x8xf32>
    %16 = vector.broadcast %10 : vector<1x1x8xf32> to vector<1x8x8xf32>
    %17 = arith.addf %15, %16 : vector<1x8x8xf32>
    %cst_11 = arith.constant dense<0xFF800000> : vector<1x8xf32>
    %18 = vector.multi_reduction <maximumf>, %17, %cst_11 [2] : vector<1x8x8xf32> to vector<1x8xf32>
    %19 = vector.shape_cast %18 : vector<1x8xf32> to vector<1x8x1xf32>
    %20 = vector.broadcast %19 : vector<1x8x1xf32> to vector<1x8x8xf32>
    %21 = arith.subf %17, %20 : vector<1x8x8xf32>
    %22 = math.exp %21 : vector<1x8x8xf32>
    %cst_12 = arith.constant dense<0.000000e+00> : vector<1x8xf32>
    %23 = vector.multi_reduction <add>, %22, %cst_12 [2] : vector<1x8x8xf32> to vector<1x8xf32>
    %24 = vector.shape_cast %23 : vector<1x8xf32> to vector<1x8x1xf32>
    %25 = tpu.reciprocal %24 {approx = true} : vector<1x8x1xf32> -> vector<1x8x1xf32>
    %26 = vector.broadcast %25 : vector<1x8x1xf32> to vector<1x8x8xf32>
    %27 = arith.mulf %22, %26 : vector<1x8x8xf32>
    %28 = arith.truncf %27 : vector<1x8x8xf32> to vector<1x8x8xbf16>
    %cst_13 = arith.constant dense<0.000000e+00> : vector<1x8x16xf32>
    %29 = tpu.matmul %28, %14, %cst_13 {dimension_numbers = #tpu.dot_dimension_numbers<[2], [1], [1], [2], [0, 0, 0, 1, 1, 2], [0], [0]>} : vector<1x8x8xbf16>, vector<1x8x16xbf16>, vector<1x8x16xf32> -> vector<1x8x16xf32>
    %30 = vector.shape_cast %29 : vector<1x8x16xf32> to vector<8x16xf32>
    %31 = arith.truncf %30 : vector<8x16xf32> to vector<8x16xbf16>
    %c0_14 = arith.constant 0 : index
    %c0_15 = arith.constant 0 : index
    %32 = vector.load %arg5[%c0_14, %c0_15] : memref<128x128xbf16, #tpu.memory_space<vmem>>, vector<16x128xbf16>
    %cst_16 = arith.constant dense<0.000000e+00> : vector<8x128xf32>
    %33 = tpu.matmul %31, %32, %cst_16 {dimension_numbers = #tpu.dot_dimension_numbers<[1], [0], [0], [1], [0, 0, 1, 1], [], []>} : vector<8x16xbf16>, vector<16x128xbf16>, vector<8x128xf32> -> vector<8x128xf32>
    %34 = arith.addf %11, %33 : vector<8x128xf32>
    %35 = vector.extract_strided_slice %9 {offsets = [0, 0, 16], sizes = [1, 8, 16], strides = [1, 1, 1]} : vector<1x8x384xbf16> to vector<1x8x16xbf16>
    %36 = vector.extract_strided_slice %9 {offsets = [0, 0, 144], sizes = [1, 8, 16], strides = [1, 1, 1]} : vector<1x8x384xbf16> to vector<1x8x16xbf16>
    %37 = vector.extract_strided_slice %9 {offsets = [0, 0, 272], sizes = [1, 8, 16], strides = [1, 1, 1]} : vector<1x8x384xbf16> to vector<1x8x16xbf16>
    %cst_17 = arith.constant dense<0.000000e+00> : vector<1x8x8xf32>
    %38 = tpu.matmul %35, %36, %cst_17 {dimension_numbers = #tpu.dot_dimension_numbers<[2], [2], [1], [1], [0, 0, 0, 1, 1, 1], [0], [0]>} : vector<1x8x16xbf16>, vector<1x8x16xbf16>, vector<1x8x8xf32> -> vector<1x8x8xf32>
    %39 = vector.broadcast %10 : vector<1x1x8xf32> to vector<1x8x8xf32>
    %40 = arith.addf %38, %39 : vector<1x8x8xf32>
    %cst_18 = arith.constant dense<0xFF800000> : vector<1x8xf32>
    %41 = vector.multi_reduction <maximumf>, %40, %cst_18 [2] : vector<1x8x8xf32> to vector<1x8xf32>
    %42 = vector.shape_cast %41 : vector<1x8xf32> to vector<1x8x1xf32>
    %43 = vector.broadcast %42 : vector<1x8x1xf32> to vector<1x8x8xf32>
    %44 = arith.subf %40, %43 : vector<1x8x8xf32>
    %45 = math.exp %44 : vector<1x8x8xf32>
    %cst_19 = arith.constant dense<0.000000e+00> : vector<1x8xf32>
    %46 = vector.multi_reduction <add>, %45, %cst_19 [2] : vector<1x8x8xf32> to vector<1x8xf32>
    %47 = vector.shape_cast %46 : vector<1x8xf32> to vector<1x8x1xf32>
    %48 = tpu.reciprocal %47 {approx = true} : vector<1x8x1xf32> -> vector<1x8x1xf32>
    %49 = vector.broadcast %48 : vector<1x8x1xf32> to vector<1x8x8xf32>
    %50 = arith.mulf %45, %49 : vector<1x8x8xf32>
    %51 = arith.truncf %50 : vector<1x8x8xf32> to vector<1x8x8xbf16>
    %cst_20 = arith.constant dense<0.000000e+00> : vector<1x8x16xf32>
    %52 = tpu.matmul %51, %37, %cst_20 {dimension_numbers = #tpu.dot_dimension_numbers<[2], [1], [1], [2], [0, 0, 0, 1, 1, 2], [0], [0]>} : vector<1x8x8xbf16>, vector<1x8x16xbf16>, vector<1x8x16xf32> -> vector<1x8x16xf32>
    %53 = vector.shape_cast %52 : vector<1x8x16xf32> to vector<8x16xf32>
    %54 = arith.truncf %53 : vector<8x16xf32> to vector<8x16xbf16>
    %c16 = arith.constant 16 : index
    %c0_21 = arith.constant 0 : index
    %55 = vector.load %arg5[%c16, %c0_21] : memref<128x128xbf16, #tpu.memory_space<vmem>>, vector<16x128xbf16>
    %cst_22 = arith.constant dense<0.000000e+00> : vector<8x128xf32>
    %56 = tpu.matmul %54, %55, %cst_22 {dimension_numbers = #tpu.dot_dimension_numbers<[1], [0], [0], [1], [0, 0, 1, 1], [], []>} : vector<8x16xbf16>, vector<16x128xbf16>, vector<8x128xf32> -> vector<8x128xf32>
    %57 = arith.addf %34, %56 : vector<8x128xf32>
    %58 = vector.extract_strided_slice %9 {offsets = [0, 0, 32], sizes = [1, 8, 16], strides = [1, 1, 1]} : vector<1x8x384xbf16> to vector<1x8x16xbf16>
    %59 = vector.extract_strided_slice %9 {offsets = [0, 0, 160], sizes = [1, 8, 16], strides = [1, 1, 1]} : vector<1x8x384xbf16> to vector<1x8x16xbf16>
    %60 = vector.extract_strided_slice %9 {offsets = [0, 0, 288], sizes = [1, 8, 16], strides = [1, 1, 1]} : vector<1x8x384xbf16> to vector<1x8x16xbf16>
    %cst_23 = arith.constant dense<0.000000e+00> : vector<1x8x8xf32>
    %61 = tpu.matmul %58, %59, %cst_23 {dimension_numbers = #tpu.dot_dimension_numbers<[2], [2], [1], [1], [0, 0, 0, 1, 1, 1], [0], [0]>} : vector<1x8x16xbf16>, vector<1x8x16xbf16>, vector<1x8x8xf32> -> vector<1x8x8xf32>
    %62 = vector.broadcast %10 : vector<1x1x8xf32> to vector<1x8x8xf32>
    %63 = arith.addf %61, %62 : vector<1x8x8xf32>
    %cst_24 = arith.constant dense<0xFF800000> : vector<1x8xf32>
    %64 = vector.multi_reduction <maximumf>, %63, %cst_24 [2] : vector<1x8x8xf32> to vector<1x8xf32>
    %65 = vector.shape_cast %64 : vector<1x8xf32> to vector<1x8x1xf32>
    %66 = vector.broadcast %65 : vector<1x8x1xf32> to vector<1x8x8xf32>
    %67 = arith.subf %63, %66 : vector<1x8x8xf32>
    %68 = math.exp %67 : vector<1x8x8xf32>
    %cst_25 = arith.constant dense<0.000000e+00> : vector<1x8xf32>
    %69 = vector.multi_reduction <add>, %68, %cst_25 [2] : vector<1x8x8xf32> to vector<1x8xf32>
    %70 = vector.shape_cast %69 : vector<1x8xf32> to vector<1x8x1xf32>
    %71 = tpu.reciprocal %70 {approx = true} : vector<1x8x1xf32> -> vector<1x8x1xf32>
    %72 = vector.broadcast %71 : vector<1x8x1xf32> to vector<1x8x8xf32>
    %73 = arith.mulf %68, %72 : vector<1x8x8xf32>
    %74 = arith.truncf %73 : vector<1x8x8xf32> to vector<1x8x8xbf16>
    %cst_26 = arith.constant dense<0.000000e+00> : vector<1x8x16xf32>
    %75 = tpu.matmul %74, %60, %cst_26 {dimension_numbers = #tpu.dot_dimension_numbers<[2], [1], [1], [2], [0, 0, 0, 1, 1, 2], [0], [0]>} : vector<1x8x8xbf16>, vector<1x8x16xbf16>, vector<1x8x16xf32> -> vector<1x8x16xf32>
    %76 = vector.shape_cast %75 : vector<1x8x16xf32> to vector<8x16xf32>
    %77 = arith.truncf %76 : vector<8x16xf32> to vector<8x16xbf16>
    %c32 = arith.constant 32 : index
    %c0_27 = arith.constant 0 : index
    %78 = vector.load %arg5[%c32, %c0_27] : memref<128x128xbf16, #tpu.memory_space<vmem>>, vector<16x128xbf16>
    %cst_28 = arith.constant dense<0.000000e+00> : vector<8x128xf32>
    %79 = tpu.matmul %77, %78, %cst_28 {dimension_numbers = #tpu.dot_dimension_numbers<[1], [0], [0], [1], [0, 0, 1, 1], [], []>} : vector<8x16xbf16>, vector<16x128xbf16>, vector<8x128xf32> -> vector<8x128xf32>
    %80 = arith.addf %57, %79 : vector<8x128xf32>
    %81 = vector.extract_strided_slice %9 {offsets = [0, 0, 48], sizes = [1, 8, 16], strides = [1, 1, 1]} : vector<1x8x384xbf16> to vector<1x8x16xbf16>
    %82 = vector.extract_strided_slice %9 {offsets = [0, 0, 176], sizes = [1, 8, 16], strides = [1, 1, 1]} : vector<1x8x384xbf16> to vector<1x8x16xbf16>
    %83 = vector.extract_strided_slice %9 {offsets = [0, 0, 304], sizes = [1, 8, 16], strides = [1, 1, 1]} : vector<1x8x384xbf16> to vector<1x8x16xbf16>
    %cst_29 = arith.constant dense<0.000000e+00> : vector<1x8x8xf32>
    %84 = tpu.matmul %81, %82, %cst_29 {dimension_numbers = #tpu.dot_dimension_numbers<[2], [2], [1], [1], [0, 0, 0, 1, 1, 1], [0], [0]>} : vector<1x8x16xbf16>, vector<1x8x16xbf16>, vector<1x8x8xf32> -> vector<1x8x8xf32>
    %85 = vector.broadcast %10 : vector<1x1x8xf32> to vector<1x8x8xf32>
    %86 = arith.addf %84, %85 : vector<1x8x8xf32>
    %cst_30 = arith.constant dense<0xFF800000> : vector<1x8xf32>
    %87 = vector.multi_reduction <maximumf>, %86, %cst_30 [2] : vector<1x8x8xf32> to vector<1x8xf32>
    %88 = vector.shape_cast %87 : vector<1x8xf32> to vector<1x8x1xf32>
    %89 = vector.broadcast %88 : vector<1x8x1xf32> to vector<1x8x8xf32>
    %90 = arith.subf %86, %89 : vector<1x8x8xf32>
    %91 = math.exp %90 : vector<1x8x8xf32>
    %cst_31 = arith.constant dense<0.000000e+00> : vector<1x8xf32>
    %92 = vector.multi_reduction <add>, %91, %cst_31 [2] : vector<1x8x8xf32> to vector<1x8xf32>
    %93 = vector.shape_cast %92 : vector<1x8xf32> to vector<1x8x1xf32>
    %94 = tpu.reciprocal %93 {approx = true} : vector<1x8x1xf32> -> vector<1x8x1xf32>
    %95 = vector.broadcast %94 : vector<1x8x1xf32> to vector<1x8x8xf32>
    %96 = arith.mulf %91, %95 : vector<1x8x8xf32>
    %97 = arith.truncf %96 : vector<1x8x8xf32> to vector<1x8x8xbf16>
    %cst_32 = arith.constant dense<0.000000e+00> : vector<1x8x16xf32>
    %98 = tpu.matmul %97, %83, %cst_32 {dimension_numbers = #tpu.dot_dimension_numbers<[2], [1], [1], [2], [0, 0, 0, 1, 1, 2], [0], [0]>} : vector<1x8x8xbf16>, vector<1x8x16xbf16>, vector<1x8x16xf32> -> vector<1x8x16xf32>
    %99 = vector.shape_cast %98 : vector<1x8x16xf32> to vector<8x16xf32>
    %100 = arith.truncf %99 : vector<8x16xf32> to vector<8x16xbf16>
    %c48 = arith.constant 48 : index
    %c0_33 = arith.constant 0 : index
    %101 = vector.load %arg5[%c48, %c0_33] : memref<128x128xbf16, #tpu.memory_space<vmem>>, vector<16x128xbf16>
    %cst_34 = arith.constant dense<0.000000e+00> : vector<8x128xf32>
    %102 = tpu.matmul %100, %101, %cst_34 {dimension_numbers = #tpu.dot_dimension_numbers<[1], [0], [0], [1], [0, 0, 1, 1], [], []>} : vector<8x16xbf16>, vector<16x128xbf16>, vector<8x128xf32> -> vector<8x128xf32>
    %103 = arith.addf %80, %102 : vector<8x128xf32>
    %104 = vector.extract_strided_slice %9 {offsets = [0, 0, 64], sizes = [1, 8, 16], strides = [1, 1, 1]} : vector<1x8x384xbf16> to vector<1x8x16xbf16>
    %105 = vector.extract_strided_slice %9 {offsets = [0, 0, 192], sizes = [1, 8, 16], strides = [1, 1, 1]} : vector<1x8x384xbf16> to vector<1x8x16xbf16>
    %106 = vector.extract_strided_slice %9 {offsets = [0, 0, 320], sizes = [1, 8, 16], strides = [1, 1, 1]} : vector<1x8x384xbf16> to vector<1x8x16xbf16>
    %cst_35 = arith.constant dense<0.000000e+00> : vector<1x8x8xf32>
    %107 = tpu.matmul %104, %105, %cst_35 {dimension_numbers = #tpu.dot_dimension_numbers<[2], [2], [1], [1], [0, 0, 0, 1, 1, 1], [0], [0]>} : vector<1x8x16xbf16>, vector<1x8x16xbf16>, vector<1x8x8xf32> -> vector<1x8x8xf32>
    %108 = vector.broadcast %10 : vector<1x1x8xf32> to vector<1x8x8xf32>
    %109 = arith.addf %107, %108 : vector<1x8x8xf32>
    %cst_36 = arith.constant dense<0xFF800000> : vector<1x8xf32>
    %110 = vector.multi_reduction <maximumf>, %109, %cst_36 [2] : vector<1x8x8xf32> to vector<1x8xf32>
    %111 = vector.shape_cast %110 : vector<1x8xf32> to vector<1x8x1xf32>
    %112 = vector.broadcast %111 : vector<1x8x1xf32> to vector<1x8x8xf32>
    %113 = arith.subf %109, %112 : vector<1x8x8xf32>
    %114 = math.exp %113 : vector<1x8x8xf32>
    %cst_37 = arith.constant dense<0.000000e+00> : vector<1x8xf32>
    %115 = vector.multi_reduction <add>, %114, %cst_37 [2] : vector<1x8x8xf32> to vector<1x8xf32>
    %116 = vector.shape_cast %115 : vector<1x8xf32> to vector<1x8x1xf32>
    %117 = tpu.reciprocal %116 {approx = true} : vector<1x8x1xf32> -> vector<1x8x1xf32>
    %118 = vector.broadcast %117 : vector<1x8x1xf32> to vector<1x8x8xf32>
    %119 = arith.mulf %114, %118 : vector<1x8x8xf32>
    %120 = arith.truncf %119 : vector<1x8x8xf32> to vector<1x8x8xbf16>
    %cst_38 = arith.constant dense<0.000000e+00> : vector<1x8x16xf32>
    %121 = tpu.matmul %120, %106, %cst_38 {dimension_numbers = #tpu.dot_dimension_numbers<[2], [1], [1], [2], [0, 0, 0, 1, 1, 2], [0], [0]>} : vector<1x8x8xbf16>, vector<1x8x16xbf16>, vector<1x8x16xf32> -> vector<1x8x16xf32>
    %122 = vector.shape_cast %121 : vector<1x8x16xf32> to vector<8x16xf32>
    %123 = arith.truncf %122 : vector<8x16xf32> to vector<8x16xbf16>
    %c64 = arith.constant 64 : index
    %c0_39 = arith.constant 0 : index
    %124 = vector.load %arg5[%c64, %c0_39] : memref<128x128xbf16, #tpu.memory_space<vmem>>, vector<16x128xbf16>
    %cst_40 = arith.constant dense<0.000000e+00> : vector<8x128xf32>
    %125 = tpu.matmul %123, %124, %cst_40 {dimension_numbers = #tpu.dot_dimension_numbers<[1], [0], [0], [1], [0, 0, 1, 1], [], []>} : vector<8x16xbf16>, vector<16x128xbf16>, vector<8x128xf32> -> vector<8x128xf32>
    %126 = arith.addf %103, %125 : vector<8x128xf32>
    %127 = vector.extract_strided_slice %9 {offsets = [0, 0, 80], sizes = [1, 8, 16], strides = [1, 1, 1]} : vector<1x8x384xbf16> to vector<1x8x16xbf16>
    %128 = vector.extract_strided_slice %9 {offsets = [0, 0, 208], sizes = [1, 8, 16], strides = [1, 1, 1]} : vector<1x8x384xbf16> to vector<1x8x16xbf16>
    %129 = vector.extract_strided_slice %9 {offsets = [0, 0, 336], sizes = [1, 8, 16], strides = [1, 1, 1]} : vector<1x8x384xbf16> to vector<1x8x16xbf16>
    %cst_41 = arith.constant dense<0.000000e+00> : vector<1x8x8xf32>
    %130 = tpu.matmul %127, %128, %cst_41 {dimension_numbers = #tpu.dot_dimension_numbers<[2], [2], [1], [1], [0, 0, 0, 1, 1, 1], [0], [0]>} : vector<1x8x16xbf16>, vector<1x8x16xbf16>, vector<1x8x8xf32> -> vector<1x8x8xf32>
    %131 = vector.broadcast %10 : vector<1x1x8xf32> to vector<1x8x8xf32>
    %132 = arith.addf %130, %131 : vector<1x8x8xf32>
    %cst_42 = arith.constant dense<0xFF800000> : vector<1x8xf32>
    %133 = vector.multi_reduction <maximumf>, %132, %cst_42 [2] : vector<1x8x8xf32> to vector<1x8xf32>
    %134 = vector.shape_cast %133 : vector<1x8xf32> to vector<1x8x1xf32>
    %135 = vector.broadcast %134 : vector<1x8x1xf32> to vector<1x8x8xf32>
    %136 = arith.subf %132, %135 : vector<1x8x8xf32>
    %137 = math.exp %136 : vector<1x8x8xf32>
    %cst_43 = arith.constant dense<0.000000e+00> : vector<1x8xf32>
    %138 = vector.multi_reduction <add>, %137, %cst_43 [2] : vector<1x8x8xf32> to vector<1x8xf32>
    %139 = vector.shape_cast %138 : vector<1x8xf32> to vector<1x8x1xf32>
    %140 = tpu.reciprocal %139 {approx = true} : vector<1x8x1xf32> -> vector<1x8x1xf32>
    %141 = vector.broadcast %140 : vector<1x8x1xf32> to vector<1x8x8xf32>
    %142 = arith.mulf %137, %141 : vector<1x8x8xf32>
    %143 = arith.truncf %142 : vector<1x8x8xf32> to vector<1x8x8xbf16>
    %cst_44 = arith.constant dense<0.000000e+00> : vector<1x8x16xf32>
    %144 = tpu.matmul %143, %129, %cst_44 {dimension_numbers = #tpu.dot_dimension_numbers<[2], [1], [1], [2], [0, 0, 0, 1, 1, 2], [0], [0]>} : vector<1x8x8xbf16>, vector<1x8x16xbf16>, vector<1x8x16xf32> -> vector<1x8x16xf32>
    %145 = vector.shape_cast %144 : vector<1x8x16xf32> to vector<8x16xf32>
    %146 = arith.truncf %145 : vector<8x16xf32> to vector<8x16xbf16>
    %c80 = arith.constant 80 : index
    %c0_45 = arith.constant 0 : index
    %147 = vector.load %arg5[%c80, %c0_45] : memref<128x128xbf16, #tpu.memory_space<vmem>>, vector<16x128xbf16>
    %cst_46 = arith.constant dense<0.000000e+00> : vector<8x128xf32>
    %148 = tpu.matmul %146, %147, %cst_46 {dimension_numbers = #tpu.dot_dimension_numbers<[1], [0], [0], [1], [0, 0, 1, 1], [], []>} : vector<8x16xbf16>, vector<16x128xbf16>, vector<8x128xf32> -> vector<8x128xf32>
    %149 = arith.addf %126, %148 : vector<8x128xf32>
    %150 = vector.extract_strided_slice %9 {offsets = [0, 0, 96], sizes = [1, 8, 16], strides = [1, 1, 1]} : vector<1x8x384xbf16> to vector<1x8x16xbf16>
    %151 = vector.extract_strided_slice %9 {offsets = [0, 0, 224], sizes = [1, 8, 16], strides = [1, 1, 1]} : vector<1x8x384xbf16> to vector<1x8x16xbf16>
    %152 = vector.extract_strided_slice %9 {offsets = [0, 0, 352], sizes = [1, 8, 16], strides = [1, 1, 1]} : vector<1x8x384xbf16> to vector<1x8x16xbf16>
    %cst_47 = arith.constant dense<0.000000e+00> : vector<1x8x8xf32>
    %153 = tpu.matmul %150, %151, %cst_47 {dimension_numbers = #tpu.dot_dimension_numbers<[2], [2], [1], [1], [0, 0, 0, 1, 1, 1], [0], [0]>} : vector<1x8x16xbf16>, vector<1x8x16xbf16>, vector<1x8x8xf32> -> vector<1x8x8xf32>
    %154 = vector.broadcast %10 : vector<1x1x8xf32> to vector<1x8x8xf32>
    %155 = arith.addf %153, %154 : vector<1x8x8xf32>
    %cst_48 = arith.constant dense<0xFF800000> : vector<1x8xf32>
    %156 = vector.multi_reduction <maximumf>, %155, %cst_48 [2] : vector<1x8x8xf32> to vector<1x8xf32>
    %157 = vector.shape_cast %156 : vector<1x8xf32> to vector<1x8x1xf32>
    %158 = vector.broadcast %157 : vector<1x8x1xf32> to vector<1x8x8xf32>
    %159 = arith.subf %155, %158 : vector<1x8x8xf32>
    %160 = math.exp %159 : vector<1x8x8xf32>
    %cst_49 = arith.constant dense<0.000000e+00> : vector<1x8xf32>
    %161 = vector.multi_reduction <add>, %160, %cst_49 [2] : vector<1x8x8xf32> to vector<1x8xf32>
    %162 = vector.shape_cast %161 : vector<1x8xf32> to vector<1x8x1xf32>
    %163 = tpu.reciprocal %162 {approx = true} : vector<1x8x1xf32> -> vector<1x8x1xf32>
    %164 = vector.broadcast %163 : vector<1x8x1xf32> to vector<1x8x8xf32>
    %165 = arith.mulf %160, %164 : vector<1x8x8xf32>
    %166 = arith.truncf %165 : vector<1x8x8xf32> to vector<1x8x8xbf16>
    %cst_50 = arith.constant dense<0.000000e+00> : vector<1x8x16xf32>
    %167 = tpu.matmul %166, %152, %cst_50 {dimension_numbers = #tpu.dot_dimension_numbers<[2], [1], [1], [2], [0, 0, 0, 1, 1, 2], [0], [0]>} : vector<1x8x8xbf16>, vector<1x8x16xbf16>, vector<1x8x16xf32> -> vector<1x8x16xf32>
    %168 = vector.shape_cast %167 : vector<1x8x16xf32> to vector<8x16xf32>
    %169 = arith.truncf %168 : vector<8x16xf32> to vector<8x16xbf16>
    %c96 = arith.constant 96 : index
    %c0_51 = arith.constant 0 : index
    %170 = vector.load %arg5[%c96, %c0_51] : memref<128x128xbf16, #tpu.memory_space<vmem>>, vector<16x128xbf16>
    %cst_52 = arith.constant dense<0.000000e+00> : vector<8x128xf32>
    %171 = tpu.matmul %169, %170, %cst_52 {dimension_numbers = #tpu.dot_dimension_numbers<[1], [0], [0], [1], [0, 0, 1, 1], [], []>} : vector<8x16xbf16>, vector<16x128xbf16>, vector<8x128xf32> -> vector<8x128xf32>
    %172 = arith.addf %149, %171 : vector<8x128xf32>
    %173 = vector.extract_strided_slice %9 {offsets = [0, 0, 112], sizes = [1, 8, 16], strides = [1, 1, 1]} : vector<1x8x384xbf16> to vector<1x8x16xbf16>
    %174 = vector.extract_strided_slice %9 {offsets = [0, 0, 240], sizes = [1, 8, 16], strides = [1, 1, 1]} : vector<1x8x384xbf16> to vector<1x8x16xbf16>
    %175 = vector.extract_strided_slice %9 {offsets = [0, 0, 368], sizes = [1, 8, 16], strides = [1, 1, 1]} : vector<1x8x384xbf16> to vector<1x8x16xbf16>
    %cst_53 = arith.constant dense<0.000000e+00> : vector<1x8x8xf32>
    %176 = tpu.matmul %173, %174, %cst_53 {dimension_numbers = #tpu.dot_dimension_numbers<[2], [2], [1], [1], [0, 0, 0, 1, 1, 1], [0], [0]>} : vector<1x8x16xbf16>, vector<1x8x16xbf16>, vector<1x8x8xf32> -> vector<1x8x8xf32>
    %177 = vector.broadcast %10 : vector<1x1x8xf32> to vector<1x8x8xf32>
    %178 = arith.addf %176, %177 : vector<1x8x8xf32>
    %cst_54 = arith.constant dense<0xFF800000> : vector<1x8xf32>
    %179 = vector.multi_reduction <maximumf>, %178, %cst_54 [2] : vector<1x8x8xf32> to vector<1x8xf32>
    %180 = vector.shape_cast %179 : vector<1x8xf32> to vector<1x8x1xf32>
    %181 = vector.broadcast %180 : vector<1x8x1xf32> to vector<1x8x8xf32>
    %182 = arith.subf %178, %181 : vector<1x8x8xf32>
    %183 = math.exp %182 : vector<1x8x8xf32>
    %cst_55 = arith.constant dense<0.000000e+00> : vector<1x8xf32>
    %184 = vector.multi_reduction <add>, %183, %cst_55 [2] : vector<1x8x8xf32> to vector<1x8xf32>
    %185 = vector.shape_cast %184 : vector<1x8xf32> to vector<1x8x1xf32>
    %186 = tpu.reciprocal %185 {approx = true} : vector<1x8x1xf32> -> vector<1x8x1xf32>
    %187 = vector.broadcast %186 : vector<1x8x1xf32> to vector<1x8x8xf32>
    %188 = arith.mulf %183, %187 : vector<1x8x8xf32>
    %189 = arith.truncf %188 : vector<1x8x8xf32> to vector<1x8x8xbf16>
    %cst_56 = arith.constant dense<0.000000e+00> : vector<1x8x16xf32>
    %190 = tpu.matmul %189, %175, %cst_56 {dimension_numbers = #tpu.dot_dimension_numbers<[2], [1], [1], [2], [0, 0, 0, 1, 1, 2], [0], [0]>} : vector<1x8x8xbf16>, vector<1x8x16xbf16>, vector<1x8x16xf32> -> vector<1x8x16xf32>
    %191 = vector.shape_cast %190 : vector<1x8x16xf32> to vector<8x16xf32>
    %192 = arith.truncf %191 : vector<8x16xf32> to vector<8x16xbf16>
    %c112 = arith.constant 112 : index
    %c0_57 = arith.constant 0 : index
    %193 = vector.load %arg5[%c112, %c0_57] : memref<128x128xbf16, #tpu.memory_space<vmem>>, vector<16x128xbf16>
    %cst_58 = arith.constant dense<0.000000e+00> : vector<8x128xf32>
    %194 = tpu.matmul %192, %193, %cst_58 {dimension_numbers = #tpu.dot_dimension_numbers<[1], [0], [0], [1], [0, 0, 1, 1], [], []>} : vector<8x16xbf16>, vector<16x128xbf16>, vector<8x128xf32> -> vector<8x128xf32>
    %195 = arith.addf %172, %194 : vector<8x128xf32>
    %c0_59 = arith.constant 0 : index
    %c0_60 = arith.constant 0 : index
    %196 = vector.load %arg6[%c0_59, %c0_60] : memref<1x128xf32, #tpu.memory_space<vmem>>, vector<1x128xf32>
    %197 = vector.broadcast %196 : vector<1x128xf32> to vector<8x128xf32>
    %198 = arith.addf %195, %197 : vector<8x128xf32>
    %199 = arith.addf %1, %198 : vector<8x128xf32>
    %cst_61 = arith.constant dense<0.000000e+00> : vector<8xf32>
    %200 = vector.multi_reduction <add>, %199, %cst_61 [1] : vector<8x128xf32> to vector<8xf32>
    %201 = vector.shape_cast %200 : vector<8xf32> to vector<8x1xf32>
    %cst_62 = arith.constant 1.280000e+02 : f32
    %202 = vector.broadcast %cst_62 : f32 to vector<8x1xf32>
    %203 = arith.divf %201, %202 : vector<8x1xf32>
    %204 = vector.broadcast %203 : vector<8x1xf32> to vector<8x128xf32>
    %205 = arith.subf %199, %204 : vector<8x128xf32>
    %206 = arith.mulf %205, %205 : vector<8x128xf32>
    %cst_63 = arith.constant dense<0.000000e+00> : vector<8xf32>
    %207 = vector.multi_reduction <add>, %206, %cst_63 [1] : vector<8x128xf32> to vector<8xf32>
    %208 = vector.shape_cast %207 : vector<8xf32> to vector<8x1xf32>
    %cst_64 = arith.constant 1.280000e+02 : f32
    %209 = vector.broadcast %cst_64 : f32 to vector<8x1xf32>
    %210 = arith.divf %208, %209 : vector<8x1xf32>
    %211 = vector.broadcast %203 : vector<8x1xf32> to vector<8x128xf32>
    %212 = arith.subf %199, %211 : vector<8x128xf32>
    %cst_65 = arith.constant 9.99999974E-6 : f32
    %213 = vector.broadcast %cst_65 : f32 to vector<8x1xf32>
    %214 = arith.addf %210, %213 : vector<8x1xf32>
    %215 = math.rsqrt %214 : vector<8x1xf32>
    %216 = vector.broadcast %215 : vector<8x1xf32> to vector<8x128xf32>
    %217 = arith.mulf %212, %216 : vector<8x128xf32>
    %c0_66 = arith.constant 0 : index
    %c0_67 = arith.constant 0 : index
    %218 = vector.load %arg7[%c0_66, %c0_67] : memref<1x128xf32, #tpu.memory_space<vmem>>, vector<1x128xf32>
    %219 = vector.broadcast %218 : vector<1x128xf32> to vector<8x128xf32>
    %220 = arith.mulf %217, %219 : vector<8x128xf32>
    %c0_68 = arith.constant 0 : index
    %c0_69 = arith.constant 0 : index
    %221 = vector.load %arg8[%c0_68, %c0_69] : memref<1x128xf32, #tpu.memory_space<vmem>>, vector<1x128xf32>
    %222 = vector.broadcast %221 : vector<1x128xf32> to vector<8x128xf32>
    %223 = arith.addf %220, %222 : vector<8x128xf32>
    %224 = arith.truncf %223 : vector<8x128xf32> to vector<8x128xbf16>
    %c0_70 = arith.constant 0 : index
    %c0_71 = arith.constant 0 : index
    %225 = vector.load %arg11[%c0_70, %c0_71] : memref<128x1024xbf16, #tpu.memory_space<vmem>>, vector<128x1024xbf16>
    %cst_72 = arith.constant dense<0.000000e+00> : vector<8x1024xf32>
    %226 = tpu.matmul %224, %225, %cst_72 {dimension_numbers = #tpu.dot_dimension_numbers<[1], [0], [0], [1], [0, 0, 1, 1], [], []>} : vector<8x128xbf16>, vector<128x1024xbf16>, vector<8x1024xf32> -> vector<8x1024xf32>
    %c0_73 = arith.constant 0 : index
    %c0_74 = arith.constant 0 : index
    %227 = vector.load %arg12[%c0_73, %c0_74] : memref<1x1024xf32, #tpu.memory_space<vmem>>, vector<1x1024xf32>
    %228 = vector.broadcast %227 : vector<1x1024xf32> to vector<8x1024xf32>
    %229 = arith.addf %226, %228 : vector<8x1024xf32>
    %cst_75 = arith.constant 0.000000e+00 : f32
    %230 = vector.broadcast %cst_75 : f32 to vector<8x1024xf32>
    %231 = arith.maximumf %229, %230 : vector<8x1024xf32>
    %232 = arith.truncf %231 : vector<8x1024xf32> to vector<8x1024xbf16>
    %c0_76 = arith.constant 0 : index
    %c0_77 = arith.constant 0 : index
    %233 = vector.load %arg13[%c0_76, %c0_77] : memref<1024x128xbf16, #tpu.memory_space<vmem>>, vector<1024x128xbf16>
    %cst_78 = arith.constant dense<0.000000e+00> : vector<8x128xf32>
    %234 = tpu.matmul %232, %233, %cst_78 {dimension_numbers = #tpu.dot_dimension_numbers<[1], [0], [0], [1], [0, 0, 1, 1], [], []>} : vector<8x1024xbf16>, vector<1024x128xbf16>, vector<8x128xf32> -> vector<8x128xf32>
    %c0_79 = arith.constant 0 : index
    %c0_80 = arith.constant 0 : index
    %235 = vector.load %arg14[%c0_79, %c0_80] : memref<1x128xf32, #tpu.memory_space<vmem>>, vector<1x128xf32>
    %236 = vector.broadcast %235 : vector<1x128xf32> to vector<8x128xf32>
    %237 = arith.addf %234, %236 : vector<8x128xf32>
    %238 = arith.addf %223, %237 : vector<8x128xf32>
    %cst_81 = arith.constant dense<0.000000e+00> : vector<8xf32>
    %239 = vector.multi_reduction <add>, %238, %cst_81 [1] : vector<8x128xf32> to vector<8xf32>
    %240 = vector.shape_cast %239 : vector<8xf32> to vector<8x1xf32>
    %cst_82 = arith.constant 1.280000e+02 : f32
    %241 = vector.broadcast %cst_82 : f32 to vector<8x1xf32>
    %242 = arith.divf %240, %241 : vector<8x1xf32>
    %243 = vector.broadcast %242 : vector<8x1xf32> to vector<8x128xf32>
    %244 = arith.subf %238, %243 : vector<8x128xf32>
    %245 = arith.mulf %244, %244 : vector<8x128xf32>
    %cst_83 = arith.constant dense<0.000000e+00> : vector<8xf32>
    %246 = vector.multi_reduction <add>, %245, %cst_83 [1] : vector<8x128xf32> to vector<8xf32>
    %247 = vector.shape_cast %246 : vector<8xf32> to vector<8x1xf32>
    %cst_84 = arith.constant 1.280000e+02 : f32
    %248 = vector.broadcast %cst_84 : f32 to vector<8x1xf32>
    %249 = arith.divf %247, %248 : vector<8x1xf32>
    %250 = vector.broadcast %242 : vector<8x1xf32> to vector<8x128xf32>
    %251 = arith.subf %238, %250 : vector<8x128xf32>
    %cst_85 = arith.constant 9.99999974E-6 : f32
    %252 = vector.broadcast %cst_85 : f32 to vector<8x1xf32>
    %253 = arith.addf %249, %252 : vector<8x1xf32>
    %254 = math.rsqrt %253 : vector<8x1xf32>
    %255 = vector.broadcast %254 : vector<8x1xf32> to vector<8x128xf32>
    %256 = arith.mulf %251, %255 : vector<8x128xf32>
    %c0_86 = arith.constant 0 : index
    %c0_87 = arith.constant 0 : index
    %257 = vector.load %arg9[%c0_86, %c0_87] : memref<1x128xf32, #tpu.memory_space<vmem>>, vector<1x128xf32>
    %258 = vector.broadcast %257 : vector<1x128xf32> to vector<8x128xf32>
    %259 = arith.mulf %256, %258 : vector<8x128xf32>
    %c0_88 = arith.constant 0 : index
    %c0_89 = arith.constant 0 : index
    %260 = vector.load %arg10[%c0_88, %c0_89] : memref<1x128xf32, #tpu.memory_space<vmem>>, vector<1x128xf32>
    %261 = vector.broadcast %260 : vector<1x128xf32> to vector<8x128xf32>
    %262 = arith.addf %259, %261 : vector<8x128xf32>
    %263 = vector.shape_cast %262 : vector<8x128xf32> to vector<1x8x128xf32>
    %c0_90 = arith.constant 0 : index
    %c0_91 = arith.constant 0 : index
    %c0_92 = arith.constant 0 : index
    %264 = vector.load %arg15[%c0_90, %c0_91, %c0_92] : memref<1x8x128xf32, #tpu.memory_space<vmem>>, vector<1x8x128xf32>
    tpu.vector_store %arg15[%c0_90, %c0_91, %c0_92], %263 {strides = array<i32>} : memref<1x8x128xf32, #tpu.memory_space<vmem>>, vector<1x8x128xf32>,
    return
  }
  func.func @transform_0(%arg0: i32) -> (i32, i32, i32) {
    %c0_i32 = arith.constant 0 : i32
    %c0_i32_0 = arith.constant 0 : i32
    %c0_i32_1 = arith.constant 0 : i32
    return %arg0, %c0_i32, %c0_i32_0 : i32, i32, i32
  }
  func.func @transform_1(%arg0: i32) -> (i32, i32, i32) {
    %c0_i32 = arith.constant 0 : i32
    %c0_i32_0 = arith.constant 0 : i32
    %c0_i32_1 = arith.constant 0 : i32
    return %arg0, %c0_i32, %c0_i32_0 : i32, i32, i32
  }
  func.func @transform_2(%arg0: i32) -> (i32, i32) {
    %c0_i32 = arith.constant 0 : i32
    %c0_i32_0 = arith.constant 0 : i32
    %c0_i32_1 = arith.constant 0 : i32
    return %c0_i32, %c0_i32_0 : i32, i32
  }
  func.func @transform_3(%arg0: i32) -> (i32, i32) {
    %c0_i32 = arith.constant 0 : i32
    %c0_i32_0 = arith.constant 0 : i32
    %c0_i32_1 = arith.constant 0 : i32
    return %c0_i32, %c0_i32_0 : i32, i32
  }
  func.func @transform_4(%arg0: i32) -> (i32, i32) {
    %c0_i32 = arith.constant 0 : i32
    %c0_i32_0 = arith.constant 0 : i32
    %c0_i32_1 = arith.constant 0 : i32
    return %c0_i32, %c0_i32_0 : i32, i32
  }
  func.func @transform_5(%arg0: i32) -> (i32, i32) {
    %c0_i32 = arith.constant 0 : i32
    %c0_i32_0 = arith.constant 0 : i32
    %c0_i32_1 = arith.constant 0 : i32
    return %c0_i32, %c0_i32_0 : i32, i32
  }
  func.func @transform_6(%arg0: i32) -> (i32, i32) {
    %c0_i32 = arith.constant 0 : i32
    %c0_i32_0 = arith.constant 0 : i32
    %c0_i32_1 = arith.constant 0 : i32
    return %c0_i32, %c0_i32_0 : i32, i32
  }
  func.func @transform_7(%arg0: i32) -> (i32, i32) {
    %c0_i32 = arith.constant 0 : i32
    %c0_i32_0 = arith.constant 0 : i32
    %c0_i32_1 = arith.constant 0 : i32
    return %c0_i32, %c0_i32_0 : i32, i32
  }
  func.func @transform_8(%arg0: i32) -> (i32, i32) {
    %c0_i32 = arith.constant 0 : i32
    %c0_i32_0 = arith.constant 0 : i32
    %c0_i32_1 = arith.constant 0 : i32
    return %c0_i32, %c0_i32_0 : i32, i32
  }
  func.func @transform_9(%arg0: i32) -> (i32, i32) {
    %c0_i32 = arith.constant 0 : i32
    %c0_i32_0 = arith.constant 0 : i32
    %c0_i32_1 = arith.constant 0 : i32
    return %c0_i32, %c0_i32_0 : i32, i32
  }
  func.func @transform_10(%arg0: i32) -> (i32, i32) {
    %c0_i32 = arith.constant 0 : i32
    %c0_i32_0 = arith.constant 0 : i32
    %c0_i32_1 = arith.constant 0 : i32
    return %c0_i32, %c0_i32_0 : i32, i32
  }
  func.func @transform_11(%arg0: i32) -> (i32, i32) {
    %c0_i32 = arith.constant 0 : i32
    %c0_i32_0 = arith.constant 0 : i32
    %c0_i32_1 = arith.constant 0 : i32
    return %c0_i32, %c0_i32_0 : i32, i32
  }
  func.func @transform_12(%arg0: i32) -> (i32, i32) {
    %c0_i32 = arith.constant 0 : i32
    %c0_i32_0 = arith.constant 0 : i32
    %c0_i32_1 = arith.constant 0 : i32
    return %c0_i32, %c0_i32_0 : i32, i32
  }
  func.func @transform_13(%arg0: i32) -> (i32, i32) {
    %c0_i32 = arith.constant 0 : i32
    %c0_i32_0 = arith.constant 0 : i32
    %c0_i32_1 = arith.constant 0 : i32
    return %c0_i32, %c0_i32_0 : i32, i32
  }
  func.func @transform_14(%arg0: i32) -> (i32, i32, i32) {
    %c0_i32 = arith.constant 0 : i32
    %c0_i32_0 = arith.constant 0 : i32
    %c0_i32_1 = arith.constant 0 : i32
    return %arg0, %c0_i32, %c0_i32_0 : i32, i32, i32
  }
}

</mosaic_0001>

<llo_original>
// kernel: tpu_custom_call.1
$region0: #{tpu_custom_call.1}
  #allocation0 [shape = 'u32[]', space=smem, size = 0x4, offset = 0x4, fixed_abs, tag = 'smem constant byte address 0x4 - core index']
  #allocation1 [shape = 'u32[144,128]{1,0:T(1,128)}', space=vmem, size = 0x12000, scoped, tag = 'internal scratch']
  %s0 = inlined_call_operand.hbm [shape: f32[2,8,128], index: 0, kind: input, shape index: {}]
  %s1 = inlined_call_operand.hbm [shape: f32[2,1,8], index: 1, kind: input, shape index: {}]
  %s2 = inlined_call_operand.hbm [shape: bf16[128,384], index: 2, kind: input, shape index: {}]
  %s3 = inlined_call_operand.vmem [shape: f32[1,384], index: 3, kind: input, shape index: {}]
  %s4 = inlined_call_operand.hbm [shape: bf16[128,128], index: 4, kind: input, shape index: {}]
  %s5 = inlined_call_operand.vmem [shape: f32[1,128], index: 5, kind: input, shape index: {}]
  %s6 = inlined_call_operand.vmem [shape: f32[1,128], index: 6, kind: input, shape index: {}]
  %s7 = inlined_call_operand.vmem [shape: f32[1,128], index: 7, kind: input, shape index: {}]
  %s8 = inlined_call_operand.vmem [shape: f32[1,128], index: 8, kind: input, shape index: {}]
  %s9 = inlined_call_operand.vmem [shape: f32[1,128], index: 9, kind: input, shape index: {}]
  %s10 = inlined_call_operand.hbm [shape: bf16[128,1024], index: 10, kind: input, shape index: {}]
  %s11 = inlined_call_operand.vmem [shape: f32[1,1024], index: 11, kind: input, shape index: {}]
  %s12 = inlined_call_operand.hbm [shape: bf16[1024,128], index: 12, kind: input, shape index: {}]
  %s13 = inlined_call_operand.vmem [shape: f32[1,128], index: 13, kind: input, shape index: {}]
  %s14 = inlined_call_operand.hbm [shape: f32[2,8,128], index: 14, kind: output, shape index: {}]
  %s15 = sld [smem:[#allocation0]]
  $region113: #{tpu_custom_call.1} parent=0
    _
  %s17 = ssub.s32 1, %s15
  %s18 = scalar_select 0, %s17, %s15
  $region1: #{tpu_custom_call.1} parent=0
    #allocation2 [shape = 'u8[8192]{0}', space=vmem, size = 0x2000, scoped, tag = 'input window, operand 0']
    #allocation3 [shape = 's32[2]{0}', space=sflag, size = 0x8, scoped, tag = 'scoped memory for tpu_custom_call.1']
    #allocation4 [shape = 's32[2]{0}', space=sflag, size = 0x8, scoped, tag = 'scoped memory for tpu_custom_call.1']
    #allocation5 [shape = 'u8[1024]{0}', space=vmem, size = 0x400, scoped, tag = 'input window, operand 1']
    #allocation6 [shape = 's32[2]{0}', space=sflag, size = 0x8, scoped, tag = 'scoped memory for tpu_custom_call.1']
    #allocation7 [shape = 'u8[98304]{0}', space=vmem, size = 0x18000, scoped, tag = 'input window, operand 2, single buffered']
    #allocation8 [shape = 'u8[32768]{0}', space=vmem, size = 0x8000, scoped, tag = 'input window, operand 4, single buffered']
    #allocation9 [shape = 's32[1]{0}', space=sflag, size = 0x4, scoped, tag = 'scoped memory for tpu_custom_call.1']
    #allocation10 [shape = 'u8[262144]{0}', space=vmem, size = 0x40000, scoped, tag = 'input window, operand 10, single buffered']
    #allocation11 [shape = 'u8[262144]{0}', space=vmem, size = 0x40000, scoped, tag = 'input window, operand 12, single buffered']
    #allocation12 [shape = 's32[1]{0}', space=sflag, size = 0x4, scoped, tag = 'scoped memory for tpu_custom_call.1']
    #allocation13 [shape = 'u8[8192]{0}', space=vmem, size = 0x2000, scoped, tag = 'output window, operand 0']
    %19 = vsyncpa [#allocation3], 0
    %s20 = scalar_lea.sflag [#allocation3], 1
    %21 = vsyncpa %s20, 0
    %22 = vsyncpa [#allocation6], 0
    %s23 = scalar_lea.sflag [#allocation6], 1
    %24 = vsyncpa %s23, 0
    %25 = vsyncpa [#allocation9], 0
    %26 = vsyncpa [#allocation12], 0
    %27 = vsyncpa [#allocation4], 0
    %s28 = scalar_lea.sflag [#allocation4], 1
    %29 = vsyncpa %s28, 0
    loop: start=0, step=1, limit=4
    $region2: #{tpu_custom_call.1} parent=1 // loop_pre_header
      _
    $region3: #{tpu_custom_call.1} parent=1 // loop_header
      %s31 = sphi 0, %s35
      %p32 = scmp.ge.s32.totalorder %s31, 4
      %s41 = sphi 0, %s43
      %s44 = sphi 0, %s41
      %s45 = sphi 0, %s44
      %s61 = sphi 0, %s45
      %s67 = sphi 0, %s69
      %s70 = sphi 0, %s67
      %s71 = sphi 0, %s70
      %s87 = sphi 0, %s71
      %s91 = sphi 0, %s91
      %s93 = sphi 0, %s91
      %s94 = sphi 0, %s93
      %s108 = sphi 0, %s94
      %s112 = sphi 0, %s112
      %s114 = sphi 0, %s112
      %s115 = sphi 0, %s114
      %s129 = sphi 0, %s115
      %s133 = sphi 0, %s133
      %s135 = sphi 0, %s133
      %s136 = sphi 0, %s135
      %s150 = sphi 0, %s136
      %s154 = sphi 0, %s154
      %s156 = sphi 0, %s154
      %s157 = sphi 0, %s156
      %s171 = sphi 0, %s157
      %s175 = sphi 0, %s175
      %s177 = sphi 0, %s175
      %s178 = sphi 0, %s177
      %s192 = sphi 0, %s178
      %s196 = sphi 0, %s196
      %s198 = sphi 0, %s196
      %s199 = sphi 0, %s198
      %s213 = sphi 0, %s199
      %s217 = sphi 0, %s217
      %s219 = sphi 0, %s217
      %s220 = sphi 0, %s219
      %s234 = sphi 0, %s220
      %s238 = sphi 0, %s238
      %s240 = sphi 0, %s238
      %s241 = sphi 0, %s240
      %s255 = sphi 0, %s241
      %s259 = sphi 0, %s259
      %s261 = sphi 0, %s259
      %s262 = sphi 0, %s261
      %s276 = sphi 0, %s262
      %s280 = sphi 0, %s280
      %s282 = sphi 0, %s280
      %s283 = sphi 0, %s282
      %s297 = sphi 0, %s283
      %s301 = sphi 0, %s301
      %s303 = sphi 0, %s301
      %s304 = sphi 0, %s303
      %s318 = sphi 0, %s304
      %s322 = sphi 0, %s322
      %s324 = sphi 0, %s322
      %s325 = sphi 0, %s324
      %s339 = sphi 0, %s325
      %s345 = sphi 0, %s347
      %s348 = sphi 0, %s345
      %s349 = sphi 0, %s348
      %s365 = sphi 0, %s349
    $region4: #{tpu_custom_call.1} parent=1 // loop_header_branch
      %34 = sbr.rel (%p32) target = $region8
    $region5: #{tpu_custom_call.1} parent=1 // loop_body
      %s36 = ssub.s32 %s31, 1
      %s37 = ssub.s32 %s31, 2
      %s38 = sadd.s32 %s31, 1
      %s39 = ssub.s32 %s31, %s38
      %p40 = scmp.eq.s32.totalorder %s39, 0
      %s42 = sadd.s32 %s41, 1
      %s43 = scalar_select %p40, %s41, %s42
      %p46 = pneg %p40
      %p47 = scmp.eq.s32.totalorder %s31, 1
      %p48 = por %p46, %p47
      %p49 = scmp.ne.s32.totalorder %s41, %s44
      %p50 = scmp.eq.s32.totalorder %s31, 0
      %p51 = por %p49, %p50
      %p52 = scmp.ne.s32.totalorder %s41, %s44
      %p53 = scmp.eq.s32.totalorder %s36, 1
      %p54 = por %p52, %p53
      %p55 = scmp.ne.s32.totalorder %s44, %s45
      %p56 = scmp.eq.s32.totalorder %s36, 0
      %p57 = por %p55, %p56
      %p58 = scmp.ne.s32.totalorder %s44, %s45
      %p59 = scmp.eq.s32.totalorder %s37, 1
      %p60 = por %p58, %p59
      %p62 = scmp.ne.s32.totalorder %s45, %s61
      %p63 = scmp.eq.s32.totalorder %s37, 0
      %p64 = por %p62, %p63
      %s65 = ssub.s32 %s31, %s38
      %p66 = scmp.eq.s32.totalorder %s65, 0
      %s68 = sadd.s32 %s67, 1
      %s69 = scalar_select %p66, %s67, %s68
      %p72 = pneg %p66
      %p73 = scmp.eq.s32.totalorder %s31, 1
      %p74 = por %p72, %p73
      %p75 = scmp.ne.s32.totalorder %s67, %s70
      %p76 = scmp.eq.s32.totalorder %s31, 0
      %p77 = por %p75, %p76
      %p78 = scmp.ne.s32.totalorder %s67, %s70
      %p79 = scmp.eq.s32.totalorder %s36, 1
      %p80 = por %p78, %p79
      %p81 = scmp.ne.s32.totalorder %s70, %s71
      %p82 = scmp.eq.s32.totalorder %s36, 0
      %p83 = por %p81, %p82
      %p84 = scmp.ne.s32.totalorder %s70, %s71
      %p85 = scmp.eq.s32.totalorder %s37, 1
      %p86 = por %p84, %p85
      %p88 = scmp.ne.s32.totalorder %s71, %s87
      %p89 = scmp.eq.s32.totalorder %s37, 0
      %p90 = por %p88, %p89
      %s92 = sadd.s32 %s91, 1
      %p95 = scmp.eq.s32.totalorder %s31, 1
      %p96 = scmp.ne.s32.totalorder %s91, %s93
      %p97 = scmp.eq.s32.totalorder %s31, 0
      %p98 = por %p96, %p97
      %p99 = scmp.ne.s32.totalorder %s91, %s93
      %p100 = scmp.eq.s32.totalorder %s36, 1
      %p101 = por %p99, %p100
      %p102 = scmp.ne.s32.totalorder %s93, %s94
      %p103 = scmp.eq.s32.totalorder %s36, 0
      %p104 = por %p102, %p103
      %p105 = scmp.ne.s32.totalorder %s93, %s94
      %p106 = scmp.eq.s32.totalorder %s37, 1
      %p107 = por %p105, %p106
      %p109 = scmp.ne.s32.totalorder %s94, %s108
      %p110 = scmp.eq.s32.totalorder %s37, 0
      %p111 = por %p109, %p110
      %s113 = sadd.s32 %s112, 1
      %p116 = scmp.eq.s32.totalorder %s31, 1
      %p117 = scmp.ne.s32.totalorder %s112, %s114
      %p118 = scmp.eq.s32.totalorder %s31, 0
      %p119 = por %p117, %p118
      %p120 = scmp.ne.s32.totalorder %s112, %s114
      %p121 = scmp.eq.s32.totalorder %s36, 1
      %p122 = por %p120, %p121
      %p123 = scmp.ne.s32.totalorder %s114, %s115
      %p124 = scmp.eq.s32.totalorder %s36, 0
      %p125 = por %p123, %p124
      %p126 = scmp.ne.s32.totalorder %s114, %s115
      %p127 = scmp.eq.s32.totalorder %s37, 1
      %p128 = por %p126, %p127
      %p130 = scmp.ne.s32.totalorder %s115, %s129
      %p131 = scmp.eq.s32.totalorder %s37, 0
      %p132 = por %p130, %p131
      %s134 = sadd.s32 %s133, 1
      %p137 = scmp.eq.s32.totalorder %s31, 1
      %p138 = scmp.ne.s32.totalorder %s133, %s135
      %p139 = scmp.eq.s32.totalorder %s31, 0
      %p140 = por %p138, %p139
      %p141 = scmp.ne.s32.totalorder %s133, %s135
      %p142 = scmp.eq.s32.totalorder %s36, 1
      %p143 = por %p141, %p142
      %p144 = scmp.ne.s32.totalorder %s135, %s136
      %p145 = scmp.eq.s32.totalorder %s36, 0
      %p146 = por %p144, %p145
      %p147 = scmp.ne.s32.totalorder %s135, %s136
      %p148 = scmp.eq.s32.totalorder %s37, 1
      %p149 = por %p147, %p148
      %p151 = scmp.ne.s32.totalorder %s136, %s150
      %p152 = scmp.eq.s32.totalorder %s37, 0
      %p153 = por %p151, %p152
      %s155 = sadd.s32 %s154, 1
      %p158 = scmp.eq.s32.totalorder %s31, 1
      %p159 = scmp.ne.s32.totalorder %s154, %s156
      %p160 = scmp.eq.s32.totalorder %s31, 0
      %p161 = por %p159, %p160
      %p162 = scmp.ne.s32.totalorder %s154, %s156
      %p163 = scmp.eq.s32.totalorder %s36, 1
      %p164 = por %p162, %p163
      %p165 = scmp.ne.s32.totalorder %s156, %s157
      %p166 = scmp.eq.s32.totalorder %s36, 0
      %p167 = por %p165, %p166
      %p168 = scmp.ne.s32.totalorder %s156, %s157
      %p169 = scmp.eq.s32.totalorder %s37, 1
      %p170 = por %p168, %p169
      %p172 = scmp.ne.s32.totalorder %s157, %s171
      %p173 = scmp.eq.s32.totalorder %s37, 0
      %p174 = por %p172, %p173
      %s176 = sadd.s32 %s175, 1
      %p179 = scmp.eq.s32.totalorder %s31, 1
      %p180 = scmp.ne.s32.totalorder %s175, %s177
      %p181 = scmp.eq.s32.totalorder %s31, 0
      %p182 = por %p180, %p181
      %p183 = scmp.ne.s32.totalorder %s175, %s177
      %p184 = scmp.eq.s32.totalorder %s36, 1
      %p185 = por %p183, %p184
      %p186 = scmp.ne.s32.totalorder %s177, %s178
      %p187 = scmp.eq.s32.totalorder %s36, 0
      %p188 = por %p186, %p187
      %p189 = scmp.ne.s32.totalorder %s177, %s178
      %p190 = scmp.eq.s32.totalorder %s37, 1
      %p191 = por %p189, %p190
      %p193 = scmp.ne.s32.totalorder %s178, %s192
      %p194 = scmp.eq.s32.totalorder %s37, 0
      %p195 = por %p193, %p194
      %s197 = sadd.s32 %s196, 1
      %p200 = scmp.eq.s32.totalorder %s31, 1
      %p201 = scmp.ne.s32.totalorder %s196, %s198
      %p202 = scmp.eq.s32.totalorder %s31, 0
      %p203 = por %p201, %p202
      %p204 = scmp.ne.s32.totalorder %s196, %s198
      %p205 = scmp.eq.s32.totalorder %s36, 1
      %p206 = por %p204, %p205
      %p207 = scmp.ne.s32.totalorder %s198, %s199
      %p208 = scmp.eq.s32.totalorder %s36, 0
      %p209 = por %p207, %p208
      %p210 = scmp.ne.s32.totalorder %s198, %s199
      %p211 = scmp.eq.s32.totalorder %s37, 1
      %p212 = por %p210, %p211
      %p214 = scmp.ne.s32.totalorder %s199, %s213
      %p215 = scmp.eq.s32.totalorder %s37, 0
      %p216 = por %p214, %p215
      %s218 = sadd.s32 %s217, 1
      %p221 = scmp.eq.s32.totalorder %s31, 1
      %p222 = scmp.ne.s32.totalorder %s217, %s219
      %p223 = scmp.eq.s32.totalorder %s31, 0
      %p224 = por %p222, %p223
      %p225 = scmp.ne.s32.totalorder %s217, %s219
      %p226 = scmp.eq.s32.totalorder %s36, 1
      %p227 = por %p225, %p226
      %p228 = scmp.ne.s32.totalorder %s219, %s220
      %p229 = scmp.eq.s32.totalorder %s36, 0
      %p230 = por %p228, %p229
      %p231 = scmp.ne.s32.totalorder %s219, %s220
      %p232 = scmp.eq.s32.totalorder %s37, 1
      %p233 = por %p231, %p232
      %p235 = scmp.ne.s32.totalorder %s220, %s234
      %p236 = scmp.eq.s32.totalorder %s37, 0
      %p237 = por %p235, %p236
      %s239 = sadd.s32 %s238, 1
      %p242 = scmp.eq.s32.totalorder %s31, 1
      %p243 = scmp.ne.s32.totalorder %s238, %s240
      %p244 = scmp.eq.s32.totalorder %s31, 0
      %p245 = por %p243, %p244
      %p246 = scmp.ne.s32.totalorder %s238, %s240
      %p247 = scmp.eq.s32.totalorder %s36, 1
      %p248 = por %p246, %p247
      %p249 = scmp.ne.s32.totalorder %s240, %s241
      %p250 = scmp.eq.s32.totalorder %s36, 0
      %p251 = por %p249, %p250
      %p252 = scmp.ne.s32.totalorder %s240, %s241
      %p253 = scmp.eq.s32.totalorder %s37, 1
      %p254 = por %p252, %p253
      %p256 = scmp.ne.s32.totalorder %s241, %s255
      %p257 = scmp.eq.s32.totalorder %s37, 0
      %p258 = por %p256, %p257
      %s260 = sadd.s32 %s259, 1
      %p263 = scmp.eq.s32.totalorder %s31, 1
      %p264 = scmp.ne.s32.totalorder %s259, %s261
      %p265 = scmp.eq.s32.totalorder %s31, 0
      %p266 = por %p264, %p265
      %p267 = scmp.ne.s32.totalorder %s259, %s261
      %p268 = scmp.eq.s32.totalorder %s36, 1
      %p269 = por %p267, %p268
      %p270 = scmp.ne.s32.totalorder %s261, %s262
      %p271 = scmp.eq.s32.totalorder %s36, 0
      %p272 = por %p270, %p271
      %p273 = scmp.ne.s32.totalorder %s261, %s262
      %p274 = scmp.eq.s32.totalorder %s37, 1
      %p275 = por %p273, %p274
      %p277 = scmp.ne.s32.totalorder %s262, %s276
      %p278 = scmp.eq.s32.totalorder %s37, 0
      %p279 = por %p277, %p278
      %s281 = sadd.s32 %s280, 1
      %p284 = scmp.eq.s32.totalorder %s31, 1
      %p285 = scmp.ne.s32.totalorder %s280, %s282
      %p286 = scmp.eq.s32.totalorder %s31, 0
      %p287 = por %p285, %p286
      %p288 = scmp.ne.s32.totalorder %s280, %s282
      %p289 = scmp.eq.s32.totalorder %s36, 1
      %p290 = por %p288, %p289
      %p291 = scmp.ne.s32.totalorder %s282, %s283
      %p292 = scmp.eq.s32.totalorder %s36, 0
      %p293 = por %p291, %p292
      %p294 = scmp.ne.s32.totalorder %s282, %s283
      %p295 = scmp.eq.s32.totalorder %s37, 1
      %p296 = por %p294, %p295
      %p298 = scmp.ne.s32.totalorder %s283, %s297
      %p299 = scmp.eq.s32.totalorder %s37, 0
      %p300 = por %p298, %p299
      %s302 = sadd.s32 %s301, 1
      %p305 = scmp.eq.s32.totalorder %s31, 1
      %p306 = scmp.ne.s32.totalorder %s301, %s303
      %p307 = scmp.eq.s32.totalorder %s31, 0
      %p308 = por %p306, %p307
      %p309 = scmp.ne.s32.totalorder %s301, %s303
      %p310 = scmp.eq.s32.totalorder %s36, 1
      %p311 = por %p309, %p310
      %p312 = scmp.ne.s32.totalorder %s303, %s304
      %p313 = scmp.eq.s32.totalorder %s36, 0
      %p314 = por %p312, %p313
      %p315 = scmp.ne.s32.totalorder %s303, %s304
      %p316 = scmp.eq.s32.totalorder %s37, 1
      %p317 = por %p315, %p316
      %p319 = scmp.ne.s32.totalorder %s304, %s318
      %p320 = scmp.eq.s32.totalorder %s37, 0
      %p321 = por %p319, %p320
      %s323 = sadd.s32 %s322, 1
      %p326 = scmp.eq.s32.totalorder %s31, 1
      %p327 = scmp.ne.s32.totalorder %s322, %s324
      %p328 = scmp.eq.s32.totalorder %s31, 0
      %p329 = por %p327, %p328
      %p330 = scmp.ne.s32.totalorder %s322, %s324
      %p331 = scmp.eq.s32.totalorder %s36, 1
      %p332 = por %p330, %p331
      %p333 = scmp.ne.s32.totalorder %s324, %s325
      %p334 = scmp.eq.s32.totalorder %s36, 0
      %p335 = por %p333, %p334
      %p336 = scmp.ne.s32.totalorder %s324, %s325
      %p337 = scmp.eq.s32.totalorder %s37, 1
      %p338 = por %p336, %p337
      %p340 = scmp.ne.s32.totalorder %s325, %s339
      %p341 = scmp.eq.s32.totalorder %s37, 0
      %p342 = por %p340, %p341
      %s343 = ssub.s32 %s31, %s38
      %p344 = scmp.eq.s32.totalorder %s343, 0
      %s346 = sadd.s32 %s345, 1
      %s347 = scalar_select %p344, %s345, %s346
      %p350 = pneg %p344
      %p351 = scmp.eq.s32.totalorder %s31, 1
      %p352 = por %p350, %p351
      %p353 = scmp.ne.s32.totalorder %s345, %s348
      %p354 = scmp.eq.s32.totalorder %s31, 0
      %p355 = por %p353, %p354
      %p356 = scmp.ne.s32.totalorder %s345, %s348
      %p357 = scmp.eq.s32.totalorder %s36, 1
      %p358 = por %p356, %p357
      %p359 = scmp.ne.s32.totalorder %s348, %s349
      %p360 = scmp.eq.s32.totalorder %s36, 0
      %p361 = por %p359, %p360
      %p362 = scmp.ne.s32.totalorder %s348, %s349
      %p363 = scmp.eq.s32.totalorder %s37, 1
      %p364 = por %p362, %p363
      %p366 = scmp.ne.s32.totalorder %s349, %s365
      %p367 = scmp.eq.s32.totalorder %s37, 0
      %p368 = por %p366, %p367
      %p369 = scmp.le.s32.totalorder 1, %s31
      %p370 = scmp.lt.s32.totalorder %s31, 3
      %p371 = pnand %p369, %p370
      %p372 = pneg %p371
      // Predicated region
      $region9: #{tpu_custom_call.1} parent=5 // pred_check
        _
      $region10: #{tpu_custom_call.1} parent=5 // pred_check_branch
        %374 = sbr.rel (%p371) target = $region12
      $region11: #{tpu_custom_call.1} parent=5 // pred_region
        %s375 = ssub.s32 %s31, 1
        // Predicated region
        $region13: #{tpu_custom_call.1} parent=11 // pred_check
          %p376 = pneg %p104
        $region14: #{tpu_custom_call.1} parent=11 // pred_check_branch
          %378 = sbr.rel (%p376) target = $region16
        $region15: #{tpu_custom_call.1} parent=11 // pred_region
          %s380 = ssub.s32 3072, 3072
          %381 = vsyncadd [#allocation6], %s380
          %s382 = sshll.u32 [#allocation7], 4
          %s383 = int_to_ptr.vmem [resolvable:$true] %s382
          %388 = dma.hbm_to_vmem [thread:$0]  %s2, 3072, %s383, [#allocation6], 192, 192, 12
        $region16: #{tpu_custom_call.1} parent=11 // pred_fallthru
          _
        // Predicated region
        $region17: #{tpu_custom_call.1} parent=11 // pred_check
          %p389 = pneg %p125
        $region18: #{tpu_custom_call.1} parent=11 // pred_check_branch
          %391 = sbr.rel (%p389) target = $region20
        $region19: #{tpu_custom_call.1} parent=11 // pred_region
          _
        $region20: #{tpu_custom_call.1} parent=11 // pred_fallthru
          _
        // Predicated region
        $region21: #{tpu_custom_call.1} parent=11 // pred_check
          %p392 = pneg %p146
        $region22: #{tpu_custom_call.1} parent=11 // pred_check_branch
          %394 = sbr.rel (%p392) target = $region24
        $region23: #{tpu_custom_call.1} parent=11 // pred_region
          %s396 = ssub.s32 1024, 1024
          %397 = vsyncadd [#allocation9], %s396
          %s398 = sshll.u32 [#allocation8], 4
          %s399 = int_to_ptr.vmem [resolvable:$true] %s398
          %404 = dma.hbm_to_vmem [thread:$0]  %s4, 1024, %s399, [#allocation9], 64, 64, 4
        $region24: #{tpu_custom_call.1} parent=11 // pred_fallthru
          _
        // Predicated region
        $region25: #{tpu_custom_call.1} parent=11 // pred_check
          %p405 = pneg %p167
        $region26: #{tpu_custom_call.1} parent=11 // pred_check_branch
          %407 = sbr.rel (%p405) target = $region28
        $region27: #{tpu_custom_call.1} parent=11 // pred_region
          _
        $region28: #{tpu_custom_call.1} parent=11 // pred_fallthru
          _
        // Predicated region
        $region29: #{tpu_custom_call.1} parent=11 // pred_check
          %p408 = pneg %p188
        $region30: #{tpu_custom_call.1} parent=11 // pred_check_branch
          %410 = sbr.rel (%p408) target = $region32
        $region31: #{tpu_custom_call.1} parent=11 // pred_region
          _
        $region32: #{tpu_custom_call.1} parent=11 // pred_fallthru
          _
        // Predicated region
        $region33: #{tpu_custom_call.1} parent=11 // pred_check
          %p411 = pneg %p209
        $region34: #{tpu_custom_call.1} parent=11 // pred_check_branch
          %413 = sbr.rel (%p411) target = $region36
        $region35: #{tpu_custom_call.1} parent=11 // pred_region
          _
        $region36: #{tpu_custom_call.1} parent=11 // pred_fallthru
          _
        // Predicated region
        $region37: #{tpu_custom_call.1} parent=11 // pred_check
          %p414 = pneg %p230
        $region38: #{tpu_custom_call.1} parent=11 // pred_check_branch
          %416 = sbr.rel (%p414) target = $region40
        $region39: #{tpu_custom_call.1} parent=11 // pred_region
          _
        $region40: #{tpu_custom_call.1} parent=11 // pred_fallthru
          _
        // Predicated region
        $region41: #{tpu_custom_call.1} parent=11 // pred_check
          %p417 = pneg %p251
        $region42: #{tpu_custom_call.1} parent=11 // pred_check_branch
          %419 = sbr.rel (%p417) target = $region44
        $region43: #{tpu_custom_call.1} parent=11 // pred_region
          _
        $region44: #{tpu_custom_call.1} parent=11 // pred_fallthru
          _
        // Predicated region
        $region45: #{tpu_custom_call.1} parent=11 // pred_check
          %p420 = pneg %p272
        $region46: #{tpu_custom_call.1} parent=11 // pred_check_branch
          %422 = sbr.rel (%p420) target = $region48
        $region47: #{tpu_custom_call.1} parent=11 // pred_region
          %s424 = ssub.s32 8192, 8192
          %425 = vsyncadd [#allocation9], %s424
          %s426 = sshll.u32 [#allocation10], 4
          %s427 = int_to_ptr.vmem [resolvable:$true] %s426
          %432 = dma.hbm_to_vmem [thread:$0]  %s10, 8192, %s427, [#allocation9], 512, 512, 32
        $region48: #{tpu_custom_call.1} parent=11 // pred_fallthru
          _
        // Predicated region
        $region49: #{tpu_custom_call.1} parent=11 // pred_check
          %p433 = pneg %p293
        $region50: #{tpu_custom_call.1} parent=11 // pred_check_branch
          %435 = sbr.rel (%p433) target = $region52
        $region51: #{tpu_custom_call.1} parent=11 // pred_region
          _
        $region52: #{tpu_custom_call.1} parent=11 // pred_fallthru
          _
        // Predicated region
        $region53: #{tpu_custom_call.1} parent=11 // pred_check
          %p436 = pneg %p314
        $region54: #{tpu_custom_call.1} parent=11 // pred_check_branch
          %438 = sbr.rel (%p436) target = $region56
        $region55: #{tpu_custom_call.1} parent=11 // pred_region
          %s440 = ssub.s32 8192, 8192
          %441 = vsyncadd [#allocation12], %s440
          %s442 = sshll.u32 [#allocation11], 4
          %s443 = int_to_ptr.vmem [resolvable:$true] %s442
          %448 = dma.hbm_to_vmem [thread:$0]  %s12, 8192, %s443, [#allocation12], 64, 64, 4
        $region56: #{tpu_custom_call.1} parent=11 // pred_fallthru
          _
        // Predicated region
        $region57: #{tpu_custom_call.1} parent=11 // pred_check
          %p449 = pneg %p335
        $region58: #{tpu_custom_call.1} parent=11 // pred_check_branch
          %451 = sbr.rel (%p449) target = $region60
        $region59: #{tpu_custom_call.1} parent=11 // pred_region
          _
        $region60: #{tpu_custom_call.1} parent=11 // pred_fallthru
          _
      $region12: #{tpu_custom_call.1} parent=5 // pred_fallthru
        _
      %p452 = scmp.lt.s32.totalorder %s31, 2
      // Predicated region
      $region61: #{tpu_custom_call.1} parent=5 // pred_check
        %p453 = pneg %p452
      $region62: #{tpu_custom_call.1} parent=5 // pred_check_branch
        %455 = sbr.rel (%p453) target = $region64
      $region63: #{tpu_custom_call.1} parent=5 // pred_region
        // Predicated region
        $region65: #{tpu_custom_call.1} parent=63 // pred_check
          %p456 = pneg %p51
        $region66: #{tpu_custom_call.1} parent=63 // pred_check_branch
          %458 = sbr.rel (%p456) target = $region68
        $region67: #{tpu_custom_call.1} parent=63 // pred_region
          %s459 = sand.u32 %s41, 1
          %s460 = scalar_lea.sflag [#allocation3], %s459
          %s461 = sand.u32 %s41, 1
          %s462 = smul.addr %s461, 8
          %s463 = scalar_lea.vmem [#allocation2], %s462
          %s465 = ssub.s32 128, 128
          %466 = vsyncadd %s460, %s465
          %s467 = smul.addr %s31, 128
          %s468 = scalar_lea.hbm %s0, %s467
          %s470 = sshll.u32 %s463, 4
          %s471 = int_to_ptr.vmem [resolvable:$true] %s470
          %473 = dma.hbm_to_vmem [thread:$0]  %s468, 128, %s471, %s460
        $region68: #{tpu_custom_call.1} parent=63 // pred_fallthru
          _
        // Predicated region
        $region69: #{tpu_custom_call.1} parent=63 // pred_check
          %p474 = pneg %p77
        $region70: #{tpu_custom_call.1} parent=63 // pred_check_branch
          %476 = sbr.rel (%p474) target = $region72
        $region71: #{tpu_custom_call.1} parent=63 // pred_region
          %s477 = sand.u32 %s31, 1
          %s478 = scalar_lea.sflag [#allocation6], %s477
          %s479 = sand.u32 %s67, 1
          %s480 = scalar_lea.vmem [#allocation5], %s479
          %s482 = ssub.s32 16, 16
          %483 = vsyncadd %s478, %s482
          %s484 = smul.addr %s31, 16
          %s485 = scalar_lea.hbm %s1, %s484
          %s487 = sshll.u32 %s480, 4
          %s488 = int_to_ptr.vmem [resolvable:$true] %s487
          %490 = dma.hbm_to_vmem [thread:$0]  %s485, 16, %s488, %s478
        $region72: #{tpu_custom_call.1} parent=63 // pred_fallthru
          _
      $region64: #{tpu_custom_call.1} parent=5 // pred_fallthru
        _
      %p491 = scmp.le.s32.totalorder 1, %s31
      %p492 = scmp.lt.s32.totalorder %s31, 3
      %p493 = pnand %p491, %p492
      %p494 = pneg %p493
      // Predicated region
      $region73: #{tpu_custom_call.1} parent=5 // pred_check
        _
      $region74: #{tpu_custom_call.1} parent=5 // pred_check_branch
        %496 = sbr.rel (%p493) target = $region76
      $region75: #{tpu_custom_call.1} parent=5 // pred_region
        %s497 = ssub.s32 %s31, 1
        %s498 = sand.u32 %s44, 1
        %s499 = scalar_lea.sflag [#allocation3], %s498
        %s500 = sand.u32 %s44, 1
        %s501 = smul.addr %s500, 8
        %s502 = scalar_lea.vmem [#allocation2], %s501
        // Predicated region
        $region77: #{tpu_custom_call.1} parent=75 // pred_check
          %p503 = pneg %p57
        $region78: #{tpu_custom_call.1} parent=75 // pred_check_branch
          %505 = sbr.rel (%p503) target = $region80
        $region79: #{tpu_custom_call.1} parent=75 // pred_region
          %506 = dma.done %s499, 128
        $region80: #{tpu_custom_call.1} parent=75 // pred_fallthru
          _
        %s507 = sand.u32 %s36, 1
        %s508 = scalar_lea.sflag [#allocation6], %s507
        %s509 = sand.u32 %s70, 1
        %s510 = scalar_lea.vmem [#allocation5], %s509
        // Predicated region
        $region81: #{tpu_custom_call.1} parent=75 // pred_check
          %p511 = pneg %p83
        $region82: #{tpu_custom_call.1} parent=75 // pred_check_branch
          %513 = sbr.rel (%p511) target = $region84
        $region83: #{tpu_custom_call.1} parent=75 // pred_region
          %514 = dma.done %s508, 16
        $region84: #{tpu_custom_call.1} parent=75 // pred_fallthru
          _
        // Predicated region
        $region85: #{tpu_custom_call.1} parent=75 // pred_check
          %p515 = pneg %p104
        $region86: #{tpu_custom_call.1} parent=75 // pred_check_branch
          %517 = sbr.rel (%p515) target = $region88
        $region87: #{tpu_custom_call.1} parent=75 // pred_region
          %518 = dma.done [#allocation6], 3072
        $region88: #{tpu_custom_call.1} parent=75 // pred_fallthru
          _
        // Predicated region
        $region89: #{tpu_custom_call.1} parent=75 // pred_check
          %p519 = pneg %p146
        $region90: #{tpu_custom_call.1} parent=75 // pred_check_branch
          %521 = sbr.rel (%p519) target = $region92
        $region91: #{tpu_custom_call.1} parent=75 // pred_region
          %522 = dma.done [#allocation9], 1024
        $region92: #{tpu_custom_call.1} parent=75 // pred_fallthru
          _
        // Predicated region
        $region93: #{tpu_custom_call.1} parent=75 // pred_check
          %p523 = pneg %p272
        $region94: #{tpu_custom_call.1} parent=75 // pred_check_branch
          %525 = sbr.rel (%p523) target = $region96
        $region95: #{tpu_custom_call.1} parent=75 // pred_region
          %526 = dma.done [#allocation9], 8192
        $region96: #{tpu_custom_call.1} parent=75 // pred_fallthru
          _
        // Predicated region
        $region97: #{tpu_custom_call.1} parent=75 // pred_check
          %p527 = pneg %p314
        $region98: #{tpu_custom_call.1} parent=75 // pred_check_branch
          %529 = sbr.rel (%p527) target = $region100
        $region99: #{tpu_custom_call.1} parent=75 // pred_region
          %530 = dma.done [#allocation12], 8192
        $region100: #{tpu_custom_call.1} parent=75 // pred_fallthru
          _
        %s531 = sand.u32 %s44, 1
        %s532 = scalar_lea.sflag [#allocation3], %s531
        %s533 = sand.u32 %s44, 1
        %s534 = smul.addr %s533, 8
        %s535 = scalar_lea.vmem [#allocation2], %s534
        %p536 = pneg %p57
        %p537 = pneg %p54
        %s538 = sand.u32 %s36, 1
        %s539 = scalar_lea.sflag [#allocation6], %s538
        %s540 = sand.u32 %s70, 1
        %s541 = scalar_lea.vmem [#allocation5], %s540
        %p542 = pneg %p83
        %p543 = pneg %p80
        %p544 = pneg %p104
        %p545 = pneg %p101
        %p546 = pneg %p125
        %p547 = pneg %p122
        %p548 = pneg %p146
        %p549 = pneg %p143
        %p550 = pneg %p167
        %p551 = pneg %p164
        %p552 = pneg %p188
        %p553 = pneg %p185
        %p554 = pneg %p209
        %p555 = pneg %p206
        %p556 = pneg %p230
        %p557 = pneg %p227
        %p558 = pneg %p251
        %p559 = pneg %p248
        %p560 = pneg %p272
        %p561 = pneg %p269
        %p562 = pneg %p293
        %p563 = pneg %p290
        %p564 = pneg %p314
        %p565 = pneg %p311
        %p566 = pneg %p335
        %p567 = pneg %p332
        %p568 = pneg %p361
        %p569 = pneg %p358
        %s570 = sand.u32 %s348, 1
        %s571 = scalar_lea.sflag [#allocation4], %s570
        %s572 = sand.u32 %s348, 1
        %s573 = smul.addr %s572, 8
        %s574 = scalar_lea.vmem [#allocation13], %s573
        %v576 = vld [vmem:[%s502] sm:$0xff]
        %v577 = vpack.c.bf16 %v576, %v576
        %v578 = vld [vmem:[#allocation7] sm:$0xff]
        %v579 = vld [vmem:[#allocation7 + $0x8] sm:$0xf]
        %v580 = vld [vmem:[#allocation7 + $0xc] sm:$0xff]
        %v581 = vld [vmem:[#allocation7 + $0x14] sm:$0xf]
        %v582 = vld [vmem:[#allocation7 + $0x18] sm:$0xff]
        %v583 = vld [vmem:[#allocation7 + $0x20] sm:$0xf]
        %v584 = vld [vmem:[#allocation7 + $0x24] sm:$0xff]
        %v585 = vld [vmem:[#allocation7 + $0x2c] sm:$0xf]
        %v586 = vld [vmem:[#allocation7 + $0x30] sm:$0xff]
        %v587 = vld [vmem:[#allocation7 + $0x38] sm:$0xf]
        %v588 = vld [vmem:[#allocation7 + $0x3c] sm:$0xff]
        %v589 = vld [vmem:[#allocation7 + $0x44] sm:$0xf]
        %v590 = vld [vmem:[#allocation7 + $0x48] sm:$0xff]
        %v591 = vld [vmem:[#allocation7 + $0x50] sm:$0xf]
        %v592 = vld [vmem:[#allocation7 + $0x54] sm:$0xff]
        %v593 = vld [vmem:[#allocation7 + $0x5c] sm:$0xf]
        %v594 = vld [vmem:[#allocation7 + $0x60] sm:$0xff]
        %v595 = vld [vmem:[#allocation7 + $0x68] sm:$0xf]
        %v596 = vld [vmem:[#allocation7 + $0x6c] sm:$0xff]
        %v597 = vld [vmem:[#allocation7 + $0x74] sm:$0xf]
        %v598 = vld [vmem:[#allocation7 + $0x78] sm:$0xff]
        %v599 = vld [vmem:[#allocation7 + $0x80] sm:$0xf]
        %v600 = vld [vmem:[#allocation7 + $0x84] sm:$0xff]
        %v601 = vld [vmem:[#allocation7 + $0x8c] sm:$0xf]
        %v602 = vld [vmem:[#allocation7 + $0x90] sm:$0xff]
        %v603 = vld [vmem:[#allocation7 + $0x98] sm:$0xf]
        %v604 = vld [vmem:[#allocation7 + $0x9c] sm:$0xff]
        %v605 = vld [vmem:[#allocation7 + $0xa4] sm:$0xf]
        %v606 = vld [vmem:[#allocation7 + $0xa8] sm:$0xff]
        %v607 = vld [vmem:[#allocation7 + $0xb0] sm:$0xf]
        %v608 = vld [vmem:[#allocation7 + $0xb4] sm:$0xff]
        %v609 = vld [vmem:[#allocation7 + $0xbc] sm:$0xf]
        %v610 = vld [vmem:[%s3] sm:$0x7]
        %v612 = vlaneseq
        %v613 = vshrl.u32 %v612, 7
        %v614 = vsub.s32 0, %v613
        %v615 = vrot.slane %v610, %v614
        %v616 = vlaneseq
        %v617 = vshrl.u32 %v616, 7
        %v618 = vsub.s32 1, %v617
        %v619 = vrot.slane %v610, %v618
        %v620 = vlaneseq
        %v621 = vshrl.u32 %v620, 7
        %v622 = vsub.s32 2, %v621
        %v623 = vrot.slane %v610, %v622
        %v659 = vunpack.c.l.b16 %v578
        %v660 = vunpack.c.h.b16 %v578
        %v661 = vunpack.c.l.b16 %v579
        %v662 = vunpack.c.l.b16 %v580
        %v663 = vunpack.c.h.b16 %v580
        %v664 = vunpack.c.l.b16 %v581
        %v665 = vunpack.c.l.b16 %v582
        %v666 = vunpack.c.h.b16 %v582
        %v667 = vunpack.c.l.b16 %v583
        %v668 = vunpack.c.l.b16 %v584
        %v669 = vunpack.c.h.b16 %v584
        %v670 = vunpack.c.l.b16 %v585
        %v671 = vunpack.c.l.b16 %v586
        %v672 = vunpack.c.h.b16 %v586
        %v673 = vunpack.c.l.b16 %v587
        %v674 = vunpack.c.l.b16 %v588
        %v675 = vunpack.c.h.b16 %v588
        %v676 = vunpack.c.l.b16 %v589
        %v677 = vunpack.c.l.b16 %v590
        %v678 = vunpack.c.h.b16 %v590
        %v679 = vunpack.c.l.b16 %v591
        %v680 = vunpack.c.l.b16 %v592
        %v681 = vunpack.c.h.b16 %v592
        %v682 = vunpack.c.l.b16 %v593
        %v683 = vunpack.c.l.b16 %v594
        %v684 = vunpack.c.h.b16 %v594
        %v685 = vunpack.c.l.b16 %v595
        %v686 = vunpack.c.l.b16 %v596
        %v687 = vunpack.c.h.b16 %v596
        %v688 = vunpack.c.l.b16 %v597
        %v689 = vunpack.c.l.b16 %v598
        %v690 = vunpack.c.h.b16 %v598
        %v691 = vunpack.c.l.b16 %v599
        %v692 = vunpack.c.l.b16 %v600
        %v693 = vunpack.c.h.b16 %v600
        %v694 = vunpack.c.l.b16 %v601
        %v695 = vunpack.c.l.b16 %v602
        %v696 = vunpack.c.h.b16 %v602
        %v697 = vunpack.c.l.b16 %v603
        %v698 = vunpack.c.l.b16 %v604
        %v699 = vunpack.c.h.b16 %v604
        %v700 = vunpack.c.l.b16 %v605
        %v701 = vunpack.c.l.b16 %v606
        %v702 = vunpack.c.h.b16 %v606
        %v703 = vunpack.c.l.b16 %v607
        %v704 = vunpack.c.l.b16 %v608
        %v705 = vunpack.c.h.b16 %v608
        %v706 = vunpack.c.l.b16 %v609
        %v707 = vpack.c.b16 %v662, %v659
        %v708 = vpack.c.b16 %v663, %v660
        %v709 = vpack.c.b16 %v664, %v661
        %v710 = vpack.c.b16 %v668, %v665
        %v711 = vpack.c.b16 %v669, %v666
        %v712 = vpack.c.b16 %v670, %v667
        %v713 = vpack.c.b16 %v674, %v671
        %v714 = vpack.c.b16 %v675, %v672
        %v715 = vpack.c.b16 %v676, %v673
        %v716 = vpack.c.b16 %v680, %v677
        %v717 = vpack.c.b16 %v681, %v678
        %v718 = vpack.c.b16 %v682, %v679
        %v719 = vpack.c.b16 %v686, %v683
        %v720 = vpack.c.b16 %v687, %v684
        %v721 = vpack.c.b16 %v688, %v685
        %v722 = vpack.c.b16 %v692, %v689
        %v723 = vpack.c.b16 %v693, %v690
        %v724 = vpack.c.b16 %v694, %v691
        %v725 = vpack.c.b16 %v698, %v695
        %v726 = vpack.c.b16 %v699, %v696
        %v727 = vpack.c.b16 %v700, %v697
        %v728 = vpack.c.b16 %v704, %v701
        %v729 = vpack.c.b16 %v705, %v702
        %v730 = vpack.c.b16 %v706, %v703
        %755 = vmatprep.subr.bf16.mxu0 %v729
        %756 = vmatpush1.bf16.msra.mxu0 %v728
        %757 = vmatprep.subr.bf16.mxu0 %v726
        %758 = vmatpush1.bf16.msra.mxu0 %v725
        %759 = vmatprep.subr.bf16.mxu0 %v723
        %760 = vmatpush1.bf16.msra.mxu0 %v722
        %761 = vmatprep.subr.bf16.mxu0 %v720
        %762 = vmatpush1.bf16.msra.mxu0 %v719
        %763 = vmatprep.subr.bf16.mxu0 %v717
        %764 = vmatpush1.bf16.msra.mxu0 %v716
        %765 = vmatprep.subr.bf16.mxu0 %v714
        %766 = vmatpush1.bf16.msra.mxu0 %v713
        %767 = vmatprep.subr.bf16.mxu0 %v711
        %768 = vmatpush1.bf16.msra.mxu0 %v710
        %769 = vmatprep.subr.bf16.mxu0 %v708
        %770 = vmatpush1.bf16.msra.mxu0 %v707
        %771 = vmatprep.subr.bf16.mxu0 0
        %772 = vmatpush2.bf16.msra.mxu0 0
        %773 = vmatprep.subr.bf16.mxu0 0
        %774 = vmatpush2.bf16.msra.mxu0 0
        %775 = vmatprep.subr.bf16.mxu0 0
        %776 = vmatpush2.bf16.msra.mxu0 0
        %777 = vmatprep.subr.bf16.mxu0 0
        %778 = vmatpush2.bf16.msra.mxu0 0
        %779 = vmatprep.subr.bf16.mxu0 0
        %780 = vmatpush2.bf16.msra.mxu0 0
        %781 = vmatprep.subr.bf16.mxu0 0
        %782 = vmatpush2.bf16.msra.mxu0 0
        %783 = vmatprep.subr.bf16.mxu0 0
        %784 = vmatpush2.bf16.msra.mxu0 0
        %785 = vmatprep.subr.bf16.mxu0 0
        %786 = vmatpush2.bf16.msra.mxu0 0
        %787 = vmatprep.mubr.bf16.mxu0 0
        %788 = vmatmul.mubr.bf16.gmra.mxu0 %v577
        %v789 = vpop.f32.mrf.mxu0
        %v790 = vadd.f32 %v615, %v789
        %v791 = vpop.f32.mrf.mxu0
        %v792 = vadd.f32 %v619, %v791
        %v793 = vpop.f32.mrf.mxu0
        %v794 = vpop.f32.mrf.mxu0
        %795 = vdwg.mxu0
        %796 = vmatprep.subr.bf16.mxu0 0
        %797 = vmatpush1.bf16.msra.mxu0 %v730
        %798 = vmatprep.subr.bf16.mxu0 0
        %799 = vmatpush1.bf16.msra.mxu0 %v727
        %800 = vmatprep.subr.bf16.mxu0 0
        %801 = vmatpush1.bf16.msra.mxu0 %v724
        %802 = vmatprep.subr.bf16.mxu0 0
        %803 = vmatpush1.bf16.msra.mxu0 %v721
        %804 = vmatprep.subr.bf16.mxu0 0
        %805 = vmatpush1.bf16.msra.mxu0 %v718
        %806 = vmatprep.subr.bf16.mxu0 0
        %807 = vmatpush1.bf16.msra.mxu0 %v715
        %808 = vmatprep.subr.bf16.mxu0 0
        %809 = vmatpush1.bf16.msra.mxu0 %v712
        %810 = vmatprep.subr.bf16.mxu0 0
        %811 = vmatpush1.bf16.msra.mxu0 %v709
        %812 = vmatprep.subr.bf16.mxu0 0
        %813 = vmatpush2.bf16.msra.mxu0 0
        %814 = vmatprep.subr.bf16.mxu0 0
        %815 = vmatpush2.bf16.msra.mxu0 0
        %816 = vmatprep.subr.bf16.mxu0 0
        %817 = vmatpush2.bf16.msra.mxu0 0
        %818 = vmatprep.subr.bf16.mxu0 0
        %819 = vmatpush2.bf16.msra.mxu0 0
        %820 = vmatprep.subr.bf16.mxu0 0
        %821 = vmatpush2.bf16.msra.mxu0 0
        %822 = vmatprep.subr.bf16.mxu0 0
        %823 = vmatpush2.bf16.msra.mxu0 0
        %824 = vmatprep.subr.bf16.mxu0 0
        %825 = vmatpush2.bf16.msra.mxu0 0
        %826 = vmatprep.subr.bf16.mxu0 0
        %827 = vmatpush2.bf16.msra.mxu0 0
        %828 = vmatprep.mubr.bf16.mxu0 0
        %829 = vmatmul.mubr.bf16.gmra.mxu0 %v577
        %v830 = vpop.f32.mrf.mxu0
        %v831 = vadd.f32 %v623, %v830
        %v832 = vpop.f32.mrf.mxu0
        %v833 = vpop.f32.mrf.mxu0
        %v834 = vpop.f32.mrf.mxu0
        %835 = vdwg.mxu0
        %v836 = vpack.c.bf16 %v790, %v790
        %v837 = vpack.c.bf16 %v792, %v792
        %v838 = vpack.c.bf16 %v831, %v831
        %v839 = vld [vmem:[%s510] sm:$0x1]
        %v841 = vlaneseq
        %v842 = vshrl.u32 %v841, 7
        %v843 = vsub.s32 0, %v842
        %v844 = vrot.slane %v839, %v843
        %vm846 = vcmask 130048
        %v848 = vsel %vm846, %v836, 0
        %v851 = vsel %vm846, %v837, 0
        %853 = vmatprep.subr.bf16.mxu0 0
        %854 = vmatpush1.bf16.xpose.msra.mxu0 0
        %855 = vmatprep.subr.bf16.mxu0 0
        %856 = vmatpush1.bf16.xpose.msra.mxu0 0
        %857 = vmatprep.subr.bf16.mxu0 0
        %858 = vmatpush1.bf16.xpose.msra.mxu0 0
        %859 = vmatprep.subr.bf16.mxu0 0
        %860 = vmatpush1.bf16.xpose.msra.mxu0 0
        %861 = vmatprep.subr.bf16.mxu0 0
        %862 = vmatpush1.bf16.xpose.msra.mxu0 0
        %863 = vmatprep.subr.bf16.mxu0 0
        %864 = vmatpush1.bf16.xpose.msra.mxu0 0
        %865 = vmatprep.subr.bf16.mxu0 0
        %866 = vmatpush1.bf16.xpose.msra.mxu0 0
        %867 = vmatprep.subr.bf16.mxu0 0
        %868 = vmatpush1.bf16.xpose.msra.mxu0 %v851
        %869 = vmatprep.subr.bf16.mxu0 0
        %870 = vmatpush2.bf16.xpose.msra.mxu0 0
        %871 = vmatprep.subr.bf16.mxu0 0
        %872 = vmatpush2.bf16.xpose.msra.mxu0 0
        %873 = vmatprep.subr.bf16.mxu0 0
        %874 = vmatpush2.bf16.xpose.msra.mxu0 0
        %875 = vmatprep.subr.bf16.mxu0 0
        %876 = vmatpush2.bf16.xpose.msra.mxu0 0
        %877 = vmatprep.subr.bf16.mxu0 0
        %878 = vmatpush2.bf16.xpose.msra.mxu0 0
        %879 = vmatprep.subr.bf16.mxu0 0
        %880 = vmatpush2.bf16.xpose.msra.mxu0 0
        %881 = vmatprep.subr.bf16.mxu0 0
        %882 = vmatpush2.bf16.xpose.msra.mxu0 0
        %883 = vmatprep.subr.bf16.mxu0 0
        %884 = vmatpush2.bf16.xpose.msra.mxu0 0
        %885 = vmatprep.mubr.bf16.mxu0 0
        %886 = vmatmul.mubr.bf16.gmra.mxu0 %v848
        %v887 = vpop.f32.mrf.mxu0
        %v888 = vadd.f32 %v844, %v887
        %v889 = vpop.f32.mrf.mxu0
        %v890 = vpop.f32.mrf.mxu0
        %v891 = vpop.f32.mrf.mxu0
        %892 = vdwg.mxu0
        %vm893 = vcmask 64512
        %v894 = vsel %vm893, %v888, -inf
        %895 = vmax.xlane.f32.xlu0 %v894
        %v896 = vpop.xlane.xlu0 %895
        %v897 = vsub.f32 %v888, %v896
        %v898 = vmul.f32 %v897, 1.442695
        %v899 = vpow.pop %v898
        %v900 = vsel %vm893, %v899, 0.0
        %901 = vadd.xlane.f32.xlu0 %v900
        %v902 = vpop.xlane.xlu0 %901
        %v903 = vrcp.pop %v902
        %v904 = vmul.f32 %v899, %v903
        %v905 = vpack.c.bf16 %v904, %v904
        %v907 = vsel %vm893, %v905, 0
        %vm909 = vcmask 1043456
        %v911 = vsel %vm909, %v838, 0
        %913 = vmatprep.subr.bf16.mxu0 0
        %914 = vmatpush1.bf16.msra.mxu0 0
        %915 = vmatprep.subr.bf16.mxu0 0
        %916 = vmatpush1.bf16.msra.mxu0 0
        %917 = vmatprep.subr.bf16.mxu0 0
        %918 = vmatpush1.bf16.msra.mxu0 0
        %919 = vmatprep.subr.bf16.mxu0 0
        %920 = vmatpush1.bf16.msra.mxu0 0
        %921 = vmatprep.subr.bf16.mxu0 0
        %922 = vmatpush1.bf16.msra.mxu0 0
        %923 = vmatprep.subr.bf16.mxu0 0
        %924 = vmatpush1.bf16.msra.mxu0 0
        %925 = vmatprep.subr.bf16.mxu0 0
        %926 = vmatpush1.bf16.msra.mxu0 0
        %927 = vmatprep.subr.bf16.mxu0 0
        %928 = vmatpush1.bf16.msra.mxu0 %v911
        %929 = vmatprep.subr.bf16.mxu0 0
        %930 = vmatpush2.bf16.msra.mxu0 0
        %931 = vmatprep.subr.bf16.mxu0 0
        %932 = vmatpush2.bf16.msra.mxu0 0
        %933 = vmatprep.subr.bf16.mxu0 0
        %934 = vmatpush2.bf16.msra.mxu0 0
        %935 = vmatprep.subr.bf16.mxu0 0
        %936 = vmatpush2.bf16.msra.mxu0 0
        %937 = vmatprep.subr.bf16.mxu0 0
        %938 = vmatpush2.bf16.msra.mxu0 0
        %939 = vmatprep.subr.bf16.mxu0 0
        %940 = vmatpush2.bf16.msra.mxu0 0
        %941 = vmatprep.subr.bf16.mxu0 0
        %942 = vmatpush2.bf16.msra.mxu0 0
        %943 = vmatprep.subr.bf16.mxu0 0
        %944 = vmatpush2.bf16.msra.mxu0 0
        %945 = vmatprep.mubr.bf16.mxu0 0
        %946 = vmatmul.mubr.bf16.gmra.mxu0 %v907
        %v947 = vpop.f32.mrf.mxu0
        %v948 = vadd.f32 0.0, %v947
        %v949 = vpop.f32.mrf.mxu0
        %v950 = vpop.f32.mrf.mxu0
        %v951 = vpop.f32.mrf.mxu0
        %952 = vdwg.mxu0
        %v953 = vpack.c.bf16 %v948, %v948
        %v954 = vld [vmem:[#allocation8] sm:$0xf]
        %v955 = vld [vmem:[#allocation8 + $0x4] sm:$0xf]
        %957 = vrot.lane.b32.xlu0 %v836, 112
        %v958 = vpop.permute.xlu0 %957
        %960 = vrot.lane.b32.xlu0 %v837, 112
        %v961 = vpop.permute.xlu0 %960
        %v963 = vsel %vm846, %v958, 0
        %v966 = vsel %vm846, %v961, 0
        %968 = vmatprep.subr.bf16.mxu0 0
        %969 = vmatpush1.bf16.xpose.msra.mxu0 0
        %970 = vmatprep.subr.bf16.mxu0 0
        %971 = vmatpush1.bf16.xpose.msra.mxu0 0
        %972 = vmatprep.subr.bf16.mxu0 0
        %973 = vmatpush1.bf16.xpose.msra.mxu0 0
        %974 = vmatprep.subr.bf16.mxu0 0
        %975 = vmatpush1.bf16.xpose.msra.mxu0 0
        %976 = vmatprep.subr.bf16.mxu0 0
        %977 = vmatpush1.bf16.xpose.msra.mxu0 0
        %978 = vmatprep.subr.bf16.mxu0 0
        %979 = vmatpush1.bf16.xpose.msra.mxu0 0
        %980 = vmatprep.subr.bf16.mxu0 0
        %981 = vmatpush1.bf16.xpose.msra.mxu0 0
        %982 = vmatprep.subr.bf16.mxu0 0
        %983 = vmatpush1.bf16.xpose.msra.mxu0 %v966
        %984 = vmatprep.subr.bf16.mxu0 0
        %985 = vmatpush2.bf16.xpose.msra.mxu0 0
        %986 = vmatprep.subr.bf16.mxu0 0
        %987 = vmatpush2.bf16.xpose.msra.mxu0 0
        %988 = vmatprep.subr.bf16.mxu0 0
        %989 = vmatpush2.bf16.xpose.msra.mxu0 0
        %990 = vmatprep.subr.bf16.mxu0 0
        %991 = vmatpush2.bf16.xpose.msra.mxu0 0
        %992 = vmatprep.subr.bf16.mxu0 0
        %993 = vmatpush2.bf16.xpose.msra.mxu0 0
        %994 = vmatprep.subr.bf16.mxu0 0
        %995 = vmatpush2.bf16.xpose.msra.mxu0 0
        %996 = vmatprep.subr.bf16.mxu0 0
        %997 = vmatpush2.bf16.xpose.msra.mxu0 0
        %998 = vmatprep.subr.bf16.mxu0 0
        %999 = vmatpush2.bf16.xpose.msra.mxu0 0
        %1000 = vmatprep.mubr.bf16.mxu0 0
        %1001 = vmatmul.mubr.bf16.gmra.mxu0 %v963
        %v1002 = vpop.f32.mrf.mxu0
        %v1003 = vadd.f32 %v844, %v1002
        %v1004 = vpop.f32.mrf.mxu0
        %v1005 = vpop.f32.mrf.mxu0
        %v1006 = vpop.f32.mrf.mxu0
        %1007 = vdwg.mxu0
        %v1008 = vsel %vm893, %v1003, -inf
        %1009 = vmax.xlane.f32.xlu0 %v1008
        %v1010 = vpop.xlane.xlu0 %1009
        %v1011 = vsub.f32 %v1003, %v1010
        %v1012 = vmul.f32 %v1011, 1.442695
        %v1013 = vpow.pop %v1012
        %v1014 = vsel %vm893, %v1013, 0.0
        %1015 = vadd.xlane.f32.xlu0 %v1014
        %v1016 = vpop.xlane.xlu0 %1015
        %v1017 = vrcp.pop %v1016
        %v1018 = vmul.f32 %v1013, %v1017
        %v1019 = vpack.c.bf16 %v1018, %v1018
        %1021 = vrot.lane.b32.xlu0 %v838, 112
        %v1022 = vpop.permute.xlu0 %1021
        %v1024 = vsel %vm893, %v1019, 0
        %v1027 = vsel %vm909, %v1022, 0
        %1029 = vmatprep.subr.bf16.mxu0 0
        %1030 = vmatpush1.bf16.msra.mxu0 0
        %1031 = vmatprep.subr.bf16.mxu0 0
        %1032 = vmatpush1.bf16.msra.mxu0 0
        %1033 = vmatprep.subr.bf16.mxu0 0
        %1034 = vmatpush1.bf16.msra.mxu0 0
        %1035 = vmatprep.subr.bf16.mxu0 0
        %1036 = vmatpush1.bf16.msra.mxu0 0
        %1037 = vmatprep.subr.bf16.mxu0 0
        %1038 = vmatpush1.bf16.msra.mxu0 0
        %1039 = vmatprep.subr.bf16.mxu0 0
        %1040 = vmatpush1.bf16.msra.mxu0 0
        %1041 = vmatprep.subr.bf16.mxu0 0
        %1042 = vmatpush1.bf16.msra.mxu0 0
        %1043 = vmatprep.subr.bf16.mxu0 0
        %1044 = vmatpush1.bf16.msra.mxu0 %v1027
        %1045 = vmatprep.subr.bf16.mxu0 0
        %1046 = vmatpush2.bf16.msra.mxu0 0
        %1047 = vmatprep.subr.bf16.mxu0 0
        %1048 = vmatpush2.bf16.msra.mxu0 0
        %1049 = vmatprep.subr.bf16.mxu0 0
        %1050 = vmatpush2.bf16.msra.mxu0 0
        %1051 = vmatprep.subr.bf16.mxu0 0
        %1052 = vmatpush2.bf16.msra.mxu0 0
        %1053 = vmatprep.subr.bf16.mxu0 0
        %1054 = vmatpush2.bf16.msra.mxu0 0
        %1055 = vmatprep.subr.bf16.mxu0 0
        %1056 = vmatpush2.bf16.msra.mxu0 0
        %1057 = vmatprep.subr.bf16.mxu0 0
        %1058 = vmatpush2.bf16.msra.mxu0 0
        %1059 = vmatprep.subr.bf16.mxu0 0
        %1060 = vmatpush2.bf16.msra.mxu0 0
        %1061 = vmatprep.mubr.bf16.mxu0 0
        %1062 = vmatmul.mubr.bf16.gmra.mxu0 %v1024
        %v1063 = vpop.f32.mrf.mxu0
        %v1064 = vadd.f32 0.0, %v1063
        %v1065 = vpop.f32.mrf.mxu0
        %v1066 = vpop.f32.mrf.mxu0
        %v1067 = vpop.f32.mrf.mxu0
        %1068 = vdwg.mxu0
        %v1069 = vpack.c.bf16 %v1064, %v1064
        %v1070 = vld [vmem:[#allocation8 + $0x8] sm:$0xf]
        %v1071 = vld [vmem:[#allocation8 + $0xc] sm:$0xf]
        %v1074 = vunpack.c.l.b16 %v1070
        %v1075 = vunpack.c.l.b16 %v1071
        %v1076 = vpack.c.b16 %v1075, %v1074
        %v1079 = vsel %vm846, %v1069, 0
        %1081 = vmatprep.subr.bf16.mxu0 0
        %1082 = vmatpush1.bf16.msra.mxu0 0
        %1083 = vmatprep.subr.bf16.mxu0 0
        %1084 = vmatpush1.bf16.msra.mxu0 0
        %1085 = vmatprep.subr.bf16.mxu0 0
        %1086 = vmatpush1.bf16.msra.mxu0 0
        %1087 = vmatprep.subr.bf16.mxu0 0
        %1088 = vmatpush1.bf16.msra.mxu0 0
        %1089 = vmatprep.subr.bf16.mxu0 0
        %1090 = vmatpush1.bf16.msra.mxu0 0
        %1091 = vmatprep.subr.bf16.mxu0 0
        %1092 = vmatpush1.bf16.msra.mxu0 0
        %1093 = vmatprep.subr.bf16.mxu0 0
        %1094 = vmatpush1.bf16.msra.mxu0 0
        %1095 = vmatprep.subr.bf16.mxu0 0
        %1096 = vmatpush1.bf16.msra.mxu0 %v1076
        %1097 = vmatprep.subr.bf16.mxu0 0
        %1098 = vmatpush2.bf16.msra.mxu0 0
        %1099 = vmatprep.subr.bf16.mxu0 0
        %1100 = vmatpush2.bf16.msra.mxu0 0
        %1101 = vmatprep.subr.bf16.mxu0 0
        %1102 = vmatpush2.bf16.msra.mxu0 0
        %1103 = vmatprep.subr.bf16.mxu0 0
        %1104 = vmatpush2.bf16.msra.mxu0 0
        %1105 = vmatprep.subr.bf16.mxu0 0
        %1106 = vmatpush2.bf16.msra.mxu0 0
        %1107 = vmatprep.subr.bf16.mxu0 0
        %1108 = vmatpush2.bf16.msra.mxu0 0
        %1109 = vmatprep.subr.bf16.mxu0 0
        %1110 = vmatpush2.bf16.msra.mxu0 0
        %1111 = vmatprep.subr.bf16.mxu0 0
        %1112 = vmatpush2.bf16.msra.mxu0 0
        %1113 = vmatprep.mubr.bf16.mxu0 0
        %1114 = vmatmul.mubr.bf16.gmra.mxu0 %v1079
        %v1115 = vpop.f32.mrf.mxu0
        %v1116 = vadd.f32 0.0, %v1115
        %v1117 = vpop.f32.mrf.mxu0
        %v1118 = vpop.f32.mrf.mxu0
        %v1119 = vpop.f32.mrf.mxu0
        %1120 = vdwg.mxu0
        %v1123 = vunpack.c.l.b16 %v954
        %v1124 = vunpack.c.l.b16 %v955
        %v1125 = vpack.c.b16 %v1124, %v1123
        %v1128 = vsel %vm846, %v953, 0
        %1130 = vmatprep.subr.bf16.mxu0 0
        %1131 = vmatpush1.bf16.msra.mxu0 0
        %1132 = vmatprep.subr.bf16.mxu0 0
        %1133 = vmatpush1.bf16.msra.mxu0 0
        %1134 = vmatprep.subr.bf16.mxu0 0
        %1135 = vmatpush1.bf16.msra.mxu0 0
        %1136 = vmatprep.subr.bf16.mxu0 0
        %1137 = vmatpush1.bf16.msra.mxu0 0
        %1138 = vmatprep.subr.bf16.mxu0 0
        %1139 = vmatpush1.bf16.msra.mxu0 0
        %1140 = vmatprep.subr.bf16.mxu0 0
        %1141 = vmatpush1.bf16.msra.mxu0 0
        %1142 = vmatprep.subr.bf16.mxu0 0
        %1143 = vmatpush1.bf16.msra.mxu0 0
        %1144 = vmatprep.subr.bf16.mxu0 0
        %1145 = vmatpush1.bf16.msra.mxu0 %v1125
        %1146 = vmatprep.subr.bf16.mxu0 0
        %1147 = vmatpush2.bf16.msra.mxu0 0
        %1148 = vmatprep.subr.bf16.mxu0 0
        %1149 = vmatpush2.bf16.msra.mxu0 0
        %1150 = vmatprep.subr.bf16.mxu0 0
        %1151 = vmatpush2.bf16.msra.mxu0 0
        %1152 = vmatprep.subr.bf16.mxu0 0
        %1153 = vmatpush2.bf16.msra.mxu0 0
        %1154 = vmatprep.subr.bf16.mxu0 0
        %1155 = vmatpush2.bf16.msra.mxu0 0
        %1156 = vmatprep.subr.bf16.mxu0 0
        %1157 = vmatpush2.bf16.msra.mxu0 0
        %1158 = vmatprep.subr.bf16.mxu0 0
        %1159 = vmatpush2.bf16.msra.mxu0 0
        %1160 = vmatprep.subr.bf16.mxu0 0
        %1161 = vmatpush2.bf16.msra.mxu0 0
        %1162 = vmatprep.mubr.bf16.mxu0 0
        %1163 = vmatmul.mubr.bf16.gmra.mxu0 %v1128
        %v1164 = vpop.f32.mrf.mxu0
        %v1165 = vadd.f32 %v1116, %v1164
        %v1166 = vpop.f32.mrf.mxu0
        %v1167 = vpop.f32.mrf.mxu0
        %v1168 = vpop.f32.mrf.mxu0
        %1169 = vdwg.mxu0
        %1170 = vrot.lane.b32.xlu0 %v836, 96
        %v1171 = vpop.permute.xlu0 %1170
        %1172 = vrot.lane.b32.xlu0 %v837, 96
        %v1173 = vpop.permute.xlu0 %1172
        %v1175 = vsel %vm846, %v1171, 0
        %v1178 = vsel %vm846, %v1173, 0
        %1180 = vmatprep.subr.bf16.mxu0 0
        %1181 = vmatpush1.bf16.xpose.msra.mxu0 0
        %1182 = vmatprep.subr.bf16.mxu0 0
        %1183 = vmatpush1.bf16.xpose.msra.mxu0 0
        %1184 = vmatprep.subr.bf16.mxu0 0
        %1185 = vmatpush1.bf16.xpose.msra.mxu0 0
        %1186 = vmatprep.subr.bf16.mxu0 0
        %1187 = vmatpush1.bf16.xpose.msra.mxu0 0
        %1188 = vmatprep.subr.bf16.mxu0 0
        %1189 = vmatpush1.bf16.xpose.msra.mxu0 0
        %1190 = vmatprep.subr.bf16.mxu0 0
        %1191 = vmatpush1.bf16.xpose.msra.mxu0 0
        %1192 = vmatprep.subr.bf16.mxu0 0
        %1193 = vmatpush1.bf16.xpose.msra.mxu0 0
        %1194 = vmatprep.subr.bf16.mxu0 0
        %1195 = vmatpush1.bf16.xpose.msra.mxu0 %v1178
        %1196 = vmatprep.subr.bf16.mxu0 0
        %1197 = vmatpush2.bf16.xpose.msra.mxu0 0
        %1198 = vmatprep.subr.bf16.mxu0 0
        %1199 = vmatpush2.bf16.xpose.msra.mxu0 0
        %1200 = vmatprep.subr.bf16.mxu0 0
        %1201 = vmatpush2.bf16.xpose.msra.mxu0 0
        %1202 = vmatprep.subr.bf16.mxu0 0
        %1203 = vmatpush2.bf16.xpose.msra.mxu0 0
        %1204 = vmatprep.subr.bf16.mxu0 0
        %1205 = vmatpush2.bf16.xpose.msra.mxu0 0
        %1206 = vmatprep.subr.bf16.mxu0 0
        %1207 = vmatpush2.bf16.xpose.msra.mxu0 0
        %1208 = vmatprep.subr.bf16.mxu0 0
        %1209 = vmatpush2.bf16.xpose.msra.mxu0 0
        %1210 = vmatprep.subr.bf16.mxu0 0
        %1211 = vmatpush2.bf16.xpose.msra.mxu0 0
        %1212 = vmatprep.mubr.bf16.mxu0 0
        %1213 = vmatmul.mubr.bf16.gmra.mxu0 %v1175
        %v1214 = vpop.f32.mrf.mxu0
        %v1215 = vadd.f32 %v844, %v1214
        %v1216 = vpop.f32.mrf.mxu0
        %v1217 = vpop.f32.mrf.mxu0
        %v1218 = vpop.f32.mrf.mxu0
        %1219 = vdwg.mxu0
        %v1220 = vsel %vm893, %v1215, -inf
        %1221 = vmax.xlane.f32.xlu0 %v1220
        %v1222 = vpop.xlane.xlu0 %1221
        %v1223 = vsub.f32 %v1215, %v1222
        %v1224 = vmul.f32 %v1223, 1.442695
        %v1225 = vpow.pop %v1224
        %v1226 = vsel %vm893, %v1225, 0.0
        %1227 = vadd.xlane.f32.xlu0 %v1226
        %v1228 = vpop.xlane.xlu0 %1227
        %v1229 = vrcp.pop %v1228
        %v1230 = vmul.f32 %v1225, %v1229
        %v1231 = vpack.c.bf16 %v1230, %v1230
        %1232 = vrot.lane.b32.xlu0 %v838, 96
        %v1233 = vpop.permute.xlu0 %1232
        %v1235 = vsel %vm893, %v1231, 0
        %v1238 = vsel %vm909, %v1233, 0
        %1240 = vmatprep.subr.bf16.mxu0 0
        %1241 = vmatpush1.bf16.msra.mxu0 0
        %1242 = vmatprep.subr.bf16.mxu0 0
        %1243 = vmatpush1.bf16.msra.mxu0 0
        %1244 = vmatprep.subr.bf16.mxu0 0
        %1245 = vmatpush1.bf16.msra.mxu0 0
        %1246 = vmatprep.subr.bf16.mxu0 0
        %1247 = vmatpush1.bf16.msra.mxu0 0
        %1248 = vmatprep.subr.bf16.mxu0 0
        %1249 = vmatpush1.bf16.msra.mxu0 0
        %1250 = vmatprep.subr.bf16.mxu0 0
        %1251 = vmatpush1.bf16.msra.mxu0 0
        %1252 = vmatprep.subr.bf16.mxu0 0
        %1253 = vmatpush1.bf16.msra.mxu0 0
        %1254 = vmatprep.subr.bf16.mxu0 0
        %1255 = vmatpush1.bf16.msra.mxu0 %v1238
        %1256 = vmatprep.subr.bf16.mxu0 0
        %1257 = vmatpush2.bf16.msra.mxu0 0
        %1258 = vmatprep.subr.bf16.mxu0 0
        %1259 = vmatpush2.bf16.msra.mxu0 0
        %1260 = vmatprep.subr.bf16.mxu0 0
        %1261 = vmatpush2.bf16.msra.mxu0 0
        %1262 = vmatprep.subr.bf16.mxu0 0
        %1263 = vmatpush2.bf16.msra.mxu0 0
        %1264 = vmatprep.subr.bf16.mxu0 0
        %1265 = vmatpush2.bf16.msra.mxu0 0
        %1266 = vmatprep.subr.bf16.mxu0 0
        %1267 = vmatpush2.bf16.msra.mxu0 0
        %1268 = vmatprep.subr.bf16.mxu0 0
        %1269 = vmatpush2.bf16.msra.mxu0 0
        %1270 = vmatprep.subr.bf16.mxu0 0
        %1271 = vmatpush2.bf16.msra.mxu0 0
        %1272 = vmatprep.mubr.bf16.mxu0 0
        %1273 = vmatmul.mubr.bf16.gmra.mxu0 %v1235
        %v1274 = vpop.f32.mrf.mxu0
        %v1275 = vadd.f32 0.0, %v1274
        %v1276 = vpop.f32.mrf.mxu0
        %v1277 = vpop.f32.mrf.mxu0
        %v1278 = vpop.f32.mrf.mxu0
        %1279 = vdwg.mxu0
        %v1280 = vpack.c.bf16 %v1275, %v1275
        %v1281 = vld [vmem:[#allocation8 + $0x10] sm:$0xf]
        %v1282 = vld [vmem:[#allocation8 + $0x14] sm:$0xf]
        %v1285 = vunpack.c.l.b16 %v1281
        %v1286 = vunpack.c.l.b16 %v1282
        %v1287 = vpack.c.b16 %v1286, %v1285
        %v1290 = vsel %vm846, %v1280, 0
        %1292 = vmatprep.subr.bf16.mxu0 0
        %1293 = vmatpush1.bf16.msra.mxu0 0
        %1294 = vmatprep.subr.bf16.mxu0 0
        %1295 = vmatpush1.bf16.msra.mxu0 0
        %1296 = vmatprep.subr.bf16.mxu0 0
        %1297 = vmatpush1.bf16.msra.mxu0 0
        %1298 = vmatprep.subr.bf16.mxu0 0
        %1299 = vmatpush1.bf16.msra.mxu0 0
        %1300 = vmatprep.subr.bf16.mxu0 0
        %1301 = vmatpush1.bf16.msra.mxu0 0
        %1302 = vmatprep.subr.bf16.mxu0 0
        %1303 = vmatpush1.bf16.msra.mxu0 0
        %1304 = vmatprep.subr.bf16.mxu0 0
        %1305 = vmatpush1.bf16.msra.mxu0 0
        %1306 = vmatprep.subr.bf16.mxu0 0
        %1307 = vmatpush1.bf16.msra.mxu0 %v1287
        %1308 = vmatprep.subr.bf16.mxu0 0
        %1309 = vmatpush2.bf16.msra.mxu0 0
        %1310 = vmatprep.subr.bf16.mxu0 0
        %1311 = vmatpush2.bf16.msra.mxu0 0
        %1312 = vmatprep.subr.bf16.mxu0 0
        %1313 = vmatpush2.bf16.msra.mxu0 0
        %1314 = vmatprep.subr.bf16.mxu0 0
        %1315 = vmatpush2.bf16.msra.mxu0 0
        %1316 = vmatprep.subr.bf16.mxu0 0
        %1317 = vmatpush2.bf16.msra.mxu0 0
        %1318 = vmatprep.subr.bf16.mxu0 0
        %1319 = vmatpush2.bf16.msra.mxu0 0
        %1320 = vmatprep.subr.bf16.mxu0 0
        %1321 = vmatpush2.bf16.msra.mxu0 0
        %1322 = vmatprep.subr.bf16.mxu0 0
        %1323 = vmatpush2.bf16.msra.mxu0 0
        %1324 = vmatprep.mubr.bf16.mxu0 0
        %1325 = vmatmul.mubr.bf16.gmra.mxu0 %v1290
        %v1326 = vpop.f32.mrf.mxu0
        %v1327 = vadd.f32 0.0, %v1326
        %v1328 = vpop.f32.mrf.mxu0
        %v1329 = vpop.f32.mrf.mxu0
        %v1330 = vpop.f32.mrf.mxu0
        %1331 = vdwg.mxu0
        %v1332 = vadd.f32 %v1165, %v1327
        %1333 = vrot.lane.b32.xlu0 %v836, 80
        %v1334 = vpop.permute.xlu0 %1333
        %1335 = vrot.lane.b32.xlu0 %v837, 80
        %v1336 = vpop.permute.xlu0 %1335
        %v1338 = vsel %vm846, %v1334, 0
        %v1341 = vsel %vm846, %v1336, 0
        %1343 = vmatprep.subr.bf16.mxu0 0
        %1344 = vmatpush1.bf16.xpose.msra.mxu0 0
        %1345 = vmatprep.subr.bf16.mxu0 0
        %1346 = vmatpush1.bf16.xpose.msra.mxu0 0
        %1347 = vmatprep.subr.bf16.mxu0 0
        %1348 = vmatpush1.bf16.xpose.msra.mxu0 0
        %1349 = vmatprep.subr.bf16.mxu0 0
        %1350 = vmatpush1.bf16.xpose.msra.mxu0 0
        %1351 = vmatprep.subr.bf16.mxu0 0
        %1352 = vmatpush1.bf16.xpose.msra.mxu0 0
        %1353 = vmatprep.subr.bf16.mxu0 0
        %1354 = vmatpush1.bf16.xpose.msra.mxu0 0
        %1355 = vmatprep.subr.bf16.mxu0 0
        %1356 = vmatpush1.bf16.xpose.msra.mxu0 0
        %1357 = vmatprep.subr.bf16.mxu0 0
        %1358 = vmatpush1.bf16.xpose.msra.mxu0 %v1341
        %1359 = vmatprep.subr.bf16.mxu0 0
        %1360 = vmatpush2.bf16.xpose.msra.mxu0 0
        %1361 = vmatprep.subr.bf16.mxu0 0
        %1362 = vmatpush2.bf16.xpose.msra.mxu0 0
        %1363 = vmatprep.subr.bf16.mxu0 0
        %1364 = vmatpush2.bf16.xpose.msra.mxu0 0
        %1365 = vmatprep.subr.bf16.mxu0 0
        %1366 = vmatpush2.bf16.xpose.msra.mxu0 0
        %1367 = vmatprep.subr.bf16.mxu0 0
        %1368 = vmatpush2.bf16.xpose.msra.mxu0 0
        %1369 = vmatprep.subr.bf16.mxu0 0
        %1370 = vmatpush2.bf16.xpose.msra.mxu0 0
        %1371 = vmatprep.subr.bf16.mxu0 0
        %1372 = vmatpush2.bf16.xpose.msra.mxu0 0
        %1373 = vmatprep.subr.bf16.mxu0 0
        %1374 = vmatpush2.bf16.xpose.msra.mxu0 0
        %1375 = vmatprep.mubr.bf16.mxu0 0
        %1376 = vmatmul.mubr.bf16.gmra.mxu0 %v1338
        %v1377 = vpop.f32.mrf.mxu0
        %v1378 = vadd.f32 %v844, %v1377
        %v1379 = vpop.f32.mrf.mxu0
        %v1380 = vpop.f32.mrf.mxu0
        %v1381 = vpop.f32.mrf.mxu0
        %1382 = vdwg.mxu0
        %v1383 = vsel %vm893, %v1378, -inf
        %1384 = vmax.xlane.f32.xlu0 %v1383
        %v1385 = vpop.xlane.xlu0 %1384
        %v1386 = vsub.f32 %v1378, %v1385
        %v1387 = vmul.f32 %v1386, 1.442695
        %v1388 = vpow.pop %v1387
        %v1389 = vsel %vm893, %v1388, 0.0
        %1390 = vadd.xlane.f32.xlu0 %v1389
        %v1391 = vpop.xlane.xlu0 %1390
        %v1392 = vrcp.pop %v1391
        %v1393 = vmul.f32 %v1388, %v1392
        %v1394 = vpack.c.bf16 %v1393, %v1393
        %1395 = vrot.lane.b32.xlu0 %v838, 80
        %v1396 = vpop.permute.xlu0 %1395
        %v1398 = vsel %vm893, %v1394, 0
        %v1401 = vsel %vm909, %v1396, 0
        %1403 = vmatprep.subr.bf16.mxu0 0
        %1404 = vmatpush1.bf16.msra.mxu0 0
        %1405 = vmatprep.subr.bf16.mxu0 0
        %1406 = vmatpush1.bf16.msra.mxu0 0
        %1407 = vmatprep.subr.bf16.mxu0 0
        %1408 = vmatpush1.bf16.msra.mxu0 0
        %1409 = vmatprep.subr.bf16.mxu0 0
        %1410 = vmatpush1.bf16.msra.mxu0 0
        %1411 = vmatprep.subr.bf16.mxu0 0
        %1412 = vmatpush1.bf16.msra.mxu0 0
        %1413 = vmatprep.subr.bf16.mxu0 0
        %1414 = vmatpush1.bf16.msra.mxu0 0
        %1415 = vmatprep.subr.bf16.mxu0 0
        %1416 = vmatpush1.bf16.msra.mxu0 0
        %1417 = vmatprep.subr.bf16.mxu0 0
        %1418 = vmatpush1.bf16.msra.mxu0 %v1401
        %1419 = vmatprep.subr.bf16.mxu0 0
        %1420 = vmatpush2.bf16.msra.mxu0 0
        %1421 = vmatprep.subr.bf16.mxu0 0
        %1422 = vmatpush2.bf16.msra.mxu0 0
        %1423 = vmatprep.subr.bf16.mxu0 0
        %1424 = vmatpush2.bf16.msra.mxu0 0
        %1425 = vmatprep.subr.bf16.mxu0 0
        %1426 = vmatpush2.bf16.msra.mxu0 0
        %1427 = vmatprep.subr.bf16.mxu0 0
        %1428 = vmatpush2.bf16.msra.mxu0 0
        %1429 = vmatprep.subr.bf16.mxu0 0
        %1430 = vmatpush2.bf16.msra.mxu0 0
        %1431 = vmatprep.subr.bf16.mxu0 0
        %1432 = vmatpush2.bf16.msra.mxu0 0
        %1433 = vmatprep.subr.bf16.mxu0 0
        %1434 = vmatpush2.bf16.msra.mxu0 0
        %1435 = vmatprep.mubr.bf16.mxu0 0
        %1436 = vmatmul.mubr.bf16.gmra.mxu0 %v1398
        %v1437 = vpop.f32.mrf.mxu0
        %v1438 = vadd.f32 0.0, %v1437
        %v1439 = vpop.f32.mrf.mxu0
        %v1440 = vpop.f32.mrf.mxu0
        %v1441 = vpop.f32.mrf.mxu0
        %1442 = vdwg.mxu0
        %v1443 = vpack.c.bf16 %v1438, %v1438
        %v1444 = vld [vmem:[#allocation8 + $0x18] sm:$0xf]
        %v1445 = vld [vmem:[#allocation8 + $0x1c] sm:$0xf]
        %v1448 = vunpack.c.l.b16 %v1444
        %v1449 = vunpack.c.l.b16 %v1445
        %v1450 = vpack.c.b16 %v1449, %v1448
        %v1453 = vsel %vm846, %v1443, 0
        %1455 = vmatprep.subr.bf16.mxu0 0
        %1456 = vmatpush1.bf16.msra.mxu0 0
        %1457 = vmatprep.subr.bf16.mxu0 0
        %1458 = vmatpush1.bf16.msra.mxu0 0
        %1459 = vmatprep.subr.bf16.mxu0 0
        %1460 = vmatpush1.bf16.msra.mxu0 0
        %1461 = vmatprep.subr.bf16.mxu0 0
        %1462 = vmatpush1.bf16.msra.mxu0 0
        %1463 = vmatprep.subr.bf16.mxu0 0
        %1464 = vmatpush1.bf16.msra.mxu0 0
        %1465 = vmatprep.subr.bf16.mxu0 0
        %1466 = vmatpush1.bf16.msra.mxu0 0
        %1467 = vmatprep.subr.bf16.mxu0 0
        %1468 = vmatpush1.bf16.msra.mxu0 0
        %1469 = vmatprep.subr.bf16.mxu0 0
        %1470 = vmatpush1.bf16.msra.mxu0 %v1450
        %1471 = vmatprep.subr.bf16.mxu0 0
        %1472 = vmatpush2.bf16.msra.mxu0 0
        %1473 = vmatprep.subr.bf16.mxu0 0
        %1474 = vmatpush2.bf16.msra.mxu0 0
        %1475 = vmatprep.subr.bf16.mxu0 0
        %1476 = vmatpush2.bf16.msra.mxu0 0
        %1477 = vmatprep.subr.bf16.mxu0 0
        %1478 = vmatpush2.bf16.msra.mxu0 0
        %1479 = vmatprep.subr.bf16.mxu0 0
        %1480 = vmatpush2.bf16.msra.mxu0 0
        %1481 = vmatprep.subr.bf16.mxu0 0
        %1482 = vmatpush2.bf16.msra.mxu0 0
        %1483 = vmatprep.subr.bf16.mxu0 0
        %1484 = vmatpush2.bf16.msra.mxu0 0
        %1485 = vmatprep.subr.bf16.mxu0 0
        %1486 = vmatpush2.bf16.msra.mxu0 0
        %1487 = vmatprep.mubr.bf16.mxu0 0
        %1488 = vmatmul.mubr.bf16.gmra.mxu0 %v1453
        %v1489 = vpop.f32.mrf.mxu0
        %v1490 = vadd.f32 0.0, %v1489
        %v1491 = vpop.f32.mrf.mxu0
        %v1492 = vpop.f32.mrf.mxu0
        %v1493 = vpop.f32.mrf.mxu0
        %1494 = vdwg.mxu0
        %v1495 = vadd.f32 %v1332, %v1490
        %1496 = vrot.lane.b32.xlu0 %v836, 64
        %v1497 = vpop.permute.xlu0 %1496
        %1498 = vrot.lane.b32.xlu0 %v837, 64
        %v1499 = vpop.permute.xlu0 %1498
        %v1501 = vsel %vm846, %v1497, 0
        %v1504 = vsel %vm846, %v1499, 0
        %1506 = vmatprep.subr.bf16.mxu0 0
        %1507 = vmatpush1.bf16.xpose.msra.mxu0 0
        %1508 = vmatprep.subr.bf16.mxu0 0
        %1509 = vmatpush1.bf16.xpose.msra.mxu0 0
        %1510 = vmatprep.subr.bf16.mxu0 0
        %1511 = vmatpush1.bf16.xpose.msra.mxu0 0
        %1512 = vmatprep.subr.bf16.mxu0 0
        %1513 = vmatpush1.bf16.xpose.msra.mxu0 0
        %1514 = vmatprep.subr.bf16.mxu0 0
        %1515 = vmatpush1.bf16.xpose.msra.mxu0 0
        %1516 = vmatprep.subr.bf16.mxu0 0
        %1517 = vmatpush1.bf16.xpose.msra.mxu0 0
        %1518 = vmatprep.subr.bf16.mxu0 0
        %1519 = vmatpush1.bf16.xpose.msra.mxu0 0
        %1520 = vmatprep.subr.bf16.mxu0 0
        %1521 = vmatpush1.bf16.xpose.msra.mxu0 %v1504
        %1522 = vmatprep.subr.bf16.mxu0 0
        %1523 = vmatpush2.bf16.xpose.msra.mxu0 0
        %1524 = vmatprep.subr.bf16.mxu0 0
        %1525 = vmatpush2.bf16.xpose.msra.mxu0 0
        %1526 = vmatprep.subr.bf16.mxu0 0
        %1527 = vmatpush2.bf16.xpose.msra.mxu0 0
        %1528 = vmatprep.subr.bf16.mxu0 0
        %1529 = vmatpush2.bf16.xpose.msra.mxu0 0
        %1530 = vmatprep.subr.bf16.mxu0 0
        %1531 = vmatpush2.bf16.xpose.msra.mxu0 0
        %1532 = vmatprep.subr.bf16.mxu0 0
        %1533 = vmatpush2.bf16.xpose.msra.mxu0 0
        %1534 = vmatprep.subr.bf16.mxu0 0
        %1535 = vmatpush2.bf16.xpose.msra.mxu0 0
        %1536 = vmatprep.subr.bf16.mxu0 0
        %1537 = vmatpush2.bf16.xpose.msra.mxu0 0
        %1538 = vmatprep.mubr.bf16.mxu0 0
        %1539 = vmatmul.mubr.bf16.gmra.mxu0 %v1501
        %v1540 = vpop.f32.mrf.mxu0
        %v1541 = vadd.f32 %v844, %v1540
        %v1542 = vpop.f32.mrf.mxu0
        %v1543 = vpop.f32.mrf.mxu0
        %v1544 = vpop.f32.mrf.mxu0
        %1545 = vdwg.mxu0
        %v1546 = vsel %vm893, %v1541, -inf
        %1547 = vmax.xlane.f32.xlu0 %v1546
        %v1548 = vpop.xlane.xlu0 %1547
        %v1549 = vsub.f32 %v1541, %v1548
        %v1550 = vmul.f32 %v1549, 1.442695
        %v1551 = vpow.pop %v1550
        %v1552 = vsel %vm893, %v1551, 0.0
        %1553 = vadd.xlane.f32.xlu0 %v1552
        %v1554 = vpop.xlane.xlu0 %1553
        %v1555 = vrcp.pop %v1554
        %v1556 = vmul.f32 %v1551, %v1555
        %v1557 = vpack.c.bf16 %v1556, %v1556
        %1558 = vrot.lane.b32.xlu0 %v838, 64
        %v1559 = vpop.permute.xlu0 %1558
        %v1561 = vsel %vm893, %v1557, 0
        %v1564 = vsel %vm909, %v1559, 0
        %1566 = vmatprep.subr.bf16.mxu0 0
        %1567 = vmatpush1.bf16.msra.mxu0 0
        %1568 = vmatprep.subr.bf16.mxu0 0
        %1569 = vmatpush1.bf16.msra.mxu0 0
        %1570 = vmatprep.subr.bf16.mxu0 0
        %1571 = vmatpush1.bf16.msra.mxu0 0
        %1572 = vmatprep.subr.bf16.mxu0 0
        %1573 = vmatpush1.bf16.msra.mxu0 0
        %1574 = vmatprep.subr.bf16.mxu0 0
        %1575 = vmatpush1.bf16.msra.mxu0 0
        %1576 = vmatprep.subr.bf16.mxu0 0
        %1577 = vmatpush1.bf16.msra.mxu0 0
        %1578 = vmatprep.subr.bf16.mxu0 0
        %1579 = vmatpush1.bf16.msra.mxu0 0
        %1580 = vmatprep.subr.bf16.mxu0 0
        %1581 = vmatpush1.bf16.msra.mxu0 %v1564
        %1582 = vmatprep.subr.bf16.mxu0 0
        %1583 = vmatpush2.bf16.msra.mxu0 0
        %1584 = vmatprep.subr.bf16.mxu0 0
        %1585 = vmatpush2.bf16.msra.mxu0 0
        %1586 = vmatprep.subr.bf16.mxu0 0
        %1587 = vmatpush2.bf16.msra.mxu0 0
        %1588 = vmatprep.subr.bf16.mxu0 0
        %1589 = vmatpush2.bf16.msra.mxu0 0
        %1590 = vmatprep.subr.bf16.mxu0 0
        %1591 = vmatpush2.bf16.msra.mxu0 0
        %1592 = vmatprep.subr.bf16.mxu0 0
        %1593 = vmatpush2.bf16.msra.mxu0 0
        %1594 = vmatprep.subr.bf16.mxu0 0
        %1595 = vmatpush2.bf16.msra.mxu0 0
        %1596 = vmatprep.subr.bf16.mxu0 0
        %1597 = vmatpush2.bf16.msra.mxu0 0
        %1598 = vmatprep.mubr.bf16.mxu0 0
        %1599 = vmatmul.mubr.bf16.gmra.mxu0 %v1561
        %v1600 = vpop.f32.mrf.mxu0
        %v1601 = vadd.f32 0.0, %v1600
        %v1602 = vpop.f32.mrf.mxu0
        %v1603 = vpop.f32.mrf.mxu0
        %v1604 = vpop.f32.mrf.mxu0
        %1605 = vdwg.mxu0
        %v1606 = vpack.c.bf16 %v1601, %v1601
        %v1607 = vld [vmem:[#allocation8 + $0x20] sm:$0xf]
        %v1608 = vld [vmem:[#allocation8 + $0x24] sm:$0xf]
        %v1611 = vunpack.c.l.b16 %v1607
        %v1612 = vunpack.c.l.b16 %v1608
        %v1613 = vpack.c.b16 %v1612, %v1611
        %v1616 = vsel %vm846, %v1606, 0
        %1618 = vmatprep.subr.bf16.mxu0 0
        %1619 = vmatpush1.bf16.msra.mxu0 0
        %1620 = vmatprep.subr.bf16.mxu0 0
        %1621 = vmatpush1.bf16.msra.mxu0 0
        %1622 = vmatprep.subr.bf16.mxu0 0
        %1623 = vmatpush1.bf16.msra.mxu0 0
        %1624 = vmatprep.subr.bf16.mxu0 0
        %1625 = vmatpush1.bf16.msra.mxu0 0
        %1626 = vmatprep.subr.bf16.mxu0 0
        %1627 = vmatpush1.bf16.msra.mxu0 0
        %1628 = vmatprep.subr.bf16.mxu0 0
        %1629 = vmatpush1.bf16.msra.mxu0 0
        %1630 = vmatprep.subr.bf16.mxu0 0
        %1631 = vmatpush1.bf16.msra.mxu0 0
        %1632 = vmatprep.subr.bf16.mxu0 0
        %1633 = vmatpush1.bf16.msra.mxu0 %v1613
        %1634 = vmatprep.subr.bf16.mxu0 0
        %1635 = vmatpush2.bf16.msra.mxu0 0
        %1636 = vmatprep.subr.bf16.mxu0 0
        %1637 = vmatpush2.bf16.msra.mxu0 0
        %1638 = vmatprep.subr.bf16.mxu0 0
        %1639 = vmatpush2.bf16.msra.mxu0 0
        %1640 = vmatprep.subr.bf16.mxu0 0
        %1641 = vmatpush2.bf16.msra.mxu0 0
        %1642 = vmatprep.subr.bf16.mxu0 0
        %1643 = vmatpush2.bf16.msra.mxu0 0
        %1644 = vmatprep.subr.bf16.mxu0 0
        %1645 = vmatpush2.bf16.msra.mxu0 0
        %1646 = vmatprep.subr.bf16.mxu0 0
        %1647 = vmatpush2.bf16.msra.mxu0 0
        %1648 = vmatprep.subr.bf16.mxu0 0
        %1649 = vmatpush2.bf16.msra.mxu0 0
        %1650 = vmatprep.mubr.bf16.mxu0 0
        %1651 = vmatmul.mubr.bf16.gmra.mxu0 %v1616
        %v1652 = vpop.f32.mrf.mxu0
        %v1653 = vadd.f32 0.0, %v1652
        %v1654 = vpop.f32.mrf.mxu0
        %v1655 = vpop.f32.mrf.mxu0
        %v1656 = vpop.f32.mrf.mxu0
        %1657 = vdwg.mxu0
        %v1658 = vadd.f32 %v1495, %v1653
        %1659 = vrot.lane.b32.xlu0 %v836, 48
        %v1660 = vpop.permute.xlu0 %1659
        %1661 = vrot.lane.b32.xlu0 %v837, 48
        %v1662 = vpop.permute.xlu0 %1661
        %v1664 = vsel %vm846, %v1660, 0
        %v1667 = vsel %vm846, %v1662, 0
        %1669 = vmatprep.subr.bf16.mxu0 0
        %1670 = vmatpush1.bf16.xpose.msra.mxu0 0
        %1671 = vmatprep.subr.bf16.mxu0 0
        %1672 = vmatpush1.bf16.xpose.msra.mxu0 0
        %1673 = vmatprep.subr.bf16.mxu0 0
        %1674 = vmatpush1.bf16.xpose.msra.mxu0 0
        %1675 = vmatprep.subr.bf16.mxu0 0
        %1676 = vmatpush1.bf16.xpose.msra.mxu0 0
        %1677 = vmatprep.subr.bf16.mxu0 0
        %1678 = vmatpush1.bf16.xpose.msra.mxu0 0
        %1679 = vmatprep.subr.bf16.mxu0 0
        %1680 = vmatpush1.bf16.xpose.msra.mxu0 0
        %1681 = vmatprep.subr.bf16.mxu0 0
        %1682 = vmatpush1.bf16.xpose.msra.mxu0 0
        %1683 = vmatprep.subr.bf16.mxu0 0
        %1684 = vmatpush1.bf16.xpose.msra.mxu0 %v1667
        %1685 = vmatprep.subr.bf16.mxu0 0
        %1686 = vmatpush2.bf16.xpose.msra.mxu0 0
        %1687 = vmatprep.subr.bf16.mxu0 0
        %1688 = vmatpush2.bf16.xpose.msra.mxu0 0
        %1689 = vmatprep.subr.bf16.mxu0 0
        %1690 = vmatpush2.bf16.xpose.msra.mxu0 0
        %1691 = vmatprep.subr.bf16.mxu0 0
        %1692 = vmatpush2.bf16.xpose.msra.mxu0 0
        %1693 = vmatprep.subr.bf16.mxu0 0
        %1694 = vmatpush2.bf16.xpose.msra.mxu0 0
        %1695 = vmatprep.subr.bf16.mxu0 0
        %1696 = vmatpush2.bf16.xpose.msra.mxu0 0
        %1697 = vmatprep.subr.bf16.mxu0 0
        %1698 = vmatpush2.bf16.xpose.msra.mxu0 0
        %1699 = vmatprep.subr.bf16.mxu0 0
        %1700 = vmatpush2.bf16.xpose.msra.mxu0 0
        %1701 = vmatprep.mubr.bf16.mxu0 0
        %1702 = vmatmul.mubr.bf16.gmra.mxu0 %v1664
        %v1703 = vpop.f32.mrf.mxu0
        %v1704 = vadd.f32 %v844, %v1703
        %v1705 = vpop.f32.mrf.mxu0
        %v1706 = vpop.f32.mrf.mxu0
        %v1707 = vpop.f32.mrf.mxu0
        %1708 = vdwg.mxu0
        %v1709 = vsel %vm893, %v1704, -inf
        %1710 = vmax.xlane.f32.xlu0 %v1709
        %v1711 = vpop.xlane.xlu0 %1710
        %v1712 = vsub.f32 %v1704, %v1711
        %v1713 = vmul.f32 %v1712, 1.442695
        %v1714 = vpow.pop %v1713
        %v1715 = vsel %vm893, %v1714, 0.0
        %1716 = vadd.xlane.f32.xlu0 %v1715
        %v1717 = vpop.xlane.xlu0 %1716
        %v1718 = vrcp.pop %v1717
        %v1719 = vmul.f32 %v1714, %v1718
        %v1720 = vpack.c.bf16 %v1719, %v1719
        %1721 = vrot.lane.b32.xlu0 %v838, 48
        %v1722 = vpop.permute.xlu0 %1721
        %v1724 = vsel %vm893, %v1720, 0
        %v1727 = vsel %vm909, %v1722, 0
        %1729 = vmatprep.subr.bf16.mxu0 0
        %1730 = vmatpush1.bf16.msra.mxu0 0
        %1731 = vmatprep.subr.bf16.mxu0 0
        %1732 = vmatpush1.bf16.msra.mxu0 0
        %1733 = vmatprep.subr.bf16.mxu0 0
        %1734 = vmatpush1.bf16.msra.mxu0 0
        %1735 = vmatprep.subr.bf16.mxu0 0
        %1736 = vmatpush1.bf16.msra.mxu0 0
        %1737 = vmatprep.subr.bf16.mxu0 0
        %1738 = vmatpush1.bf16.msra.mxu0 0
        %1739 = vmatprep.subr.bf16.mxu0 0
        %1740 = vmatpush1.bf16.msra.mxu0 0
        %1741 = vmatprep.subr.bf16.mxu0 0
        %1742 = vmatpush1.bf16.msra.mxu0 0
        %1743 = vmatprep.subr.bf16.mxu0 0
        %1744 = vmatpush1.bf16.msra.mxu0 %v1727
        %1745 = vmatprep.subr.bf16.mxu0 0
        %1746 = vmatpush2.bf16.msra.mxu0 0
        %1747 = vmatprep.subr.bf16.mxu0 0
        %1748 = vmatpush2.bf16.msra.mxu0 0
        %1749 = vmatprep.subr.bf16.mxu0 0
        %1750 = vmatpush2.bf16.msra.mxu0 0
        %1751 = vmatprep.subr.bf16.mxu0 0
        %1752 = vmatpush2.bf16.msra.mxu0 0
        %1753 = vmatprep.subr.bf16.mxu0 0
        %1754 = vmatpush2.bf16.msra.mxu0 0
        %1755 = vmatprep.subr.bf16.mxu0 0
        %1756 = vmatpush2.bf16.msra.mxu0 0
        %1757 = vmatprep.subr.bf16.mxu0 0
        %1758 = vmatpush2.bf16.msra.mxu0 0
        %1759 = vmatprep.subr.bf16.mxu0 0
        %1760 = vmatpush2.bf16.msra.mxu0 0
        %1761 = vmatprep.mubr.bf16.mxu0 0
        %1762 = vmatmul.mubr.bf16.gmra.mxu0 %v1724
        %v1763 = vpop.f32.mrf.mxu0
        %v1764 = vadd.f32 0.0, %v1763
        %v1765 = vpop.f32.mrf.mxu0
        %v1766 = vpop.f32.mrf.mxu0
        %v1767 = vpop.f32.mrf.mxu0
        %1768 = vdwg.mxu0
        %v1769 = vpack.c.bf16 %v1764, %v1764
        %v1770 = vld [vmem:[#allocation8 + $0x28] sm:$0xf]
        %v1771 = vld [vmem:[#allocation8 + $0x2c] sm:$0xf]
        %v1774 = vunpack.c.l.b16 %v1770
        %v1775 = vunpack.c.l.b16 %v1771
        %v1776 = vpack.c.b16 %v1775, %v1774
        %v1779 = vsel %vm846, %v1769, 0
        %1781 = vmatprep.subr.bf16.mxu0 0
        %1782 = vmatpush1.bf16.msra.mxu0 0
        %1783 = vmatprep.subr.bf16.mxu0 0
        %1784 = vmatpush1.bf16.msra.mxu0 0
        %1785 = vmatprep.subr.bf16.mxu0 0
        %1786 = vmatpush1.bf16.msra.mxu0 0
        %1787 = vmatprep.subr.bf16.mxu0 0
        %1788 = vmatpush1.bf16.msra.mxu0 0
        %1789 = vmatprep.subr.bf16.mxu0 0
        %1790 = vmatpush1.bf16.msra.mxu0 0
        %1791 = vmatprep.subr.bf16.mxu0 0
        %1792 = vmatpush1.bf16.msra.mxu0 0
        %1793 = vmatprep.subr.bf16.mxu0 0
        %1794 = vmatpush1.bf16.msra.mxu0 0
        %1795 = vmatprep.subr.bf16.mxu0 0
        %1796 = vmatpush1.bf16.msra.mxu0 %v1776
        %1797 = vmatprep.subr.bf16.mxu0 0
        %1798 = vmatpush2.bf16.msra.mxu0 0
        %1799 = vmatprep.subr.bf16.mxu0 0
        %1800 = vmatpush2.bf16.msra.mxu0 0
        %1801 = vmatprep.subr.bf16.mxu0 0
        %1802 = vmatpush2.bf16.msra.mxu0 0
        %1803 = vmatprep.subr.bf16.mxu0 0
        %1804 = vmatpush2.bf16.msra.mxu0 0
        %1805 = vmatprep.subr.bf16.mxu0 0
        %1806 = vmatpush2.bf16.msra.mxu0 0
        %1807 = vmatprep.subr.bf16.mxu0 0
        %1808 = vmatpush2.bf16.msra.mxu0 0
        %1809 = vmatprep.subr.bf16.mxu0 0
        %1810 = vmatpush2.bf16.msra.mxu0 0
        %1811 = vmatprep.subr.bf16.mxu0 0
        %1812 = vmatpush2.bf16.msra.mxu0 0
        %1813 = vmatprep.mubr.bf16.mxu0 0
        %1814 = vmatmul.mubr.bf16.gmra.mxu0 %v1779
        %v1815 = vpop.f32.mrf.mxu0
        %v1816 = vadd.f32 0.0, %v1815
        %v1817 = vpop.f32.mrf.mxu0
        %v1818 = vpop.f32.mrf.mxu0
        %v1819 = vpop.f32.mrf.mxu0
        %1820 = vdwg.mxu0
        %v1821 = vadd.f32 %v1658, %v1816
        %1822 = vrot.lane.b32.xlu0 %v836, 32
        %v1823 = vpop.permute.xlu0 %1822
        %1824 = vrot.lane.b32.xlu0 %v837, 32
        %v1825 = vpop.permute.xlu0 %1824
        %v1827 = vsel %vm846, %v1823, 0
        %v1830 = vsel %vm846, %v1825, 0
        %1832 = vmatprep.subr.bf16.mxu0 0
        %1833 = vmatpush1.bf16.xpose.msra.mxu0 0
        %1834 = vmatprep.subr.bf16.mxu0 0
        %1835 = vmatpush1.bf16.xpose.msra.mxu0 0
        %1836 = vmatprep.subr.bf16.mxu0 0
        %1837 = vmatpush1.bf16.xpose.msra.mxu0 0
        %1838 = vmatprep.subr.bf16.mxu0 0
        %1839 = vmatpush1.bf16.xpose.msra.mxu0 0
        %1840 = vmatprep.subr.bf16.mxu0 0
        %1841 = vmatpush1.bf16.xpose.msra.mxu0 0
        %1842 = vmatprep.subr.bf16.mxu0 0
        %1843 = vmatpush1.bf16.xpose.msra.mxu0 0
        %1844 = vmatprep.subr.bf16.mxu0 0
        %1845 = vmatpush1.bf16.xpose.msra.mxu0 0
        %1846 = vmatprep.subr.bf16.mxu0 0
        %1847 = vmatpush1.bf16.xpose.msra.mxu0 %v1830
        %1848 = vmatprep.subr.bf16.mxu0 0
        %1849 = vmatpush2.bf16.xpose.msra.mxu0 0
        %1850 = vmatprep.subr.bf16.mxu0 0
        %1851 = vmatpush2.bf16.xpose.msra.mxu0 0
        %1852 = vmatprep.subr.bf16.mxu0 0
        %1853 = vmatpush2.bf16.xpose.msra.mxu0 0
        %1854 = vmatprep.subr.bf16.mxu0 0
        %1855 = vmatpush2.bf16.xpose.msra.mxu0 0
        %1856 = vmatprep.subr.bf16.mxu0 0
        %1857 = vmatpush2.bf16.xpose.msra.mxu0 0
        %1858 = vmatprep.subr.bf16.mxu0 0
        %1859 = vmatpush2.bf16.xpose.msra.mxu0 0
        %1860 = vmatprep.subr.bf16.mxu0 0
        %1861 = vmatpush2.bf16.xpose.msra.mxu0 0
        %1862 = vmatprep.subr.bf16.mxu0 0
        %1863 = vmatpush2.bf16.xpose.msra.mxu0 0
        %1864 = vmatprep.mubr.bf16.mxu0 0
        %1865 = vmatmul.mubr.bf16.gmra.mxu0 %v1827
        %v1866 = vpop.f32.mrf.mxu0
        %v1867 = vadd.f32 %v844, %v1866
        %v1868 = vpop.f32.mrf.mxu0
        %v1869 = vpop.f32.mrf.mxu0
        %v1870 = vpop.f32.mrf.mxu0
        %1871 = vdwg.mxu0
        %v1872 = vsel %vm893, %v1867, -inf
        %1873 = vmax.xlane.f32.xlu0 %v1872
        %v1874 = vpop.xlane.xlu0 %1873
        %v1875 = vsub.f32 %v1867, %v1874
        %v1876 = vmul.f32 %v1875, 1.442695
        %v1877 = vpow.pop %v1876
        %v1878 = vsel %vm893, %v1877, 0.0
        %1879 = vadd.xlane.f32.xlu0 %v1878
        %v1880 = vpop.xlane.xlu0 %1879
        %v1881 = vrcp.pop %v1880
        %v1882 = vmul.f32 %v1877, %v1881
        %v1883 = vpack.c.bf16 %v1882, %v1882
        %1884 = vrot.lane.b32.xlu0 %v838, 32
        %v1885 = vpop.permute.xlu0 %1884
        %v1887 = vsel %vm893, %v1883, 0
        %v1890 = vsel %vm909, %v1885, 0
        %1892 = vmatprep.subr.bf16.mxu0 0
        %1893 = vmatpush1.bf16.msra.mxu0 0
        %1894 = vmatprep.subr.bf16.mxu0 0
        %1895 = vmatpush1.bf16.msra.mxu0 0
        %1896 = vmatprep.subr.bf16.mxu0 0
        %1897 = vmatpush1.bf16.msra.mxu0 0
        %1898 = vmatprep.subr.bf16.mxu0 0
        %1899 = vmatpush1.bf16.msra.mxu0 0
        %1900 = vmatprep.subr.bf16.mxu0 0
        %1901 = vmatpush1.bf16.msra.mxu0 0
        %1902 = vmatprep.subr.bf16.mxu0 0
        %1903 = vmatpush1.bf16.msra.mxu0 0
        %1904 = vmatprep.subr.bf16.mxu0 0
        %1905 = vmatpush1.bf16.msra.mxu0 0
        %1906 = vmatprep.subr.bf16.mxu0 0
        %1907 = vmatpush1.bf16.msra.mxu0 %v1890
        %1908 = vmatprep.subr.bf16.mxu0 0
        %1909 = vmatpush2.bf16.msra.mxu0 0
        %1910 = vmatprep.subr.bf16.mxu0 0
        %1911 = vmatpush2.bf16.msra.mxu0 0
        %1912 = vmatprep.subr.bf16.mxu0 0
        %1913 = vmatpush2.bf16.msra.mxu0 0
        %1914 = vmatprep.subr.bf16.mxu0 0
        %1915 = vmatpush2.bf16.msra.mxu0 0
        %1916 = vmatprep.subr.bf16.mxu0 0
        %1917 = vmatpush2.bf16.msra.mxu0 0
        %1918 = vmatprep.subr.bf16.mxu0 0
        %1919 = vmatpush2.bf16.msra.mxu0 0
        %1920 = vmatprep.subr.bf16.mxu0 0
        %1921 = vmatpush2.bf16.msra.mxu0 0
        %1922 = vmatprep.subr.bf16.mxu0 0
        %1923 = vmatpush2.bf16.msra.mxu0 0
        %1924 = vmatprep.mubr.bf16.mxu0 0
        %1925 = vmatmul.mubr.bf16.gmra.mxu0 %v1887
        %v1926 = vpop.f32.mrf.mxu0
        %v1927 = vadd.f32 0.0, %v1926
        %v1928 = vpop.f32.mrf.mxu0
        %v1929 = vpop.f32.mrf.mxu0
        %v1930 = vpop.f32.mrf.mxu0
        %1931 = vdwg.mxu0
        %v1932 = vpack.c.bf16 %v1927, %v1927
        %v1933 = vld [vmem:[#allocation8 + $0x30] sm:$0xf]
        %v1934 = vld [vmem:[#allocation8 + $0x34] sm:$0xf]
        %v1937 = vunpack.c.l.b16 %v1933
        %v1938 = vunpack.c.l.b16 %v1934
        %v1939 = vpack.c.b16 %v1938, %v1937
        %v1942 = vsel %vm846, %v1932, 0
        %1944 = vmatprep.subr.bf16.mxu0 0
        %1945 = vmatpush1.bf16.msra.mxu0 0
        %1946 = vmatprep.subr.bf16.mxu0 0
        %1947 = vmatpush1.bf16.msra.mxu0 0
        %1948 = vmatprep.subr.bf16.mxu0 0
        %1949 = vmatpush1.bf16.msra.mxu0 0
        %1950 = vmatprep.subr.bf16.mxu0 0
        %1951 = vmatpush1.bf16.msra.mxu0 0
        %1952 = vmatprep.subr.bf16.mxu0 0
        %1953 = vmatpush1.bf16.msra.mxu0 0
        %1954 = vmatprep.subr.bf16.mxu0 0
        %1955 = vmatpush1.bf16.msra.mxu0 0
        %1956 = vmatprep.subr.bf16.mxu0 0
        %1957 = vmatpush1.bf16.msra.mxu0 0
        %1958 = vmatprep.subr.bf16.mxu0 0
        %1959 = vmatpush1.bf16.msra.mxu0 %v1939
        %1960 = vmatprep.subr.bf16.mxu0 0
        %1961 = vmatpush2.bf16.msra.mxu0 0
        %1962 = vmatprep.subr.bf16.mxu0 0
        %1963 = vmatpush2.bf16.msra.mxu0 0
        %1964 = vmatprep.subr.bf16.mxu0 0
        %1965 = vmatpush2.bf16.msra.mxu0 0
        %1966 = vmatprep.subr.bf16.mxu0 0
        %1967 = vmatpush2.bf16.msra.mxu0 0
        %1968 = vmatprep.subr.bf16.mxu0 0
        %1969 = vmatpush2.bf16.msra.mxu0 0
        %1970 = vmatprep.subr.bf16.mxu0 0
        %1971 = vmatpush2.bf16.msra.mxu0 0
        %1972 = vmatprep.subr.bf16.mxu0 0
        %1973 = vmatpush2.bf16.msra.mxu0 0
        %1974 = vmatprep.subr.bf16.mxu0 0
        %1975 = vmatpush2.bf16.msra.mxu0 0
        %1976 = vmatprep.mubr.bf16.mxu0 0
        %1977 = vmatmul.mubr.bf16.gmra.mxu0 %v1942
        %v1978 = vpop.f32.mrf.mxu0
        %v1979 = vadd.f32 0.0, %v1978
        %v1980 = vpop.f32.mrf.mxu0
        %v1981 = vpop.f32.mrf.mxu0
        %v1982 = vpop.f32.mrf.mxu0
        %1983 = vdwg.mxu0
        %v1984 = vadd.f32 %v1821, %v1979
        %1985 = vrot.lane.b32.xlu0 %v836, 16
        %v1986 = vpop.permute.xlu0 %1985
        %1987 = vrot.lane.b32.xlu0 %v837, 16
        %v1988 = vpop.permute.xlu0 %1987
        %v1990 = vsel %vm846, %v1986, 0
        %v1993 = vsel %vm846, %v1988, 0
        %1995 = vmatprep.subr.bf16.mxu0 0
        %1996 = vmatpush1.bf16.xpose.msra.mxu0 0
        %1997 = vmatprep.subr.bf16.mxu0 0
        %1998 = vmatpush1.bf16.xpose.msra.mxu0 0
        %1999 = vmatprep.subr.bf16.mxu0 0
        %2000 = vmatpush1.bf16.xpose.msra.mxu0 0
        %2001 = vmatprep.subr.bf16.mxu0 0
        %2002 = vmatpush1.bf16.xpose.msra.mxu0 0
        %2003 = vmatprep.subr.bf16.mxu0 0
        %2004 = vmatpush1.bf16.xpose.msra.mxu0 0
        %2005 = vmatprep.subr.bf16.mxu0 0
        %2006 = vmatpush1.bf16.xpose.msra.mxu0 0
        %2007 = vmatprep.subr.bf16.mxu0 0
        %2008 = vmatpush1.bf16.xpose.msra.mxu0 0
        %2009 = vmatprep.subr.bf16.mxu0 0
        %2010 = vmatpush1.bf16.xpose.msra.mxu0 %v1993
        %2011 = vmatprep.subr.bf16.mxu0 0
        %2012 = vmatpush2.bf16.xpose.msra.mxu0 0
        %2013 = vmatprep.subr.bf16.mxu0 0
        %2014 = vmatpush2.bf16.xpose.msra.mxu0 0
        %2015 = vmatprep.subr.bf16.mxu0 0
        %2016 = vmatpush2.bf16.xpose.msra.mxu0 0
        %2017 = vmatprep.subr.bf16.mxu0 0
        %2018 = vmatpush2.bf16.xpose.msra.mxu0 0
        %2019 = vmatprep.subr.bf16.mxu0 0
        %2020 = vmatpush2.bf16.xpose.msra.mxu0 0
        %2021 = vmatprep.subr.bf16.mxu0 0
        %2022 = vmatpush2.bf16.xpose.msra.mxu0 0
        %2023 = vmatprep.subr.bf16.mxu0 0
        %2024 = vmatpush2.bf16.xpose.msra.mxu0 0
        %2025 = vmatprep.subr.bf16.mxu0 0
        %2026 = vmatpush2.bf16.xpose.msra.mxu0 0
        %2027 = vmatprep.mubr.bf16.mxu0 0
        %2028 = vmatmul.mubr.bf16.gmra.mxu0 %v1990
        %v2029 = vpop.f32.mrf.mxu0
        %v2030 = vadd.f32 %v844, %v2029
        %v2031 = vpop.f32.mrf.mxu0
        %v2032 = vpop.f32.mrf.mxu0
        %v2033 = vpop.f32.mrf.mxu0
        %2034 = vdwg.mxu0
        %v2035 = vsel %vm893, %v2030, -inf
        %2036 = vmax.xlane.f32.xlu0 %v2035
        %v2037 = vpop.xlane.xlu0 %2036
        %v2038 = vsub.f32 %v2030, %v2037
        %v2039 = vmul.f32 %v2038, 1.442695
        %v2040 = vpow.pop %v2039
        %v2041 = vsel %vm893, %v2040, 0.0
        %2042 = vadd.xlane.f32.xlu0 %v2041
        %v2043 = vpop.xlane.xlu0 %2042
        %v2044 = vrcp.pop %v2043
        %v2045 = vmul.f32 %v2040, %v2044
        %v2046 = vpack.c.bf16 %v2045, %v2045
        %2047 = vrot.lane.b32.xlu0 %v838, 16
        %v2048 = vpop.permute.xlu0 %2047
        %v2050 = vsel %vm893, %v2046, 0
        %v2053 = vsel %vm909, %v2048, 0
        %2055 = vmatprep.subr.bf16.mxu0 0
        %2056 = vmatpush1.bf16.msra.mxu0 0
        %2057 = vmatprep.subr.bf16.mxu0 0
        %2058 = vmatpush1.bf16.msra.mxu0 0
        %2059 = vmatprep.subr.bf16.mxu0 0
        %2060 = vmatpush1.bf16.msra.mxu0 0
        %2061 = vmatprep.subr.bf16.mxu0 0
        %2062 = vmatpush1.bf16.msra.mxu0 0
        %2063 = vmatprep.subr.bf16.mxu0 0
        %2064 = vmatpush1.bf16.msra.mxu0 0
        %2065 = vmatprep.subr.bf16.mxu0 0
        %2066 = vmatpush1.bf16.msra.mxu0 0
        %2067 = vmatprep.subr.bf16.mxu0 0
        %2068 = vmatpush1.bf16.msra.mxu0 0
        %2069 = vmatprep.subr.bf16.mxu0 0
        %2070 = vmatpush1.bf16.msra.mxu0 %v2053
        %2071 = vmatprep.subr.bf16.mxu0 0
        %2072 = vmatpush2.bf16.msra.mxu0 0
        %2073 = vmatprep.subr.bf16.mxu0 0
        %2074 = vmatpush2.bf16.msra.mxu0 0
        %2075 = vmatprep.subr.bf16.mxu0 0
        %2076 = vmatpush2.bf16.msra.mxu0 0
        %2077 = vmatprep.subr.bf16.mxu0 0
        %2078 = vmatpush2.bf16.msra.mxu0 0
        %2079 = vmatprep.subr.bf16.mxu0 0
        %2080 = vmatpush2.bf16.msra.mxu0 0
        %2081 = vmatprep.subr.bf16.mxu0 0
        %2082 = vmatpush2.bf16.msra.mxu0 0
        %2083 = vmatprep.subr.bf16.mxu0 0
        %2084 = vmatpush2.bf16.msra.mxu0 0
        %2085 = vmatprep.subr.bf16.mxu0 0
        %2086 = vmatpush2.bf16.msra.mxu0 0
        %2087 = vmatprep.mubr.bf16.mxu0 0
        %2088 = vmatmul.mubr.bf16.gmra.mxu0 %v2050
        %v2089 = vpop.f32.mrf.mxu0
        %v2090 = vadd.f32 0.0, %v2089
        %v2091 = vpop.f32.mrf.mxu0
        %v2092 = vpop.f32.mrf.mxu0
        %v2093 = vpop.f32.mrf.mxu0
        %2094 = vdwg.mxu0
        %v2095 = vpack.c.bf16 %v2090, %v2090
        %v2096 = vld [vmem:[#allocation8 + $0x38] sm:$0xf]
        %v2097 = vld [vmem:[#allocation8 + $0x3c] sm:$0xf]
        %v2100 = vunpack.c.l.b16 %v2096
        %v2101 = vunpack.c.l.b16 %v2097
        %v2102 = vpack.c.b16 %v2101, %v2100
        %v2105 = vsel %vm846, %v2095, 0
        %2107 = vmatprep.subr.bf16.mxu0 0
        %2108 = vmatpush1.bf16.msra.mxu0 0
        %2109 = vmatprep.subr.bf16.mxu0 0
        %2110 = vmatpush1.bf16.msra.mxu0 0
        %2111 = vmatprep.subr.bf16.mxu0 0
        %2112 = vmatpush1.bf16.msra.mxu0 0
        %2113 = vmatprep.subr.bf16.mxu0 0
        %2114 = vmatpush1.bf16.msra.mxu0 0
        %2115 = vmatprep.subr.bf16.mxu0 0
        %2116 = vmatpush1.bf16.msra.mxu0 0
        %2117 = vmatprep.subr.bf16.mxu0 0
        %2118 = vmatpush1.bf16.msra.mxu0 0
        %2119 = vmatprep.subr.bf16.mxu0 0
        %2120 = vmatpush1.bf16.msra.mxu0 0
        %2121 = vmatprep.subr.bf16.mxu0 0
        %2122 = vmatpush1.bf16.msra.mxu0 %v2102
        %2123 = vmatprep.subr.bf16.mxu0 0
        %2124 = vmatpush2.bf16.msra.mxu0 0
        %2125 = vmatprep.subr.bf16.mxu0 0
        %2126 = vmatpush2.bf16.msra.mxu0 0
        %2127 = vmatprep.subr.bf16.mxu0 0
        %2128 = vmatpush2.bf16.msra.mxu0 0
        %2129 = vmatprep.subr.bf16.mxu0 0
        %2130 = vmatpush2.bf16.msra.mxu0 0
        %2131 = vmatprep.subr.bf16.mxu0 0
        %2132 = vmatpush2.bf16.msra.mxu0 0
        %2133 = vmatprep.subr.bf16.mxu0 0
        %2134 = vmatpush2.bf16.msra.mxu0 0
        %2135 = vmatprep.subr.bf16.mxu0 0
        %2136 = vmatpush2.bf16.msra.mxu0 0
        %2137 = vmatprep.subr.bf16.mxu0 0
        %2138 = vmatpush2.bf16.msra.mxu0 0
        %2139 = vmatprep.mubr.bf16.mxu0 0
        %2140 = vmatmul.mubr.bf16.gmra.mxu0 %v2105
        %v2141 = vpop.f32.mrf.mxu0
        %v2142 = vadd.f32 0.0, %v2141
        %v2143 = vpop.f32.mrf.mxu0
        %v2144 = vpop.f32.mrf.mxu0
        %v2145 = vpop.f32.mrf.mxu0
        %2146 = vdwg.mxu0
        %v2147 = vadd.f32 %v1984, %v2142
        %v2148 = vld [vmem:[%s5] sm:$0x1]
        %v2150 = vlaneseq
        %v2151 = vshrl.u32 %v2150, 7
        %v2152 = vsub.s32 0, %v2151
        %v2153 = vrot.slane %v2148, %v2152
        %v2155 = vadd.f32 %v2147, %v2153
        %v2156 = vadd.f32 %v576, %v2155
        %2157 = vadd.xlane.f32.xlu0 %v2156
        %v2158 = vpop.xlane.xlu0 %2157
        %v2159 = vrcp.pop 128.0
        %v2160 = vmul.f32 %v2158, %v2159
        %v2161 = vsub.f32 %v2156, %v2160
        %v2162 = vmul.f32 %v2161, %v2161
        %2163 = vadd.xlane.f32.xlu0 %v2162
        %v2164 = vpop.xlane.xlu0 %2163
        %v2165 = vmul.f32 %v2164, %v2159
        %v2166 = vadd.f32 %v2165, 1e-05
        %v2167 = vrsqrt.pop %v2166
        %v2168 = vmul.f32 %v2161, %v2167
        %v2169 = vld [vmem:[%s6] sm:$0x1]
        %v2171 = vlaneseq
        %v2172 = vshrl.u32 %v2171, 7
        %v2173 = vsub.s32 0, %v2172
        %v2174 = vrot.slane %v2169, %v2173
        %v2176 = vmul.f32 %v2168, %v2174
        %v2177 = vld [vmem:[%s7] sm:$0x1]
        %v2179 = vlaneseq
        %v2180 = vshrl.u32 %v2179, 7
        %v2181 = vsub.s32 0, %v2180
        %v2182 = vrot.slane %v2177, %v2181
        %v2184 = vadd.f32 %v2176, %v2182
        %v2185 = vpack.c.bf16 %v2184, %v2184
        %v2186 = vld [vmem:[#allocation10] sm:$0xff]
        %v2187 = vld [vmem:[#allocation10 + $0x8] sm:$0xff]
        %v2188 = vld [vmem:[#allocation10 + $0x10] sm:$0xff]
        %v2189 = vld [vmem:[#allocation10 + $0x18] sm:$0xff]
        %v2190 = vld [vmem:[#allocation10 + $0x20] sm:$0xff]
        %v2191 = vld [vmem:[#allocation10 + $0x28] sm:$0xff]
        %v2192 = vld [vmem:[#allocation10 + $0x30] sm:$0xff]
        %v2193 = vld [vmem:[#allocation10 + $0x38] sm:$0xff]
        %v2194 = vld [vmem:[#allocation10 + $0x40] sm:$0xff]
        %v2195 = vld [vmem:[#allocation10 + $0x48] sm:$0xff]
        %v2196 = vld [vmem:[#allocation10 + $0x50] sm:$0xff]
        %v2197 = vld [vmem:[#allocation10 + $0x58] sm:$0xff]
        %v2198 = vld [vmem:[#allocation10 + $0x60] sm:$0xff]
        %v2199 = vld [vmem:[#allocation10 + $0x68] sm:$0xff]
        %v2200 = vld [vmem:[#allocation10 + $0x70] sm:$0xff]
        %v2201 = vld [vmem:[#allocation10 + $0x78] sm:$0xff]
        %v2202 = vld [vmem:[#allocation10 + $0x80] sm:$0xff]
        %v2203 = vld [vmem:[#allocation10 + $0x88] sm:$0xff]
        %v2204 = vld [vmem:[#allocation10 + $0x90] sm:$0xff]
        %v2205 = vld [vmem:[#allocation10 + $0x98] sm:$0xff]
        %v2206 = vld [vmem:[#allocation10 + $0xa0] sm:$0xff]
        %v2207 = vld [vmem:[#allocation10 + $0xa8] sm:$0xff]
        %v2208 = vld [vmem:[#allocation10 + $0xb0] sm:$0xff]
        %v2209 = vld [vmem:[#allocation10 + $0xb8] sm:$0xff]
        %v2210 = vld [vmem:[#allocation10 + $0xc0] sm:$0xff]
        %v2211 = vld [vmem:[#allocation10 + $0xc8] sm:$0xff]
        %v2212 = vld [vmem:[#allocation10 + $0xd0] sm:$0xff]
        %v2213 = vld [vmem:[#allocation10 + $0xd8] sm:$0xff]
        %v2214 = vld [vmem:[#allocation10 + $0xe0] sm:$0xff]
        %v2215 = vld [vmem:[#allocation10 + $0xe8] sm:$0xff]
        %v2216 = vld [vmem:[#allocation10 + $0xf0] sm:$0xff]
        %v2217 = vld [vmem:[#allocation10 + $0xf8] sm:$0xff]
        %v2218 = vld [vmem:[#allocation10 + $0x100] sm:$0xff]
        %v2219 = vld [vmem:[#allocation10 + $0x108] sm:$0xff]
        %v2220 = vld [vmem:[#allocation10 + $0x110] sm:$0xff]
        %v2221 = vld [vmem:[#allocation10 + $0x118] sm:$0xff]
        %v2222 = vld [vmem:[#allocation10 + $0x120] sm:$0xff]
        %v2223 = vld [vmem:[#allocation10 + $0x128] sm:$0xff]
        %v2224 = vld [vmem:[#allocation10 + $0x130] sm:$0xff]
        %v2225 = vld [vmem:[#allocation10 + $0x138] sm:$0xff]
        %v2226 = vld [vmem:[#allocation10 + $0x140] sm:$0xff]
        %v2227 = vld [vmem:[#allocation10 + $0x148] sm:$0xff]
        %v2228 = vld [vmem:[#allocation10 + $0x150] sm:$0xff]
        %v2229 = vld [vmem:[#allocation10 + $0x158] sm:$0xff]
        %v2230 = vld [vmem:[#allocation10 + $0x160] sm:$0xff]
        %v2231 = vld [vmem:[#allocation10 + $0x168] sm:$0xff]
        %v2232 = vld [vmem:[#allocation10 + $0x170] sm:$0xff]
        %v2233 = vld [vmem:[#allocation10 + $0x178] sm:$0xff]
        %v2234 = vld [vmem:[#allocation10 + $0x180] sm:$0xff]
        %v2235 = vld [vmem:[#allocation10 + $0x188] sm:$0xff]
        %v2236 = vld [vmem:[#allocation10 + $0x190] sm:$0xff]
        %v2237 = vld [vmem:[#allocation10 + $0x198] sm:$0xff]
        %v2238 = vld [vmem:[#allocation10 + $0x1a0] sm:$0xff]
        %v2239 = vld [vmem:[#allocation10 + $0x1a8] sm:$0xff]
        %v2240 = vld [vmem:[#allocation10 + $0x1b0] sm:$0xff]
        %v2241 = vld [vmem:[#allocation10 + $0x1b8] sm:$0xff]
        %v2242 = vld [vmem:[#allocation10 + $0x1c0] sm:$0xff]
        %v2243 = vld [vmem:[#allocation10 + $0x1c8] sm:$0xff]
        %v2244 = vld [vmem:[#allocation10 + $0x1d0] sm:$0xff]
        %v2245 = vld [vmem:[#allocation10 + $0x1d8] sm:$0xff]
        %v2246 = vld [vmem:[#allocation10 + $0x1e0] sm:$0xff]
        %v2247 = vld [vmem:[#allocation10 + $0x1e8] sm:$0xff]
        %v2248 = vld [vmem:[#allocation10 + $0x1f0] sm:$0xff]
        %v2249 = vld [vmem:[#allocation10 + $0x1f8] sm:$0xff]
        %v2250 = vld [vmem:[%s11] sm:$0xff]
        %v2252 = vlaneseq
        %v2253 = vshrl.u32 %v2252, 7
        %v2254 = vsub.s32 0, %v2253
        %v2255 = vrot.slane %v2250, %v2254
        %v2256 = vlaneseq
        %v2257 = vshrl.u32 %v2256, 7
        %v2258 = vsub.s32 1, %v2257
        %v2259 = vrot.slane %v2250, %v2258
        %v2260 = vlaneseq
        %v2261 = vshrl.u32 %v2260, 7
        %v2262 = vsub.s32 2, %v2261
        %v2263 = vrot.slane %v2250, %v2262
        %v2264 = vlaneseq
        %v2265 = vshrl.u32 %v2264, 7
        %v2266 = vsub.s32 3, %v2265
        %v2267 = vrot.slane %v2250, %v2266
        %v2268 = vlaneseq
        %v2269 = vshrl.u32 %v2268, 7
        %v2270 = vsub.s32 4, %v2269
        %v2271 = vrot.slane %v2250, %v2270
        %v2272 = vlaneseq
        %v2273 = vshrl.u32 %v2272, 7
        %v2274 = vsub.s32 5, %v2273
        %v2275 = vrot.slane %v2250, %v2274
        %v2276 = vlaneseq
        %v2277 = vshrl.u32 %v2276, 7
        %v2278 = vsub.s32 6, %v2277
        %v2279 = vrot.slane %v2250, %v2278
        %v2280 = vlaneseq
        %v2281 = vshrl.u32 %v2280, 7
        %v2282 = vsub.s32 7, %v2281
        %v2283 = vrot.slane %v2250, %v2282
        %v2356 = vunpack.c.l.b16 %v2186
        %v2357 = vunpack.c.h.b16 %v2186
        %v2358 = vunpack.c.l.b16 %v2187
        %v2359 = vunpack.c.h.b16 %v2187
        %v2360 = vunpack.c.l.b16 %v2188
        %v2361 = vunpack.c.h.b16 %v2188
        %v2362 = vunpack.c.l.b16 %v2189
        %v2363 = vunpack.c.h.b16 %v2189
        %v2364 = vunpack.c.l.b16 %v2190
        %v2365 = vunpack.c.h.b16 %v2190
        %v2366 = vunpack.c.l.b16 %v2191
        %v2367 = vunpack.c.h.b16 %v2191
        %v2368 = vunpack.c.l.b16 %v2192
        %v2369 = vunpack.c.h.b16 %v2192
        %v2370 = vunpack.c.l.b16 %v2193
        %v2371 = vunpack.c.h.b16 %v2193
        %v2372 = vunpack.c.l.b16 %v2194
        %v2373 = vunpack.c.h.b16 %v2194
        %v2374 = vunpack.c.l.b16 %v2195
        %v2375 = vunpack.c.h.b16 %v2195
        %v2376 = vunpack.c.l.b16 %v2196
        %v2377 = vunpack.c.h.b16 %v2196
        %v2378 = vunpack.c.l.b16 %v2197
        %v2379 = vunpack.c.h.b16 %v2197
        %v2380 = vunpack.c.l.b16 %v2198
        %v2381 = vunpack.c.h.b16 %v2198
        %v2382 = vunpack.c.l.b16 %v2199
        %v2383 = vunpack.c.h.b16 %v2199
        %v2384 = vunpack.c.l.b16 %v2200
        %v2385 = vunpack.c.h.b16 %v2200
        %v2386 = vunpack.c.l.b16 %v2201
        %v2387 = vunpack.c.h.b16 %v2201
        %v2388 = vunpack.c.l.b16 %v2202
        %v2389 = vunpack.c.h.b16 %v2202
        %v2390 = vunpack.c.l.b16 %v2203
        %v2391 = vunpack.c.h.b16 %v2203
        %v2392 = vunpack.c.l.b16 %v2204
        %v2393 = vunpack.c.h.b16 %v2204
        %v2394 = vunpack.c.l.b16 %v2205
        %v2395 = vunpack.c.h.b16 %v2205
        %v2396 = vunpack.c.l.b16 %v2206
        %v2397 = vunpack.c.h.b16 %v2206
        %v2398 = vunpack.c.l.b16 %v2207
        %v2399 = vunpack.c.h.b16 %v2207
        %v2400 = vunpack.c.l.b16 %v2208
        %v2401 = vunpack.c.h.b16 %v2208
        %v2402 = vunpack.c.l.b16 %v2209
        %v2403 = vunpack.c.h.b16 %v2209
        %v2404 = vunpack.c.l.b16 %v2210
        %v2405 = vunpack.c.h.b16 %v2210
        %v2406 = vunpack.c.l.b16 %v2211
        %v2407 = vunpack.c.h.b16 %v2211
        %v2408 = vunpack.c.l.b16 %v2212
        %v2409 = vunpack.c.h.b16 %v2212
        %v2410 = vunpack.c.l.b16 %v2213
        %v2411 = vunpack.c.h.b16 %v2213
        %v2412 = vunpack.c.l.b16 %v2214
        %v2413 = vunpack.c.h.b16 %v2214
        %v2414 = vunpack.c.l.b16 %v2215
        %v2415 = vunpack.c.h.b16 %v2215
        %v2416 = vunpack.c.l.b16 %v2216
        %v2417 = vunpack.c.h.b16 %v2216
        %v2418 = vunpack.c.l.b16 %v2217
        %v2419 = vunpack.c.h.b16 %v2217
        %v2420 = vunpack.c.l.b16 %v2218
        %v2421 = vunpack.c.h.b16 %v2218
        %v2422 = vunpack.c.l.b16 %v2219
        %v2423 = vunpack.c.h.b16 %v2219
        %v2424 = vunpack.c.l.b16 %v2220
        %v2425 = vunpack.c.h.b16 %v2220
        %v2426 = vunpack.c.l.b16 %v2221
        %v2427 = vunpack.c.h.b16 %v2221
        %v2428 = vunpack.c.l.b16 %v2222
        %v2429 = vunpack.c.h.b16 %v2222
        %v2430 = vunpack.c.l.b16 %v2223
        %v2431 = vunpack.c.h.b16 %v2223
        %v2432 = vunpack.c.l.b16 %v2224
        %v2433 = vunpack.c.h.b16 %v2224
        %v2434 = vunpack.c.l.b16 %v2225
        %v2435 = vunpack.c.h.b16 %v2225
        %v2436 = vunpack.c.l.b16 %v2226
        %v2437 = vunpack.c.h.b16 %v2226
        %v2438 = vunpack.c.l.b16 %v2227
        %v2439 = vunpack.c.h.b16 %v2227
        %v2440 = vunpack.c.l.b16 %v2228
        %v2441 = vunpack.c.h.b16 %v2228
        %v2442 = vunpack.c.l.b16 %v2229
        %v2443 = vunpack.c.h.b16 %v2229
        %v2444 = vunpack.c.l.b16 %v2230
        %v2445 = vunpack.c.h.b16 %v2230
        %v2446 = vunpack.c.l.b16 %v2231
        %v2447 = vunpack.c.h.b16 %v2231
        %v2448 = vunpack.c.l.b16 %v2232
        %v2449 = vunpack.c.h.b16 %v2232
        %v2450 = vunpack.c.l.b16 %v2233
        %v2451 = vunpack.c.h.b16 %v2233
        %v2452 = vunpack.c.l.b16 %v2234
        %v2453 = vunpack.c.h.b16 %v2234
        %v2454 = vunpack.c.l.b16 %v2235
        %v2455 = vunpack.c.h.b16 %v2235
        %v2456 = vunpack.c.l.b16 %v2236
        %v2457 = vunpack.c.h.b16 %v2236
        %v2458 = vunpack.c.l.b16 %v2237
        %v2459 = vunpack.c.h.b16 %v2237
        %v2460 = vunpack.c.l.b16 %v2238
        %v2461 = vunpack.c.h.b16 %v2238
        %v2462 = vunpack.c.l.b16 %v2239
        %v2463 = vunpack.c.h.b16 %v2239
        %v2464 = vunpack.c.l.b16 %v2240
        %v2465 = vunpack.c.h.b16 %v2240
        %v2466 = vunpack.c.l.b16 %v2241
        %v2467 = vunpack.c.h.b16 %v2241
        %v2468 = vunpack.c.l.b16 %v2242
        %v2469 = vunpack.c.h.b16 %v2242
        %v2470 = vunpack.c.l.b16 %v2243
        %v2471 = vunpack.c.h.b16 %v2243
        %v2472 = vunpack.c.l.b16 %v2244
        %v2473 = vunpack.c.h.b16 %v2244
        %v2474 = vunpack.c.l.b16 %v2245
        %v2475 = vunpack.c.h.b16 %v2245
        %v2476 = vunpack.c.l.b16 %v2246
        %v2477 = vunpack.c.h.b16 %v2246
        %v2478 = vunpack.c.l.b16 %v2247
        %v2479 = vunpack.c.h.b16 %v2247
        %v2480 = vunpack.c.l.b16 %v2248
        %v2481 = vunpack.c.h.b16 %v2248
        %v2482 = vunpack.c.l.b16 %v2249
        %v2483 = vunpack.c.h.b16 %v2249
        %v2484 = vpack.c.b16 %v2364, %v2356
        %v2485 = vpack.c.b16 %v2365, %v2357
        %v2486 = vpack.c.b16 %v2366, %v2358
        %v2487 = vpack.c.b16 %v2367, %v2359
        %v2488 = vpack.c.b16 %v2368, %v2360
        %v2489 = vpack.c.b16 %v2369, %v2361
        %v2490 = vpack.c.b16 %v2370, %v2362
        %v2491 = vpack.c.b16 %v2371, %v2363
        %v2492 = vpack.c.b16 %v2380, %v2372
        %v2493 = vpack.c.b16 %v2381, %v2373
        %v2494 = vpack.c.b16 %v2382, %v2374
        %v2495 = vpack.c.b16 %v2383, %v2375
        %v2496 = vpack.c.b16 %v2384, %v2376
        %v2497 = vpack.c.b16 %v2385, %v2377
        %v2498 = vpack.c.b16 %v2386, %v2378
        %v2499 = vpack.c.b16 %v2387, %v2379
        %v2500 = vpack.c.b16 %v2396, %v2388
        %v2501 = vpack.c.b16 %v2397, %v2389
        %v2502 = vpack.c.b16 %v2398, %v2390
        %v2503 = vpack.c.b16 %v2399, %v2391
        %v2504 = vpack.c.b16 %v2400, %v2392
        %v2505 = vpack.c.b16 %v2401, %v2393
        %v2506 = vpack.c.b16 %v2402, %v2394
        %v2507 = vpack.c.b16 %v2403, %v2395
        %v2508 = vpack.c.b16 %v2412, %v2404
        %v2509 = vpack.c.b16 %v2413, %v2405
        %v2510 = vpack.c.b16 %v2414, %v2406
        %v2511 = vpack.c.b16 %v2415, %v2407
        %v2512 = vpack.c.b16 %v2416, %v2408
        %v2513 = vpack.c.b16 %v2417, %v2409
        %v2514 = vpack.c.b16 %v2418, %v2410
        %v2515 = vpack.c.b16 %v2419, %v2411
        %v2516 = vpack.c.b16 %v2428, %v2420
        %v2517 = vpack.c.b16 %v2429, %v2421
        %v2518 = vpack.c.b16 %v2430, %v2422
        %v2519 = vpack.c.b16 %v2431, %v2423
        %v2520 = vpack.c.b16 %v2432, %v2424
        %v2521 = vpack.c.b16 %v2433, %v2425
        %v2522 = vpack.c.b16 %v2434, %v2426
        %v2523 = vpack.c.b16 %v2435, %v2427
        %v2524 = vpack.c.b16 %v2444, %v2436
        %v2525 = vpack.c.b16 %v2445, %v2437
        %v2526 = vpack.c.b16 %v2446, %v2438
        %v2527 = vpack.c.b16 %v2447, %v2439
        %v2528 = vpack.c.b16 %v2448, %v2440
        %v2529 = vpack.c.b16 %v2449, %v2441
        %v2530 = vpack.c.b16 %v2450, %v2442
        %v2531 = vpack.c.b16 %v2451, %v2443
        %v2532 = vpack.c.b16 %v2460, %v2452
        %v2533 = vpack.c.b16 %v2461, %v2453
        %v2534 = vpack.c.b16 %v2462, %v2454
        %v2535 = vpack.c.b16 %v2463, %v2455
        %v2536 = vpack.c.b16 %v2464, %v2456
        %v2537 = vpack.c.b16 %v2465, %v2457
        %v2538 = vpack.c.b16 %v2466, %v2458
        %v2539 = vpack.c.b16 %v2467, %v2459
        %v2540 = vpack.c.b16 %v2476, %v2468
        %v2541 = vpack.c.b16 %v2477, %v2469
        %v2542 = vpack.c.b16 %v2478, %v2470
        %v2543 = vpack.c.b16 %v2479, %v2471
        %v2544 = vpack.c.b16 %v2480, %v2472
        %v2545 = vpack.c.b16 %v2481, %v2473
        %v2546 = vpack.c.b16 %v2482, %v2474
        %v2547 = vpack.c.b16 %v2483, %v2475
        %2612 = vmatprep.subr.bf16.mxu0 %v2541
        %2613 = vmatpush1.bf16.msra.mxu0 %v2540
        %2614 = vmatprep.subr.bf16.mxu0 %v2533
        %2615 = vmatpush1.bf16.msra.mxu0 %v2532
        %2616 = vmatprep.subr.bf16.mxu0 %v2525
        %2617 = vmatpush1.bf16.msra.mxu0 %v2524
        %2618 = vmatprep.subr.bf16.mxu0 %v2517
        %2619 = vmatpush1.bf16.msra.mxu0 %v2516
        %2620 = vmatprep.subr.bf16.mxu0 %v2509
        %2621 = vmatpush1.bf16.msra.mxu0 %v2508
        %2622 = vmatprep.subr.bf16.mxu0 %v2501
        %2623 = vmatpush1.bf16.msra.mxu0 %v2500
        %2624 = vmatprep.subr.bf16.mxu0 %v2493
        %2625 = vmatpush1.bf16.msra.mxu0 %v2492
        %2626 = vmatprep.subr.bf16.mxu0 %v2485
        %2627 = vmatpush1.bf16.msra.mxu0 %v2484
        %2628 = vmatprep.subr.bf16.mxu0 0
        %2629 = vmatpush2.bf16.msra.mxu0 0
        %2630 = vmatprep.subr.bf16.mxu0 0
        %2631 = vmatpush2.bf16.msra.mxu0 0
        %2632 = vmatprep.subr.bf16.mxu0 0
        %2633 = vmatpush2.bf16.msra.mxu0 0
        %2634 = vmatprep.subr.bf16.mxu0 0
        %2635 = vmatpush2.bf16.msra.mxu0 0
        %2636 = vmatprep.subr.bf16.mxu0 0
        %2637 = vmatpush2.bf16.msra.mxu0 0
        %2638 = vmatprep.subr.bf16.mxu0 0
        %2639 = vmatpush2.bf16.msra.mxu0 0
        %2640 = vmatprep.subr.bf16.mxu0 0
        %2641 = vmatpush2.bf16.msra.mxu0 0
        %2642 = vmatprep.subr.bf16.mxu0 0
        %2643 = vmatpush2.bf16.msra.mxu0 0
        %2644 = vmatprep.mubr.bf16.mxu0 0
        %2645 = vmatmul.mubr.bf16.gmra.mxu0 %v2185
        %v2646 = vpop.f32.mrf.mxu0
        %v2647 = vadd.f32 %v2255, %v2646
        %v2648 = vpop.f32.mrf.mxu0
        %v2649 = vadd.f32 %v2259, %v2648
        %v2650 = vpop.f32.mrf.mxu0
        %v2651 = vpop.f32.mrf.mxu0
        %2652 = vdwg.mxu0
        %2653 = vmatprep.subr.bf16.mxu0 %v2543
        %2654 = vmatpush1.bf16.msra.mxu0 %v2542
        %2655 = vmatprep.subr.bf16.mxu0 %v2535
        %2656 = vmatpush1.bf16.msra.mxu0 %v2534
        %2657 = vmatprep.subr.bf16.mxu0 %v2527
        %2658 = vmatpush1.bf16.msra.mxu0 %v2526
        %2659 = vmatprep.subr.bf16.mxu0 %v2519
        %2660 = vmatpush1.bf16.msra.mxu0 %v2518
        %2661 = vmatprep.subr.bf16.mxu0 %v2511
        %2662 = vmatpush1.bf16.msra.mxu0 %v2510
        %2663 = vmatprep.subr.bf16.mxu0 %v2503
        %2664 = vmatpush1.bf16.msra.mxu0 %v2502
        %2665 = vmatprep.subr.bf16.mxu0 %v2495
        %2666 = vmatpush1.bf16.msra.mxu0 %v2494
        %2667 = vmatprep.subr.bf16.mxu0 %v2487
        %2668 = vmatpush1.bf16.msra.mxu0 %v2486
        %2669 = vmatprep.subr.bf16.mxu0 0
        %2670 = vmatpush2.bf16.msra.mxu0 0
        %2671 = vmatprep.subr.bf16.mxu0 0
        %2672 = vmatpush2.bf16.msra.mxu0 0
        %2673 = vmatprep.subr.bf16.mxu0 0
        %2674 = vmatpush2.bf16.msra.mxu0 0
        %2675 = vmatprep.subr.bf16.mxu0 0
        %2676 = vmatpush2.bf16.msra.mxu0 0
        %2677 = vmatprep.subr.bf16.mxu0 0
        %2678 = vmatpush2.bf16.msra.mxu0 0
        %2679 = vmatprep.subr.bf16.mxu0 0
        %2680 = vmatpush2.bf16.msra.mxu0 0
        %2681 = vmatprep.subr.bf16.mxu0 0
        %2682 = vmatpush2.bf16.msra.mxu0 0
        %2683 = vmatprep.subr.bf16.mxu0 0
        %2684 = vmatpush2.bf16.msra.mxu0 0
        %2685 = vmatprep.mubr.bf16.mxu0 0
        %2686 = vmatmul.mubr.bf16.gmra.mxu0 %v2185
        %v2687 = vpop.f32.mrf.mxu0
        %v2688 = vadd.f32 %v2263, %v2687
        %v2689 = vpop.f32.mrf.mxu0
        %v2690 = vadd.f32 %v2267, %v2689
        %v2691 = vpop.f32.mrf.mxu0
        %v2692 = vpop.f32.mrf.mxu0
        %2693 = vdwg.mxu0
        %2694 = vmatprep.subr.bf16.mxu0 %v2545
        %2695 = vmatpush1.bf16.msra.mxu0 %v2544
        %2696 = vmatprep.subr.bf16.mxu0 %v2537
        %2697 = vmatpush1.bf16.msra.mxu0 %v2536
        %2698 = vmatprep.subr.bf16.mxu0 %v2529
        %2699 = vmatpush1.bf16.msra.mxu0 %v2528
        %2700 = vmatprep.subr.bf16.mxu0 %v2521
        %2701 = vmatpush1.bf16.msra.mxu0 %v2520
        %2702 = vmatprep.subr.bf16.mxu0 %v2513
        %2703 = vmatpush1.bf16.msra.mxu0 %v2512
        %2704 = vmatprep.subr.bf16.mxu0 %v2505
        %2705 = vmatpush1.bf16.msra.mxu0 %v2504
        %2706 = vmatprep.subr.bf16.mxu0 %v2497
        %2707 = vmatpush1.bf16.msra.mxu0 %v2496
        %2708 = vmatprep.subr.bf16.mxu0 %v2489
        %2709 = vmatpush1.bf16.msra.mxu0 %v2488
        %2710 = vmatprep.subr.bf16.mxu0 0
        %2711 = vmatpush2.bf16.msra.mxu0 0
        %2712 = vmatprep.subr.bf16.mxu0 0
        %2713 = vmatpush2.bf16.msra.mxu0 0
        %2714 = vmatprep.subr.bf16.mxu0 0
        %2715 = vmatpush2.bf16.msra.mxu0 0
        %2716 = vmatprep.subr.bf16.mxu0 0
        %2717 = vmatpush2.bf16.msra.mxu0 0
        %2718 = vmatprep.subr.bf16.mxu0 0
        %2719 = vmatpush2.bf16.msra.mxu0 0
        %2720 = vmatprep.subr.bf16.mxu0 0
        %2721 = vmatpush2.bf16.msra.mxu0 0
        %2722 = vmatprep.subr.bf16.mxu0 0
        %2723 = vmatpush2.bf16.msra.mxu0 0
        %2724 = vmatprep.subr.bf16.mxu0 0
        %2725 = vmatpush2.bf16.msra.mxu0 0
        %2726 = vmatprep.mubr.bf16.mxu0 0
        %2727 = vmatmul.mubr.bf16.gmra.mxu0 %v2185
        %v2728 = vpop.f32.mrf.mxu0
        %v2729 = vadd.f32 %v2271, %v2728
        %v2730 = vpop.f32.mrf.mxu0
        %v2731 = vadd.f32 %v2275, %v2730
        %v2732 = vpop.f32.mrf.mxu0
        %v2733 = vpop.f32.mrf.mxu0
        %2734 = vdwg.mxu0
        %2735 = vmatprep.subr.bf16.mxu0 %v2547
        %2736 = vmatpush1.bf16.msra.mxu0 %v2546
        %2737 = vmatprep.subr.bf16.mxu0 %v2539
        %2738 = vmatpush1.bf16.msra.mxu0 %v2538
        %2739 = vmatprep.subr.bf16.mxu0 %v2531
        %2740 = vmatpush1.bf16.msra.mxu0 %v2530
        %2741 = vmatprep.subr.bf16.mxu0 %v2523
        %2742 = vmatpush1.bf16.msra.mxu0 %v2522
        %2743 = vmatprep.subr.bf16.mxu0 %v2515
        %2744 = vmatpush1.bf16.msra.mxu0 %v2514
        %2745 = vmatprep.subr.bf16.mxu0 %v2507
        %2746 = vmatpush1.bf16.msra.mxu0 %v2506
        %2747 = vmatprep.subr.bf16.mxu0 %v2499
        %2748 = vmatpush1.bf16.msra.mxu0 %v2498
        %2749 = vmatprep.subr.bf16.mxu0 %v2491
        %2750 = vmatpush1.bf16.msra.mxu0 %v2490
        %2751 = vmatprep.subr.bf16.mxu0 0
        %2752 = vmatpush2.bf16.msra.mxu0 0
        %2753 = vmatprep.subr.bf16.mxu0 0
        %2754 = vmatpush2.bf16.msra.mxu0 0
        %2755 = vmatprep.subr.bf16.mxu0 0
        %2756 = vmatpush2.bf16.msra.mxu0 0
        %2757 = vmatprep.subr.bf16.mxu0 0
        %2758 = vmatpush2.bf16.msra.mxu0 0
        %2759 = vmatprep.subr.bf16.mxu0 0
        %2760 = vmatpush2.bf16.msra.mxu0 0
        %2761 = vmatprep.subr.bf16.mxu0 0
        %2762 = vmatpush2.bf16.msra.mxu0 0
        %2763 = vmatprep.subr.bf16.mxu0 0
        %2764 = vmatpush2.bf16.msra.mxu0 0
        %2765 = vmatprep.subr.bf16.mxu0 0
        %2766 = vmatpush2.bf16.msra.mxu0 0
        %2767 = vmatprep.mubr.bf16.mxu0 0
        %2768 = vmatmul.mubr.bf16.gmra.mxu0 %v2185
        %v2769 = vpop.f32.mrf.mxu0
        %v2770 = vadd.f32 %v2279, %v2769
        %v2771 = vpop.f32.mrf.mxu0
        %v2772 = vadd.f32 %v2283, %v2771
        %v2773 = vpop.f32.mrf.mxu0
        %v2774 = vpop.f32.mrf.mxu0
        %2775 = vdwg.mxu0
        %v2776 = vmax.f32 %v2647, 0.0
        %v2777 = vmax.f32 %v2649, 0.0
        %v2778 = vmax.f32 %v2688, 0.0
        %v2779 = vmax.f32 %v2690, 0.0
        %v2780 = vmax.f32 %v2729, 0.0
        %v2781 = vmax.f32 %v2731, 0.0
        %v2782 = vmax.f32 %v2770, 0.0
        %v2783 = vmax.f32 %v2772, 0.0
        %v2784 = vpack.c.bf16 %v2776, %v2776
        %v2785 = vpack.c.bf16 %v2777, %v2777
        %v2786 = vpack.c.bf16 %v2778, %v2778
        %v2787 = vpack.c.bf16 %v2779, %v2779
        %v2788 = vpack.c.bf16 %v2780, %v2780
        %v2789 = vpack.c.bf16 %v2781, %v2781
        %v2790 = vpack.c.bf16 %v2782, %v2782
        %v2791 = vpack.c.bf16 %v2783, %v2783
        %v2792 = vld [vmem:[#allocation11] sm:$0xf]
        %v2793 = vld [vmem:[#allocation11 + $0x4] sm:$0xf]
        %v2794 = vld [vmem:[#allocation11 + $0x8] sm:$0xf]
        %v2795 = vld [vmem:[#allocation11 + $0xc] sm:$0xf]
        %v2796 = vld [vmem:[#allocation11 + $0x10] sm:$0xf]
        %v2797 = vld [vmem:[#allocation11 + $0x14] sm:$0xf]
        %v2798 = vld [vmem:[#allocation11 + $0x18] sm:$0xf]
        %v2799 = vld [vmem:[#allocation11 + $0x1c] sm:$0xf]
        %v2800 = vld [vmem:[#allocation11 + $0x20] sm:$0xf]
        %v2801 = vld [vmem:[#allocation11 + $0x24] sm:$0xf]
        %v2802 = vld [vmem:[#allocation11 + $0x28] sm:$0xf]
        %v2803 = vld [vmem:[#allocation11 + $0x2c] sm:$0xf]
        %v2804 = vld [vmem:[#allocation11 + $0x30] sm:$0xf]
        %v2805 = vld [vmem:[#allocation11 + $0x34] sm:$0xf]
        %v2806 = vld [vmem:[#allocation11 + $0x38] sm:$0xf]
        %v2807 = vld [vmem:[#allocation11 + $0x3c] sm:$0xf]
        %v2808 = vld [vmem:[#allocation11 + $0x40] sm:$0xf]
        %v2809 = vld [vmem:[#allocation11 + $0x44] sm:$0xf]
        %v2810 = vld [vmem:[#allocation11 + $0x48] sm:$0xf]
        %v2811 = vld [vmem:[#allocation11 + $0x4c] sm:$0xf]
        %v2812 = vld [vmem:[#allocation11 + $0x50] sm:$0xf]
        %v2813 = vld [vmem:[#allocation11 + $0x54] sm:$0xf]
        %v2814 = vld [vmem:[#allocation11 + $0x58] sm:$0xf]
        %v2815 = vld [vmem:[#allocation11 + $0x5c] sm:$0xf]
        %v2816 = vld [vmem:[#allocation11 + $0x60] sm:$0xf]
        %v2817 = vld [vmem:[#allocation11 + $0x64] sm:$0xf]
        %v2818 = vld [vmem:[#allocation11 + $0x68] sm:$0xf]
        %v2819 = vld [vmem:[#allocation11 + $0x6c] sm:$0xf]
        %v2820 = vld [vmem:[#allocation11 + $0x70] sm:$0xf]
        %v2821 = vld [vmem:[#allocation11 + $0x74] sm:$0xf]
        %v2822 = vld [vmem:[#allocation11 + $0x78] sm:$0xf]
        %v2823 = vld [vmem:[#allocation11 + $0x7c] sm:$0xf]
        %v2824 = vld [vmem:[#allocation11 + $0x80] sm:$0xf]
        %v2825 = vld [vmem:[#allocation11 + $0x84] sm:$0xf]
        %v2826 = vld [vmem:[#allocation11 + $0x88] sm:$0xf]
        %v2827 = vld [vmem:[#allocation11 + $0x8c] sm:$0xf]
        %v2828 = vld [vmem:[#allocation11 + $0x90] sm:$0xf]
        %v2829 = vld [vmem:[#allocation11 + $0x94] sm:$0xf]
        %v2830 = vld [vmem:[#allocation11 + $0x98] sm:$0xf]
        %v2831 = vld [vmem:[#allocation11 + $0x9c] sm:$0xf]
        %v2832 = vld [vmem:[#allocation11 + $0xa0] sm:$0xf]
        %v2833 = vld [vmem:[#allocation11 + $0xa4] sm:$0xf]
        %v2834 = vld [vmem:[#allocation11 + $0xa8] sm:$0xf]
        %v2835 = vld [vmem:[#allocation11 + $0xac] sm:$0xf]
        %v2836 = vld [vmem:[#allocation11 + $0xb0] sm:$0xf]
        %v2837 = vld [vmem:[#allocation11 + $0xb4] sm:$0xf]
        %v2838 = vld [vmem:[#allocation11 + $0xb8] sm:$0xf]
        %v2839 = vld [vmem:[#allocation11 + $0xbc] sm:$0xf]
        %v2840 = vld [vmem:[#allocation11 + $0xc0] sm:$0xf]
        %v2841 = vld [vmem:[#allocation11 + $0xc4] sm:$0xf]
        %v2842 = vld [vmem:[#allocation11 + $0xc8] sm:$0xf]
        %v2843 = vld [vmem:[#allocation11 + $0xcc] sm:$0xf]
        %v2844 = vld [vmem:[#allocation11 + $0xd0] sm:$0xf]
        %v2845 = vld [vmem:[#allocation11 + $0xd4] sm:$0xf]
        %v2846 = vld [vmem:[#allocation11 + $0xd8] sm:$0xf]
        %v2847 = vld [vmem:[#allocation11 + $0xdc] sm:$0xf]
        %v2848 = vld [vmem:[#allocation11 + $0xe0] sm:$0xf]
        %v2849 = vld [vmem:[#allocation11 + $0xe4] sm:$0xf]
        %v2850 = vld [vmem:[#allocation11 + $0xe8] sm:$0xf]
        %v2851 = vld [vmem:[#allocation11 + $0xec] sm:$0xf]
        %v2852 = vld [vmem:[#allocation11 + $0xf0] sm:$0xf]
        %v2853 = vld [vmem:[#allocation11 + $0xf4] sm:$0xf]
        %v2854 = vld [vmem:[#allocation11 + $0xf8] sm:$0xf]
        %v2855 = vld [vmem:[#allocation11 + $0xfc] sm:$0xf]
        %v2856 = vld [vmem:[#allocation11 + $0x100] sm:$0xf]
        %v2857 = vld [vmem:[#allocation11 + $0x104] sm:$0xf]
        %v2858 = vld [vmem:[#allocation11 + $0x108] sm:$0xf]
        %v2859 = vld [vmem:[#allocation11 + $0x10c] sm:$0xf]
        %v2860 = vld [vmem:[#allocation11 + $0x110] sm:$0xf]
        %v2861 = vld [vmem:[#allocation11 + $0x114] sm:$0xf]
        %v2862 = vld [vmem:[#allocation11 + $0x118] sm:$0xf]
        %v2863 = vld [vmem:[#allocation11 + $0x11c] sm:$0xf]
        %v2864 = vld [vmem:[#allocation11 + $0x120] sm:$0xf]
        %v2865 = vld [vmem:[#allocation11 + $0x124] sm:$0xf]
        %v2866 = vld [vmem:[#allocation11 + $0x128] sm:$0xf]
        %v2867 = vld [vmem:[#allocation11 + $0x12c] sm:$0xf]
        %v2868 = vld [vmem:[#allocation11 + $0x130] sm:$0xf]
        %v2869 = vld [vmem:[#allocation11 + $0x134] sm:$0xf]
        %v2870 = vld [vmem:[#allocation11 + $0x138] sm:$0xf]
        %v2871 = vld [vmem:[#allocation11 + $0x13c] sm:$0xf]
        %v2872 = vld [vmem:[#allocation11 + $0x140] sm:$0xf]
        %v2873 = vld [vmem:[#allocation11 + $0x144] sm:$0xf]
        %v2874 = vld [vmem:[#allocation11 + $0x148] sm:$0xf]
        %v2875 = vld [vmem:[#allocation11 + $0x14c] sm:$0xf]
        %v2876 = vld [vmem:[#allocation11 + $0x150] sm:$0xf]
        %v2877 = vld [vmem:[#allocation11 + $0x154] sm:$0xf]
        %v2878 = vld [vmem:[#allocation11 + $0x158] sm:$0xf]
        %v2879 = vld [vmem:[#allocation11 + $0x15c] sm:$0xf]
        %v2880 = vld [vmem:[#allocation11 + $0x160] sm:$0xf]
        %v2881 = vld [vmem:[#allocation11 + $0x164] sm:$0xf]
        %v2882 = vld [vmem:[#allocation11 + $0x168] sm:$0xf]
        %v2883 = vld [vmem:[#allocation11 + $0x16c] sm:$0xf]
        %v2884 = vld [vmem:[#allocation11 + $0x170] sm:$0xf]
        %v2885 = vld [vmem:[#allocation11 + $0x174] sm:$0xf]
        %v2886 = vld [vmem:[#allocation11 + $0x178] sm:$0xf]
        %v2887 = vld [vmem:[#allocation11 + $0x17c] sm:$0xf]
        %v2888 = vld [vmem:[#allocation11 + $0x180] sm:$0xf]
        %v2889 = vld [vmem:[#allocation11 + $0x184] sm:$0xf]
        %v2890 = vld [vmem:[#allocation11 + $0x188] sm:$0xf]
        %v2891 = vld [vmem:[#allocation11 + $0x18c] sm:$0xf]
        %v2892 = vld [vmem:[#allocation11 + $0x190] sm:$0xf]
        %v2893 = vld [vmem:[#allocation11 + $0x194] sm:$0xf]
        %v2894 = vld [vmem:[#allocation11 + $0x198] sm:$0xf]
        %v2895 = vld [vmem:[#allocation11 + $0x19c] sm:$0xf]
        %v2896 = vld [vmem:[#allocation11 + $0x1a0] sm:$0xf]
        %v2897 = vld [vmem:[#allocation11 + $0x1a4] sm:$0xf]
        %v2898 = vld [vmem:[#allocation11 + $0x1a8] sm:$0xf]
        %v2899 = vld [vmem:[#allocation11 + $0x1ac] sm:$0xf]
        %v2900 = vld [vmem:[#allocation11 + $0x1b0] sm:$0xf]
        %v2901 = vld [vmem:[#allocation11 + $0x1b4] sm:$0xf]
        %v2902 = vld [vmem:[#allocation11 + $0x1b8] sm:$0xf]
        %v2903 = vld [vmem:[#allocation11 + $0x1bc] sm:$0xf]
        %v2904 = vld [vmem:[#allocation11 + $0x1c0] sm:$0xf]
        %v2905 = vld [vmem:[#allocation11 + $0x1c4] sm:$0xf]
        %v2906 = vld [vmem:[#allocation11 + $0x1c8] sm:$0xf]
        %v2907 = vld [vmem:[#allocation11 + $0x1cc] sm:$0xf]
        %v2908 = vld [vmem:[#allocation11 + $0x1d0] sm:$0xf]
        %v2909 = vld [vmem:[#allocation11 + $0x1d4] sm:$0xf]
        %v2910 = vld [vmem:[#allocation11 + $0x1d8] sm:$0xf]
        %v2911 = vld [vmem:[#allocation11 + $0x1dc] sm:$0xf]
        %v2912 = vld [vmem:[#allocation11 + $0x1e0] sm:$0xf]
        %v2913 = vld [vmem:[#allocation11 + $0x1e4] sm:$0xf]
        %v2914 = vld [vmem:[#allocation11 + $0x1e8] sm:$0xf]
        %v2915 = vld [vmem:[#allocation11 + $0x1ec] sm:$0xf]
        %v2916 = vld [vmem:[#allocation11 + $0x1f0] sm:$0xf]
        %v2917 = vld [vmem:[#allocation11 + $0x1f4] sm:$0xf]
        %v2918 = vld [vmem:[#allocation11 + $0x1f8] sm:$0xf]
        %v2919 = vld [vmem:[#allocation11 + $0x1fc] sm:$0xf]
        %v2920 = vld [vmem:[%s13] sm:$0x1]
        %v2922 = vlaneseq
        %v2923 = vshrl.u32 %v2922, 7
        %v2924 = vsub.s32 0, %v2923
        %v2925 = vrot.slane %v2920, %v2924
        %v3055 = vunpack.c.l.b16 %v2792
        %v3056 = vunpack.c.l.b16 %v2793
        %v3057 = vunpack.c.l.b16 %v2794
        %v3058 = vunpack.c.l.b16 %v2795
        %v3059 = vunpack.c.l.b16 %v2796
        %v3060 = vunpack.c.l.b16 %v2797
        %v3061 = vunpack.c.l.b16 %v2798
        %v3062 = vunpack.c.l.b16 %v2799
        %v3063 = vunpack.c.l.b16 %v2800
        %v3064 = vunpack.c.l.b16 %v2801
        %v3065 = vunpack.c.l.b16 %v2802
        %v3066 = vunpack.c.l.b16 %v2803
        %v3067 = vunpack.c.l.b16 %v2804
        %v3068 = vunpack.c.l.b16 %v2805
        %v3069 = vunpack.c.l.b16 %v2806
        %v3070 = vunpack.c.l.b16 %v2807
        %v3071 = vunpack.c.l.b16 %v2808
        %v3072 = vunpack.c.l.b16 %v2809
        %v3073 = vunpack.c.l.b16 %v2810
        %v3074 = vunpack.c.l.b16 %v2811
        %v3075 = vunpack.c.l.b16 %v2812
        %v3076 = vunpack.c.l.b16 %v2813
        %v3077 = vunpack.c.l.b16 %v2814
        %v3078 = vunpack.c.l.b16 %v2815
        %v3079 = vunpack.c.l.b16 %v2816
        %v3080 = vunpack.c.l.b16 %v2817
        %v3081 = vunpack.c.l.b16 %v2818
        %v3082 = vunpack.c.l.b16 %v2819
        %v3083 = vunpack.c.l.b16 %v2820
        %v3084 = vunpack.c.l.b16 %v2821
        %v3085 = vunpack.c.l.b16 %v2822
        %v3086 = vunpack.c.l.b16 %v2823
        %v3087 = vunpack.c.l.b16 %v2824
        %v3088 = vunpack.c.l.b16 %v2825
        %v3089 = vunpack.c.l.b16 %v2826
        %v3090 = vunpack.c.l.b16 %v2827
        %v3091 = vunpack.c.l.b16 %v2828
        %v3092 = vunpack.c.l.b16 %v2829
        %v3093 = vunpack.c.l.b16 %v2830
        %v3094 = vunpack.c.l.b16 %v2831
        %v3095 = vunpack.c.l.b16 %v2832
        %v3096 = vunpack.c.l.b16 %v2833
        %v3097 = vunpack.c.l.b16 %v2834
        %v3098 = vunpack.c.l.b16 %v2835
        %v3099 = vunpack.c.l.b16 %v2836
        %v3100 = vunpack.c.l.b16 %v2837
        %v3101 = vunpack.c.l.b16 %v2838
        %v3102 = vunpack.c.l.b16 %v2839
        %v3103 = vunpack.c.l.b16 %v2840
        %v3104 = vunpack.c.l.b16 %v2841
        %v3105 = vunpack.c.l.b16 %v2842
        %v3106 = vunpack.c.l.b16 %v2843
        %v3107 = vunpack.c.l.b16 %v2844
        %v3108 = vunpack.c.l.b16 %v2845
        %v3109 = vunpack.c.l.b16 %v2846
        %v3110 = vunpack.c.l.b16 %v2847
        %v3111 = vunpack.c.l.b16 %v2848
        %v3112 = vunpack.c.l.b16 %v2849
        %v3113 = vunpack.c.l.b16 %v2850
        %v3114 = vunpack.c.l.b16 %v2851
        %v3115 = vunpack.c.l.b16 %v2852
        %v3116 = vunpack.c.l.b16 %v2853
        %v3117 = vunpack.c.l.b16 %v2854
        %v3118 = vunpack.c.l.b16 %v2855
        %v3119 = vunpack.c.l.b16 %v2856
        %v3120 = vunpack.c.l.b16 %v2857
        %v3121 = vunpack.c.l.b16 %v2858
        %v3122 = vunpack.c.l.b16 %v2859
        %v3123 = vunpack.c.l.b16 %v2860
        %v3124 = vunpack.c.l.b16 %v2861
        %v3125 = vunpack.c.l.b16 %v2862
        %v3126 = vunpack.c.l.b16 %v2863
        %v3127 = vunpack.c.l.b16 %v2864
        %v3128 = vunpack.c.l.b16 %v2865
        %v3129 = vunpack.c.l.b16 %v2866
        %v3130 = vunpack.c.l.b16 %v2867
        %v3131 = vunpack.c.l.b16 %v2868
        %v3132 = vunpack.c.l.b16 %v2869
        %v3133 = vunpack.c.l.b16 %v2870
        %v3134 = vunpack.c.l.b16 %v2871
        %v3135 = vunpack.c.l.b16 %v2872
        %v3136 = vunpack.c.l.b16 %v2873
        %v3137 = vunpack.c.l.b16 %v2874
        %v3138 = vunpack.c.l.b16 %v2875
        %v3139 = vunpack.c.l.b16 %v2876
        %v3140 = vunpack.c.l.b16 %v2877
        %v3141 = vunpack.c.l.b16 %v2878
        %v3142 = vunpack.c.l.b16 %v2879
        %v3143 = vunpack.c.l.b16 %v2880
        %v3144 = vunpack.c.l.b16 %v2881
        %v3145 = vunpack.c.l.b16 %v2882
        %v3146 = vunpack.c.l.b16 %v2883
        %v3147 = vunpack.c.l.b16 %v2884
        %v3148 = vunpack.c.l.b16 %v2885
        %v3149 = vunpack.c.l.b16 %v2886
        %v3150 = vunpack.c.l.b16 %v2887
        %v3151 = vunpack.c.l.b16 %v2888
        %v3152 = vunpack.c.l.b16 %v2889
        %v3153 = vunpack.c.l.b16 %v2890
        %v3154 = vunpack.c.l.b16 %v2891
        %v3155 = vunpack.c.l.b16 %v2892
        %v3156 = vunpack.c.l.b16 %v2893
        %v3157 = vunpack.c.l.b16 %v2894
        %v3158 = vunpack.c.l.b16 %v2895
        %v3159 = vunpack.c.l.b16 %v2896
        %v3160 = vunpack.c.l.b16 %v2897
        %v3161 = vunpack.c.l.b16 %v2898
        %v3162 = vunpack.c.l.b16 %v2899
        %v3163 = vunpack.c.l.b16 %v2900
        %v3164 = vunpack.c.l.b16 %v2901
        %v3165 = vunpack.c.l.b16 %v2902
        %v3166 = vunpack.c.l.b16 %v2903
        %v3167 = vunpack.c.l.b16 %v2904
        %v3168 = vunpack.c.l.b16 %v2905
        %v3169 = vunpack.c.l.b16 %v2906
        %v3170 = vunpack.c.l.b16 %v2907
        %v3171 = vunpack.c.l.b16 %v2908
        %v3172 = vunpack.c.l.b16 %v2909
        %v3173 = vunpack.c.l.b16 %v2910
        %v3174 = vunpack.c.l.b16 %v2911
        %v3175 = vunpack.c.l.b16 %v2912
        %v3176 = vunpack.c.l.b16 %v2913
        %v3177 = vunpack.c.l.b16 %v2914
        %v3178 = vunpack.c.l.b16 %v2915
        %v3179 = vunpack.c.l.b16 %v2916
        %v3180 = vunpack.c.l.b16 %v2917
        %v3181 = vunpack.c.l.b16 %v2918
        %v3182 = vunpack.c.l.b16 %v2919
        %v3183 = vpack.c.b16 %v3056, %v3055
        %v3184 = vpack.c.b16 %v3058, %v3057
        %v3185 = vpack.c.b16 %v3060, %v3059
        %v3186 = vpack.c.b16 %v3062, %v3061
        %v3187 = vpack.c.b16 %v3064, %v3063
        %v3188 = vpack.c.b16 %v3066, %v3065
        %v3189 = vpack.c.b16 %v3068, %v3067
        %v3190 = vpack.c.b16 %v3070, %v3069
        %v3191 = vpack.c.b16 %v3072, %v3071
        %v3192 = vpack.c.b16 %v3074, %v3073
        %v3193 = vpack.c.b16 %v3076, %v3075
        %v3194 = vpack.c.b16 %v3078, %v3077
        %v3195 = vpack.c.b16 %v3080, %v3079
        %v3196 = vpack.c.b16 %v3082, %v3081
        %v3197 = vpack.c.b16 %v3084, %v3083
        %v3198 = vpack.c.b16 %v3086, %v3085
        %v3199 = vpack.c.b16 %v3088, %v3087
        %v3200 = vpack.c.b16 %v3090, %v3089
        %v3201 = vpack.c.b16 %v3092, %v3091
        %v3202 = vpack.c.b16 %v3094, %v3093
        %v3203 = vpack.c.b16 %v3096, %v3095
        %v3204 = vpack.c.b16 %v3098, %v3097
        %v3205 = vpack.c.b16 %v3100, %v3099
        %v3206 = vpack.c.b16 %v3102, %v3101
        %v3207 = vpack.c.b16 %v3104, %v3103
        %v3208 = vpack.c.b16 %v3106, %v3105
        %v3209 = vpack.c.b16 %v3108, %v3107
        %v3210 = vpack.c.b16 %v3110, %v3109
        %v3211 = vpack.c.b16 %v3112, %v3111
        %v3212 = vpack.c.b16 %v3114, %v3113
        %v3213 = vpack.c.b16 %v3116, %v3115
        %v3214 = vpack.c.b16 %v3118, %v3117
        %v3215 = vpack.c.b16 %v3120, %v3119
        %v3216 = vpack.c.b16 %v3122, %v3121
        %v3217 = vpack.c.b16 %v3124, %v3123
        %v3218 = vpack.c.b16 %v3126, %v3125
        %v3219 = vpack.c.b16 %v3128, %v3127
        %v3220 = vpack.c.b16 %v3130, %v3129
        %v3221 = vpack.c.b16 %v3132, %v3131
        %v3222 = vpack.c.b16 %v3134, %v3133
        %v3223 = vpack.c.b16 %v3136, %v3135
        %v3224 = vpack.c.b16 %v3138, %v3137
        %v3225 = vpack.c.b16 %v3140, %v3139
        %v3226 = vpack.c.b16 %v3142, %v3141
        %v3227 = vpack.c.b16 %v3144, %v3143
        %v3228 = vpack.c.b16 %v3146, %v3145
        %v3229 = vpack.c.b16 %v3148, %v3147
        %v3230 = vpack.c.b16 %v3150, %v3149
        %v3231 = vpack.c.b16 %v3152, %v3151
        %v3232 = vpack.c.b16 %v3154, %v3153
        %v3233 = vpack.c.b16 %v3156, %v3155
        %v3234 = vpack.c.b16 %v3158, %v3157
        %v3235 = vpack.c.b16 %v3160, %v3159
        %v3236 = vpack.c.b16 %v3162, %v3161
        %v3237 = vpack.c.b16 %v3164, %v3163
        %v3238 = vpack.c.b16 %v3166, %v3165
        %v3239 = vpack.c.b16 %v3168, %v3167
        %v3240 = vpack.c.b16 %v3170, %v3169
        %v3241 = vpack.c.b16 %v3172, %v3171
        %v3242 = vpack.c.b16 %v3174, %v3173
        %v3243 = vpack.c.b16 %v3176, %v3175
        %v3244 = vpack.c.b16 %v3178, %v3177
        %v3245 = vpack.c.b16 %v3180, %v3179
        %v3246 = vpack.c.b16 %v3182, %v3181
        %3311 = vmatprep.subr.bf16.mxu0 0
        %3312 = vmatpush1.bf16.msra.mxu0 %v3190
        %3313 = vmatprep.subr.bf16.mxu0 0
        %3314 = vmatpush1.bf16.msra.mxu0 %v3189
        %3315 = vmatprep.subr.bf16.mxu0 0
        %3316 = vmatpush1.bf16.msra.mxu0 %v3188
        %3317 = vmatprep.subr.bf16.mxu0 0
        %3318 = vmatpush1.bf16.msra.mxu0 %v3187
        %3319 = vmatprep.subr.bf16.mxu0 0
        %3320 = vmatpush1.bf16.msra.mxu0 %v3186
        %3321 = vmatprep.subr.bf16.mxu0 0
        %3322 = vmatpush1.bf16.msra.mxu0 %v3185
        %3323 = vmatprep.subr.bf16.mxu0 0
        %3324 = vmatpush1.bf16.msra.mxu0 %v3184
        %3325 = vmatprep.subr.bf16.mxu0 0
        %3326 = vmatpush1.bf16.msra.mxu0 %v3183
        %3327 = vmatprep.subr.bf16.mxu0 0
        %3328 = vmatpush2.bf16.msra.mxu0 %v3198
        %3329 = vmatprep.subr.bf16.mxu0 0
        %3330 = vmatpush2.bf16.msra.mxu0 %v3197
        %3331 = vmatprep.subr.bf16.mxu0 0
        %3332 = vmatpush2.bf16.msra.mxu0 %v3196
        %3333 = vmatprep.subr.bf16.mxu0 0
        %3334 = vmatpush2.bf16.msra.mxu0 %v3195
        %3335 = vmatprep.subr.bf16.mxu0 0
        %3336 = vmatpush2.bf16.msra.mxu0 %v3194
        %3337 = vmatprep.subr.bf16.mxu0 0
        %3338 = vmatpush2.bf16.msra.mxu0 %v3193
        %3339 = vmatprep.subr.bf16.mxu0 0
        %3340 = vmatpush2.bf16.msra.mxu0 %v3192
        %3341 = vmatprep.subr.bf16.mxu0 0
        %3342 = vmatpush2.bf16.msra.mxu0 %v3191
        %3343 = vmatprep.mubr.bf16.mxu0 %v2785
        %3344 = vmatmul.mubr.bf16.gmra.mxu0 %v2784
        %v3345 = vpop.f32.mrf.mxu0
        %v3346 = vadd.f32 %v2925, %v3345
        %v3347 = vpop.f32.mrf.mxu0
        %v3348 = vpop.f32.mrf.mxu0
        %v3349 = vpop.f32.mrf.mxu0
        %3350 = vdwg.mxu0
        %3351 = vmatprep.subr.bf16.mxu0 0
        %3352 = vmatpush1.bf16.msra.mxu0 %v3206
        %3353 = vmatprep.subr.bf16.mxu0 0
        %3354 = vmatpush1.bf16.msra.mxu0 %v3205
        %3355 = vmatprep.subr.bf16.mxu0 0
        %3356 = vmatpush1.bf16.msra.mxu0 %v3204
        %3357 = vmatprep.subr.bf16.mxu0 0
        %3358 = vmatpush1.bf16.msra.mxu0 %v3203
        %3359 = vmatprep.subr.bf16.mxu0 0
        %3360 = vmatpush1.bf16.msra.mxu0 %v3202
        %3361 = vmatprep.subr.bf16.mxu0 0
        %3362 = vmatpush1.bf16.msra.mxu0 %v3201
        %3363 = vmatprep.subr.bf16.mxu0 0
        %3364 = vmatpush1.bf16.msra.mxu0 %v3200
        %3365 = vmatprep.subr.bf16.mxu0 0
        %3366 = vmatpush1.bf16.msra.mxu0 %v3199
        %3367 = vmatprep.subr.bf16.mxu0 0
        %3368 = vmatpush2.bf16.msra.mxu0 %v3214
        %3369 = vmatprep.subr.bf16.mxu0 0
        %3370 = vmatpush2.bf16.msra.mxu0 %v3213
        %3371 = vmatprep.subr.bf16.mxu0 0
        %3372 = vmatpush2.bf16.msra.mxu0 %v3212
        %3373 = vmatprep.subr.bf16.mxu0 0
        %3374 = vmatpush2.bf16.msra.mxu0 %v3211
        %3375 = vmatprep.subr.bf16.mxu0 0
        %3376 = vmatpush2.bf16.msra.mxu0 %v3210
        %3377 = vmatprep.subr.bf16.mxu0 0
        %3378 = vmatpush2.bf16.msra.mxu0 %v3209
        %3379 = vmatprep.subr.bf16.mxu0 0
        %3380 = vmatpush2.bf16.msra.mxu0 %v3208
        %3381 = vmatprep.subr.bf16.mxu0 0
        %3382 = vmatpush2.bf16.msra.mxu0 %v3207
        %3383 = vmatprep.mubr.bf16.mxu0 %v2787
        %3384 = vmatmul.mubr.bf16.gmra.mxu0 %v2786
        %v3385 = vpop.f32.mrf.mxu0
        %v3386 = vadd.f32 %v3346, %v3385
        %v3387 = vpop.f32.mrf.mxu0
        %v3388 = vpop.f32.mrf.mxu0
        %v3389 = vpop.f32.mrf.mxu0
        %3390 = vdwg.mxu0
        %3391 = vmatprep.subr.bf16.mxu0 0
        %3392 = vmatpush1.bf16.msra.mxu0 %v3222
        %3393 = vmatprep.subr.bf16.mxu0 0
        %3394 = vmatpush1.bf16.msra.mxu0 %v3221
        %3395 = vmatprep.subr.bf16.mxu0 0
        %3396 = vmatpush1.bf16.msra.mxu0 %v3220
        %3397 = vmatprep.subr.bf16.mxu0 0
        %3398 = vmatpush1.bf16.msra.mxu0 %v3219
        %3399 = vmatprep.subr.bf16.mxu0 0
        %3400 = vmatpush1.bf16.msra.mxu0 %v3218
        %3401 = vmatprep.subr.bf16.mxu0 0
        %3402 = vmatpush1.bf16.msra.mxu0 %v3217
        %3403 = vmatprep.subr.bf16.mxu0 0
        %3404 = vmatpush1.bf16.msra.mxu0 %v3216
        %3405 = vmatprep.subr.bf16.mxu0 0
        %3406 = vmatpush1.bf16.msra.mxu0 %v3215
        %3407 = vmatprep.subr.bf16.mxu0 0
        %3408 = vmatpush2.bf16.msra.mxu0 %v3230
        %3409 = vmatprep.subr.bf16.mxu0 0
        %3410 = vmatpush2.bf16.msra.mxu0 %v3229
        %3411 = vmatprep.subr.bf16.mxu0 0
        %3412 = vmatpush2.bf16.msra.mxu0 %v3228
        %3413 = vmatprep.subr.bf16.mxu0 0
        %3414 = vmatpush2.bf16.msra.mxu0 %v3227
        %3415 = vmatprep.subr.bf16.mxu0 0
        %3416 = vmatpush2.bf16.msra.mxu0 %v3226
        %3417 = vmatprep.subr.bf16.mxu0 0
        %3418 = vmatpush2.bf16.msra.mxu0 %v3225
        %3419 = vmatprep.subr.bf16.mxu0 0
        %3420 = vmatpush2.bf16.msra.mxu0 %v3224
        %3421 = vmatprep.subr.bf16.mxu0 0
        %3422 = vmatpush2.bf16.msra.mxu0 %v3223
        %3423 = vmatprep.mubr.bf16.mxu0 %v2789
        %3424 = vmatmul.mubr.bf16.gmra.mxu0 %v2788
        %v3425 = vpop.f32.mrf.mxu0
        %v3426 = vadd.f32 %v3386, %v3425
        %v3427 = vpop.f32.mrf.mxu0
        %v3428 = vpop.f32.mrf.mxu0
        %v3429 = vpop.f32.mrf.mxu0
        %3430 = vdwg.mxu0
        %3431 = vmatprep.subr.bf16.mxu0 0
        %3432 = vmatpush1.bf16.msra.mxu0 %v3238
        %3433 = vmatprep.subr.bf16.mxu0 0
        %3434 = vmatpush1.bf16.msra.mxu0 %v3237
        %3435 = vmatprep.subr.bf16.mxu0 0
        %3436 = vmatpush1.bf16.msra.mxu0 %v3236
        %3437 = vmatprep.subr.bf16.mxu0 0
        %3438 = vmatpush1.bf16.msra.mxu0 %v3235
        %3439 = vmatprep.subr.bf16.mxu0 0
        %3440 = vmatpush1.bf16.msra.mxu0 %v3234
        %3441 = vmatprep.subr.bf16.mxu0 0
        %3442 = vmatpush1.bf16.msra.mxu0 %v3233
        %3443 = vmatprep.subr.bf16.mxu0 0
        %3444 = vmatpush1.bf16.msra.mxu0 %v3232
        %3445 = vmatprep.subr.bf16.mxu0 0
        %3446 = vmatpush1.bf16.msra.mxu0 %v3231
        %3447 = vmatprep.subr.bf16.mxu0 0
        %3448 = vmatpush2.bf16.msra.mxu0 %v3246
        %3449 = vmatprep.subr.bf16.mxu0 0
        %3450 = vmatpush2.bf16.msra.mxu0 %v3245
        %3451 = vmatprep.subr.bf16.mxu0 0
        %3452 = vmatpush2.bf16.msra.mxu0 %v3244
        %3453 = vmatprep.subr.bf16.mxu0 0
        %3454 = vmatpush2.bf16.msra.mxu0 %v3243
        %3455 = vmatprep.subr.bf16.mxu0 0
        %3456 = vmatpush2.bf16.msra.mxu0 %v3242
        %3457 = vmatprep.subr.bf16.mxu0 0
        %3458 = vmatpush2.bf16.msra.mxu0 %v3241
        %3459 = vmatprep.subr.bf16.mxu0 0
        %3460 = vmatpush2.bf16.msra.mxu0 %v3240
        %3461 = vmatprep.subr.bf16.mxu0 0
        %3462 = vmatpush2.bf16.msra.mxu0 %v3239
        %3463 = vmatprep.mubr.bf16.mxu0 %v2791
        %3464 = vmatmul.mubr.bf16.gmra.mxu0 %v2790
        %v3465 = vpop.f32.mrf.mxu0
        %v3466 = vadd.f32 %v3426, %v3465
        %v3467 = vpop.f32.mrf.mxu0
        %v3468 = vpop.f32.mrf.mxu0
        %v3469 = vpop.f32.mrf.mxu0
        %3470 = vdwg.mxu0
        %v3471 = vadd.f32 %v2184, %v3466
        %3472 = vadd.xlane.f32.xlu0 %v3471
        %v3473 = vpop.xlane.xlu0 %3472
        %v3474 = vmul.f32 %v3473, %v2159
        %v3475 = vsub.f32 %v3471, %v3474
        %v3476 = vmul.f32 %v3475, %v3475
        %3477 = vadd.xlane.f32.xlu0 %v3476
        %v3478 = vpop.xlane.xlu0 %3477
        %v3479 = vmul.f32 %v3478, %v2159
        %v3480 = vadd.f32 %v3479, 1e-05
        %v3481 = vrsqrt.pop %v3480
        %v3482 = vmul.f32 %v3475, %v3481
        %v3483 = vld [vmem:[%s8] sm:$0x1]
        %v3485 = vlaneseq
        %v3486 = vshrl.u32 %v3485, 7
        %v3487 = vsub.s32 0, %v3486
        %v3488 = vrot.slane %v3483, %v3487
        %v3490 = vmul.f32 %v3482, %v3488
        %v3491 = vld [vmem:[%s9] sm:$0x1]
        %v3493 = vlaneseq
        %v3494 = vshrl.u32 %v3493, 7
        %v3495 = vsub.s32 0, %v3494
        %v3496 = vrot.slane %v3491, %v3495
        %v3498 = vadd.f32 %v3490, %v3496
        %3499 = vst [vmem:[%s574] sm:$0xff] %v3498
        %s3500 = sand.u32 %s348, 1
        %s3501 = scalar_lea.sflag [#allocation4], %s3500
        %s3502 = sand.u32 %s348, 1
        %s3503 = smul.addr %s3502, 8
        %s3504 = scalar_lea.vmem [#allocation13], %s3503
        // Predicated region
        $region101: #{tpu_custom_call.1} parent=75 // pred_check
          %p3505 = pneg %p358
        $region102: #{tpu_custom_call.1} parent=75 // pred_check_branch
          %3507 = sbr.rel (%p3505) target = $region104
        $region103: #{tpu_custom_call.1} parent=75 // pred_region
          %s3509 = ssub.s32 128, 128
          %3510 = vsyncadd %s3501, %s3509
          %s3511 = smul.addr %s36, 128
          %s3512 = scalar_lea.hbm %s14, %s3511
          %s3514 = sshll.u32 %s3504, 4
          %s3515 = int_to_ptr.vmem [resolvable:$true] %s3514
          %3517 = dma.vmem_to_hbm [thread:$0]  %s3515, 128, %s3512, %s3501
        $region104: #{tpu_custom_call.1} parent=75 // pred_fallthru
          _
      $region76: #{tpu_custom_call.1} parent=5 // pred_fallthru
        _
      %p3518 = scmp.le.s32.totalorder 2, %s31
      // Predicated region
      $region105: #{tpu_custom_call.1} parent=5 // pred_check
        %p3519 = pneg %p3518
      $region106: #{tpu_custom_call.1} parent=5 // pred_check_branch
        %3521 = sbr.rel (%p3519) target = $region108
      $region107: #{tpu_custom_call.1} parent=5 // pred_region
        %s3522 = ssub.s32 %s31, 2
        // Predicated region
        $region109: #{tpu_custom_call.1} parent=107 // pred_check
          %p3523 = pneg %p364
        $region110: #{tpu_custom_call.1} parent=107 // pred_check_branch
          %3525 = sbr.rel (%p3523) target = $region112
        $region111: #{tpu_custom_call.1} parent=107 // pred_region
          %s3526 = sand.u32 %s349, 1
          %s3527 = scalar_lea.sflag [#allocation4], %s3526
          %s3528 = sand.u32 %s349, 1
          %s3529 = smul.addr %s3528, 8
          %s3530 = scalar_lea.vmem [#allocation13], %s3529
          %3531 = dma.done %s3527, 128
        $region112: #{tpu_custom_call.1} parent=107 // pred_fallthru
          _
      $region108: #{tpu_custom_call.1} parent=5 // pred_fallthru
        _
    $region6: #{tpu_custom_call.1} parent=1 // loop_footer
      %s35 = sadd.s32 1, %s31
    $region7: #{tpu_custom_call.1} parent=1 // loop_footer_branch
      %30 = sbr.rel target = $region3
    $region8: #{tpu_custom_call.1} parent=1 // loop_exit
      _
    %3532 = vsyncpa [#allocation3], 1
    %s3533 = scalar_lea.sflag [#allocation3], 1
    %3534 = vsyncpa %s3533, 1
    %3535 = vsyncpa [#allocation6], 1
    %s3536 = scalar_lea.sflag [#allocation6], 1
    %3537 = vsyncpa %s3536, 1
    %3538 = vsyncpa [#allocation9], 1
    %3539 = vsyncpa [#allocation12], 1
    %3540 = vsyncpa [#allocation4], 1
    %s3541 = scalar_lea.sflag [#allocation4], 1
    %3542 = vsyncpa %s3541, 1

</llo_original>
